<compile_context>
chip_gen: v6e
topology: v6e:2x2x1
jax: 0.10.0
libtpu: 0.0.40
codegen_flags: <defaults>
</compile_context>

<pallas_src>
import functools
import math

import jax
import jax.numpy as jnp
from jax.experimental import pallas as pl
from jax.experimental.pallas import tpu as pltpu


@functools.lru_cache(maxsize=1)
def _vmem_limit_bytes():
    # ~3/4 of physical VMEM per core: ~48 MiB on v7x (64 MiB), 96 MiB on v5e/v6e (128 MiB).
    try:
        cap = int(pltpu.get_tpu_info().vmem_capacity_bytes)
    except Exception:
        cap = 128 * 1024 * 1024
    return max(32 * 1024 * 1024, min(int(cap * 3 // 4), 100 * 1024 * 1024))


def _compiler_params(dimension_semantics):
    return pltpu.CompilerParams(
        dimension_semantics=dimension_semantics,
        vmem_limit_bytes=_vmem_limit_bytes(),
    )


def _pick_hw_tile(n, cap=1024):
    # Largest divisor of n that is <= cap and (multiple of 8 or the full extent).
    for t in range(min(n, cap), 0, -1):
        if n % t == 0 and (t % 8 == 0 or t == n):
            return t
    return n


# ---------------------------------------------------------------------------
# Kernel 1: conv1 + BN + ReLU -> dual dilated 3x3 ConvBnAct paths (im2col) -> GAP
# ---------------------------------------------------------------------------

def _sk_paths_kernel(x_ref, w1_ref, s1_ref, b1_ref, wp_ref, sp_ref, bp_ref,
                     paths_ref, pool_ref, ypad_ref, col_ref,
                     *, H, W, dils, path_in, width):
    HW = H * W
    num_paths = len(dils)
    pad = max(dils)                      # 3x3 taps reach +-d rows/cols; halo = max dilation
    fp = num_paths * path_in             # first_planes
    Wp = W + 2 * pad

    # conv1 (1x1) as a single MXU matmul over all first_planes channels (K=Cin,
    # N=first_planes), folded BN + ReLU, cast once to bf16 (the downstream matmul dtype).
    y1 = jnp.dot(x_ref[0], w1_ref[...], preferred_element_type=jnp.float32)
    y1 = jnp.maximum(y1 * s1_ref[...] + b1_ref[...], 0.0).astype(jnp.bfloat16)   # (HW, fp)

    # Zero-halo padded bf16 scratch.  Only the halo border is zeroed -- the interior is
    # fully overwritten every step.  Re-zeroed per step (tiny) rather than once at
    # program_id==0 so megacore grid partitioning (per-core scratch) stays correct.
    ypad_ref[0:pad, :, :] = jnp.zeros((pad, Wp, fp), ypad_ref.dtype)
    ypad_ref[pad + H:, :, :] = jnp.zeros((pad, Wp, fp), ypad_ref.dtype)
    ypad_ref[pad:pad + H, 0:pad, :] = jnp.zeros((H, pad, fp), ypad_ref.dtype)
    ypad_ref[pad:pad + H, pad + W:, :] = jnp.zeros((H, pad, fp), ypad_ref.dtype)
    ypad_ref[pad:pad + H, pad:pad + W, :] = y1.reshape(H, W, fp)

    # Per SK path: build an im2col slab (H, W, 9*path_in) in VMEM so the dilated 3x3 conv is
    # ONE MXU matmul with contraction depth 9*path_in; fuse BN + ReLU, write the lane-dense
    # path slab, and accumulate the global-average-pool of (path0 + path1) on the fly.
    pooled = jnp.zeros((1, width), jnp.float32)
    for p, d in enumerate(dils):
        for ky in range(3):
            for kx in range(3):
                t = ky * 3 + kx
                r0 = pad + d * (ky - 1)
                c0 = pad + d * (kx - 1)
                col_ref[:, :, t * path_in:(t + 1) * path_in] = \
                    ypad_ref[r0:r0 + H, c0:c0 + W, p * path_in:(p + 1) * path_in]
        xcol = col_ref[...].reshape(HW, 9 * path_in)                      # bf16
        yp = jnp.dot(xcol, wp_ref[p], preferred_element_type=jnp.float32)  # (HW, width)
        yp = jnp.maximum(yp * sp_ref[p] + bp_ref[p], 0.0)
        paths_ref[0, :, p * width:(p + 1) * width] = yp.astype(paths_ref.dtype)
        pooled = pooled + jnp.sum(yp, axis=0, keepdims=True)
    pool_ref[0] = pooled * (1.0 / float(HW))


def sk_paths(x, w1, s1, b1, wpflat, sp, bp, *, B, H, W, dils, path_in, width):
    HW = H * W
    cin = x.shape[-1]
    fp = w1.shape[-1]
    num_paths = len(dils)
    pad = max(dils)

    flops = int(2 * B * HW * cin * fp
                + 2 * B * num_paths * HW * (9 * path_in) * width)
    bytes_accessed = int(x.size * 2 + w1.size * 2 + wpflat.size * 2
                         + (s1.size + b1.size + sp.size + bp.size) * 4
                         + B * HW * num_paths * width * 2 + B * width * 4)

    grid_spec = pltpu.PrefetchScalarGridSpec(
        num_scalar_prefetch=0,
        grid=(B,),
        in_specs=[
            pl.BlockSpec((1, HW, cin), lambda b: (b, 0, 0)),
            pl.BlockSpec(w1.shape, lambda b: (0, 0)),
            pl.BlockSpec(s1.shape, lambda b: (0, 0)),
            pl.BlockSpec(b1.shape, lambda b: (0, 0)),
            pl.BlockSpec(wpflat.shape, lambda b: (0, 0, 0)),
            pl.BlockSpec(sp.shape, lambda b: (0, 0, 0)),
            pl.BlockSpec(bp.shape, lambda b: (0, 0, 0)),
        ],
        out_specs=[
            pl.BlockSpec((1, HW, num_paths * width), lambda b: (b, 0, 0)),
            pl.BlockSpec((1, 1, width), lambda b: (b, 0, 0)),
        ],
        scratch_shapes=[
            pltpu.VMEM((H + 2 * pad, W + 2 * pad, fp), jnp.bfloat16),   # padded conv1 output
            pltpu.VMEM((H, W, 9 * path_in), jnp.bfloat16),              # im2col slab (reused per path)
        ],
    )
    return pl.pallas_call(
        functools.partial(_sk_paths_kernel, H=H, W=W, dils=dils,
                          path_in=path_in, width=width),
        grid_spec=grid_spec,
        out_shape=(jax.ShapeDtypeStruct((B, HW, num_paths * width), jnp.bfloat16),
                   jax.ShapeDtypeStruct((B, 1, width), jnp.float32)),
        compiler_params=_compiler_params(("parallel",)),
        cost_estimate=pl.CostEstimate(flops=flops, transcendentals=0,
                                      bytes_accessed=bytes_accessed),
    )(x, w1, s1, b1, wpflat, sp, bp)


# ---------------------------------------------------------------------------
# Kernel 2: SK attention head on the pooled (B, width) vector (tiny).
# ---------------------------------------------------------------------------

def _sk_attn_kernel(pool_ref, wr_ref, sa_ref, ba_ref, ws_ref, attn_ref, *, width):
    m = pool_ref[:, 0, :].astype(jnp.bfloat16)                 # (B, width)
    r = jnp.dot(m, wr_ref[...], preferred_element_type=jnp.float32)
    r = jnp.maximum(r * sa_ref[...] + ba_ref[...], 0.0)        # (B, attn_ch) f32
    a = jnp.dot(r.astype(jnp.bfloat16), ws_ref[...],
                preferred_element_type=jnp.float32)            # (B, 2*width)
    a0 = a[:, :width]
    a1 = a[:, width:]
    mx = jnp.maximum(a0, a1)
    e0 = jnp.exp(a0 - mx)
    e1 = jnp.exp(a1 - mx)
    # exact reciprocal keeps the softmax bit-comparable with the pure-JAX reference;
    # approx=True is a free EUP op if a looser tolerance is acceptable.
    inv = pl.reciprocal(e0 + e1, approx=False)
    attn_ref[:, :width] = e0 * inv
    attn_ref[:, width:] = e1 * inv


def sk_attention(pooled, wr_bf, sa, ba, ws_bf):
    B, _, width = pooled.shape
    num_paths = ws_bf.shape[-1] // width
    assert num_paths == 2
    return pl.pallas_call(
        functools.partial(_sk_attn_kernel, width=width),
        out_shape=jax.ShapeDtypeStruct((B, num_paths * width), jnp.float32),
        in_specs=[pl.BlockSpec(memory_space=pltpu.MemorySpace.VMEM)] * 5,
        out_specs=pl.BlockSpec(memory_space=pltpu.MemorySpace.VMEM),
    )(pooled, wr_bf, sa, ba, ws_bf)


# ---------------------------------------------------------------------------
# Kernel 3: attention folded into conv3 weight -> single matmul + BN + residual + ReLU.
# ---------------------------------------------------------------------------

def _conv3_combine_kernel(paths_ref, attn_ref, w3_ref, s3_ref, b3_ref, res_ref, o_ref):
    a = attn_ref[0]                                            # (2*width, 1) f32
    # Fold the per-batch softmax weights into the (duplicated) conv3 weight: one matmul
    # with K = 2*width replaces the elementwise path combine + a K = width matmul.
    wf = (w3_ref[...] * a).astype(jnp.bfloat16)                # (2*width, outplanes)
    y = jnp.dot(paths_ref[0], wf, preferred_element_type=jnp.float32)   # (thw, outplanes)
    y = y * s3_ref[...] + b3_ref[...] + res_ref[0]
    o_ref[0] = jnp.maximum(y, 0.0)


def conv3_combine(paths, attn_col, w3cat, s3, b3, res, *, hw_tile_cap=1024):
    B, HW, pw = paths.shape                 # pw = num_paths * width
    outplanes = w3cat.shape[-1]
    cin = res.shape[-1]
    thw = _pick_hw_tile(HW, hw_tile_cap)

    flops = int(2 * B * HW * pw * outplanes + B * (HW // thw) * pw * outplanes)
    bytes_accessed = int(paths.size * 2 + attn_col.size * 4 + w3cat.size * 4
                         + (s3.size + b3.size) * 4 + res.size * 4
                         + B * HW * outplanes * 4)

    grid_spec = pltpu.PrefetchScalarGridSpec(
        num_scalar_prefetch=0,
        grid=(B, HW // thw),
        in_specs=[
            pl.BlockSpec((1, thw, pw), lambda b, t: (b, t, 0)),
            pl.BlockSpec((1, pw, 1), lambda b, t: (b, 0, 0)),
            pl.BlockSpec(w3cat.shape, lambda b, t: (0, 0)),
            pl.BlockSpec(s3.shape, lambda b, t: (0, 0)),
            pl.BlockSpec(b3.shape, lambda b, t: (0, 0)),
            pl.BlockSpec((1, thw, cin), lambda b, t: (b, t, 0)),
        ],
        out_specs=pl.BlockSpec((1, thw, outplanes), lambda b, t: (b, t, 0)),
    )
    return pl.pallas_call(
        _conv3_combine_kernel,
        grid_spec=grid_spec,
        out_shape=jax.ShapeDtypeStruct((B, HW, outplanes), jnp.float32),
        compiler_params=_compiler_params(("parallel", "parallel")),
        cost_estimate=pl.CostEstimate(flops=flops, transcendentals=0,
                                      bytes_accessed=bytes_accessed),
    )(paths, attn_col, w3cat, s3, b3, res)


# ---------------------------------------------------------------------------
# Parameter construction (deterministic, matches module __init__ shapes)
# ---------------------------------------------------------------------------

def make_divisible(v, divisor=8, min_value=None, round_limit=0.9):
    min_value = min_value or divisor
    new_v = max(min_value, int(v + divisor / 2) // divisor * divisor)
    if new_v < round_limit * v:
        new_v += divisor
    return new_v


def _fold_bn(key, c, eps=1e-5):
    kg, kb, km, kv = jax.random.split(key, 4)
    gamma = jax.random.uniform(kg, (c,), jnp.float32, 0.5, 1.5)
    beta = 0.1 * jax.random.normal(kb, (c,), jnp.float32)
    mean = 0.1 * jax.random.normal(km, (c,), jnp.float32)
    var = jax.random.uniform(kv, (c,), jnp.float32, 0.5, 1.5)
    scale = gamma / jnp.sqrt(var + eps)
    bias = beta - mean * scale
    return scale, bias


def init_params(key, inplanes, planes, base_width=64, cardinality=1,
                reduce_first=1, expansion=4, rd_ratio=1.0 / 16):
    width = int(math.floor(planes * (base_width / 64))) * cardinality
    first_planes = width // reduce_first
    outplanes = planes * expansion
    num_paths = 2
    path_in = first_planes // num_paths              # split_input=True
    attn_ch = make_divisible(width * rd_ratio, divisor=8)
    dils = (1, 2)                                    # keep_3x3 with kernel_size=[3, 5]

    ks = jax.random.split(key, 12)
    p = {}
    p['w1'] = jax.random.normal(ks[0], (inplanes, first_planes), jnp.float32) / math.sqrt(inplanes)
    p['s1'], p['b1'] = _fold_bn(ks[1], first_planes)
    wps, sps, bps = [], [], []
    for i in range(num_paths):
        wps.append(jax.random.normal(ks[2 + i], (3, 3, path_in, width), jnp.float32)
                   / math.sqrt(9.0 * path_in))
        si, bi = _fold_bn(ks[4 + i], width)
        sps.append(si)
        bps.append(bi)
    p['wp'] = jnp.stack(wps, 0)                      # (2, 3, 3, path_in, width)
    p['sp'] = jnp.stack(sps, 0)                      # (2, width)
    p['bp'] = jnp.stack(bps, 0)
    p['wr'] = jax.random.normal(ks[6], (width, attn_ch), jnp.float32) / math.sqrt(width)
    p['sa'], p['ba'] = _fold_bn(ks[7], attn_ch)
    p['ws'] = jax.random.normal(ks[8], (attn_ch, num_paths * width), jnp.float32) / math.sqrt(attn_ch)
    p['w3'] = jax.random.normal(ks[9], (width, outplanes), jnp.float32) / math.sqrt(width)
    p['s3'], p['b3'] = _fold_bn(ks[10], outplanes)
    dims = dict(width=width, first_planes=first_planes, outplanes=outplanes,
                path_in=path_in, attn_ch=attn_ch, dils=dils)
    return p, dims


# ---------------------------------------------------------------------------
# Forward pass (Pallas) and pure-JAX reference
# ---------------------------------------------------------------------------

def sk_bottleneck_forward_nhwc(x_nhwc, p, dims):
    B, H, W, cin = x_nhwc.shape
    HW = H * W
    width = dims['width']
    path_in = dims['path_in']
    num_paths = len(dims['dils'])
    assert cin == dims['outplanes'], "downsample=None requires inplanes == outplanes"

    x_rows = x_nhwc.reshape(B, HW, cin).astype(jnp.float32)       # residual, f32
    x_bf = x_rows.astype(jnp.bfloat16)

    # Pack parameters: bf16 matmul weights, 2-D BN vectors, im2col-flattened path weights.
    w1_bf = p['w1'].astype(jnp.bfloat16)                           # (Cin, first_planes)
    s1 = p['s1'][None, :]
    b1 = p['b1'][None, :]
    wpflat = p['wp'].reshape(num_paths, 9 * path_in, width).astype(jnp.bfloat16)
    sp = p['sp'][:, None, :]
    bp = p['bp'][:, None, :]

    paths, pooled = sk_paths(x_bf, w1_bf, s1, b1, wpflat, sp, bp,
                             B=B, H=H, W=W, dils=dims['dils'],
                             path_in=path_in, width=width)

    attn = sk_attention(pooled, p['wr'].astype(jnp.bfloat16),
                        p['sa'][None, :], p['ba'][None, :],
                        p['ws'].astype(jnp.bfloat16))              # (B, 2*width)
    attn_col = attn.reshape(B, num_paths * width, 1)

    w3cat = jnp.concatenate([p['w3']] * num_paths, axis=0)         # (2*width, outplanes) f32
    out = conv3_combine(paths, attn_col, w3cat,
                        p['s3'][None, :], p['b3'][None, :], x_rows)
    return out.reshape(B, H, W, dims['outplanes'])


def sk_bottleneck_forward(x_nchw, p, dims):
    # NCHW wrapper only for parity with the PyTorch module; the transposes are plain-XLA
    # HBM copies outside the kernels -- prefer calling sk_bottleneck_forward_nhwc directly.
    x_nhwc = jnp.transpose(x_nchw, (0, 2, 3, 1))
    out = sk_bottleneck_forward_nhwc(x_nhwc, p, dims)
    return jnp.transpose(out, (0, 3, 1, 2))


def reference(x_nchw, p, dims):
    f32, bf16 = jnp.float32, jnp.bfloat16
    width = dims['width']
    path_in = dims['path_in']
    num_paths = len(dims['dils'])
    x = jnp.transpose(x_nchw, (0, 2, 3, 1)).astype(f32)
    B, H, W, _ = x.shape

    y1 = jnp.einsum('bhwc,cd->bhwd', x.astype(bf16), p['w1'].astype(bf16),
                    preferred_element_type=f32)
    y1 = jnp.maximum(y1 * p['s1'] + p['b1'], 0.0)

    paths = []
    for i, d in enumerate(dims['dils']):
        xi = y1[..., i * path_in:(i + 1) * path_in].astype(bf16)
        c = jax.lax.conv_general_dilated(
            xi, p['wp'][i].astype(bf16), window_strides=(1, 1),
            padding=[(d, d), (d, d)], rhs_dilation=(d, d),
            dimension_numbers=('NHWC', 'HWIO', 'NHWC'),
            preferred_element_type=f32)
        paths.append(jnp.maximum(c * p['sp'][i] + p['bp'][i], 0.0))
    x0, x1 = paths

    m = (x0 + x1).mean(axis=(1, 2))                                  # (B, width)
    r = jnp.maximum(
        jnp.dot(m.astype(bf16), p['wr'].astype(bf16), preferred_element_type=f32)
        * p['sa'] + p['ba'], 0.0)
    logits = jnp.dot(r.astype(bf16), p['ws'].astype(bf16), preferred_element_type=f32)
    a = jax.nn.softmax(logits.reshape(B, num_paths, width), axis=1)  # (B, 2, width)

    # mirror kernel 3: bf16 HBM round-trip of the lane-dense paths + attention folded
    # into a bf16 conv3 weight.
    paths_cat = jnp.concatenate([x0, x1], axis=-1).astype(bf16).reshape(B, H * W, num_paths * width)
    a_cat = a.reshape(B, num_paths * width)
    w3cat = jnp.concatenate([p['w3']] * num_paths, axis=0)           # (2*width, outplanes)
    wf = (w3cat[None] * a_cat[:, :, None]).astype(bf16)              # (B, 2*width, outplanes)
    y3 = jnp.einsum('bhc,bcd->bhd', paths_cat, wf, preferred_element_type=f32)
    y3 = y3 * p['s3'] + p['b3']
    out = jnp.maximum(y3 + x.reshape(B, H * W, -1), 0.0).reshape(B, H, W, -1)
    return jnp.transpose(out, (0, 3, 1, 2))


# ---------------------------------------------------------------------------

if __name__ == "__main__":
    key = jax.random.PRNGKey(0)
    kp, kx = jax.random.split(key)

    B, H, W = 2, 8, 8
    inplanes, planes = 64, 16        # outplanes = planes * 4 = inplanes (downsample=None)

    params, dims = init_params(kp, inplanes, planes)
    x = jax.random.normal(kx, (B, inplanes, H, W), jnp.float32)

    fwd = jax.jit(lambda xx: sk_bottleneck_forward(xx, params, dims))
    out = jax.block_until_ready(fwd(x))
    ref = jax.block_until_ready(reference(x, params, dims))

    assert out.shape == (B, dims['outplanes'], H, W), out.shape
    max_err = float(jnp.max(jnp.abs(out - ref)))
    if max_err > 1e-2:   # bf16 matmul inputs (mirrored in the reference) dominate the tolerance
        raise RuntimeError(f"mismatch vs reference: max_err={max_err}")
    print("KERNEL_OK")
</pallas_src>

<mosaic_0001>
module attributes {stable_mosaic.version = 11 : i64} {
  func.func @_sk_paths_kernel(%arg0: i32, %arg1: memref<1x64x64xbf16, #tpu.memory_space<vmem>>, %arg2: memref<64x16xbf16, #tpu.memory_space<vmem>>, %arg3: memref<1x16xf32, #tpu.memory_space<vmem>>, %arg4: memref<1x16xf32, #tpu.memory_space<vmem>>, %arg5: memref<2x72x16xbf16, #tpu.memory_space<vmem>>, %arg6: memref<2x1x16xf32, #tpu.memory_space<vmem>>, %arg7: memref<2x1x16xf32, #tpu.memory_space<vmem>>, %arg8: memref<1x64x32xbf16, #tpu.memory_space<vmem>>, %arg9: memref<1x1x16xf32, #tpu.memory_space<vmem>>, %arg10: memref<12x12x16xbf16, #tpu.memory_space<vmem>>, %arg11: memref<8x8x72xbf16, #tpu.memory_space<vmem>>) attributes {dimension_semantics = [#tpu.dimension_semantics<parallel>], iteration_bounds = array<i64: 2>, scalar_prefetch = 0 : i64, scratch_operands = 2 : i64, tpu.core_type = #tpu.core_type<tc>, window_params = [{transform_indices = @transform_0, window_bounds = array<i64: 1, 64, 64>}, {pipeline_mode = #tpu.pipeline_mode<synchronous>, transform_indices = @transform_1, window_bounds = array<i64: 64, 16>}, {pipeline_mode = #tpu.pipeline_mode<synchronous>, transform_indices = @transform_2, window_bounds = array<i64: 1, 16>}, {pipeline_mode = #tpu.pipeline_mode<synchronous>, transform_indices = @transform_3, window_bounds = array<i64: 1, 16>}, {pipeline_mode = #tpu.pipeline_mode<synchronous>, transform_indices = @transform_4, window_bounds = array<i64: 2, 72, 16>}, {pipeline_mode = #tpu.pipeline_mode<synchronous>, transform_indices = @transform_5, window_bounds = array<i64: 2, 1, 16>}, {pipeline_mode = #tpu.pipeline_mode<synchronous>, transform_indices = @transform_6, window_bounds = array<i64: 2, 1, 16>}, {transform_indices = @transform_7, window_bounds = array<i64: 1, 64, 32>}, {transform_indices = @transform_8, window_bounds = array<i64: 1, 1, 16>}]} {
    %c0 = arith.constant 0 : index
    %c0_0 = arith.constant 0 : index
    %c0_1 = arith.constant 0 : index
    %0 = vector.load %arg1[%c0, %c0_0, %c0_1] : memref<1x64x64xbf16, #tpu.memory_space<vmem>>, vector<1x64x64xbf16>
    %1 = vector.shape_cast %0 : vector<1x64x64xbf16> to vector<64x64xbf16>
    %c0_2 = arith.constant 0 : index
    %c0_3 = arith.constant 0 : index
    %2 = vector.load %arg2[%c0_2, %c0_3] : memref<64x16xbf16, #tpu.memory_space<vmem>>, vector<64x16xbf16>
    %cst = arith.constant dense<0.000000e+00> : vector<64x16xf32>
    %3 = tpu.matmul %1, %2, %cst {dimension_numbers = #tpu.dot_dimension_numbers<[1], [0], [0], [1], [0, 0, 1, 1], [], []>} : vector<64x64xbf16>, vector<64x16xbf16>, vector<64x16xf32> -> vector<64x16xf32>
    %c0_4 = arith.constant 0 : index
    %c0_5 = arith.constant 0 : index
    %4 = vector.load %arg3[%c0_4, %c0_5] : memref<1x16xf32, #tpu.memory_space<vmem>>, vector<1x16xf32>
    %5 = vector.broadcast %4 : vector<1x16xf32> to vector<64x16xf32>
    %6 = arith.mulf %3, %5 : vector<64x16xf32>
    %c0_6 = arith.constant 0 : index
    %c0_7 = arith.constant 0 : index
    %7 = vector.load %arg4[%c0_6, %c0_7] : memref<1x16xf32, #tpu.memory_space<vmem>>, vector<1x16xf32>
    %8 = vector.broadcast %7 : vector<1x16xf32> to vector<64x16xf32>
    %9 = arith.addf %6, %8 : vector<64x16xf32>
    %cst_8 = arith.constant 0.000000e+00 : f32
    %10 = vector.broadcast %cst_8 : f32 to vector<64x16xf32>
    %11 = arith.maximumf %9, %10 : vector<64x16xf32>
    %12 = arith.truncf %11 : vector<64x16xf32> to vector<64x16xbf16>
    %cst_9 = arith.constant 0.000000e+00 : bf16
    %13 = vector.broadcast %cst_9 : bf16 to vector<2x12x16xbf16>
    %c0_10 = arith.constant 0 : index
    %c0_11 = arith.constant 0 : index
    %c0_12 = arith.constant 0 : index
    %14 = vector.load %arg10[%c0_10, %c0_11, %c0_12] : memref<12x12x16xbf16, #tpu.memory_space<vmem>>, vector<2x12x16xbf16>
    tpu.vector_store %arg10[%c0_10, %c0_11, %c0_12], %13 {strides = array<i32>} : memref<12x12x16xbf16, #tpu.memory_space<vmem>>, vector<2x12x16xbf16>,
    %cst_13 = arith.constant 0.000000e+00 : bf16
    %15 = vector.broadcast %cst_13 : bf16 to vector<2x12x16xbf16>
    %c10 = arith.constant 10 : index
    %c0_14 = arith.constant 0 : index
    %c0_15 = arith.constant 0 : index
    %16 = vector.load %arg10[%c10, %c0_14, %c0_15] : memref<12x12x16xbf16, #tpu.memory_space<vmem>>, vector<2x12x16xbf16>
    tpu.vector_store %arg10[%c10, %c0_14, %c0_15], %15 {strides = array<i32>} : memref<12x12x16xbf16, #tpu.memory_space<vmem>>, vector<2x12x16xbf16>,
    %cst_16 = arith.constant 0.000000e+00 : bf16
    %17 = vector.broadcast %cst_16 : bf16 to vector<8x2x16xbf16>
    %c2 = arith.constant 2 : index
    %c0_17 = arith.constant 0 : index
    %c0_18 = arith.constant 0 : index
    %18 = vector.load %arg10[%c2, %c0_17, %c0_18] : memref<12x12x16xbf16, #tpu.memory_space<vmem>>, vector<8x2x16xbf16>
    tpu.vector_store %arg10[%c2, %c0_17, %c0_18], %17 {strides = array<i32>} : memref<12x12x16xbf16, #tpu.memory_space<vmem>>, vector<8x2x16xbf16>,
    %cst_19 = arith.constant 0.000000e+00 : bf16
    %19 = vector.broadcast %cst_19 : bf16 to vector<8x2x16xbf16>
    %c2_20 = arith.constant 2 : index
    %c10_21 = arith.constant 10 : index
    %c0_22 = arith.constant 0 : index
    %20 = vector.load %arg10[%c2_20, %c10_21, %c0_22] : memref<12x12x16xbf16, #tpu.memory_space<vmem>>, vector<8x2x16xbf16>
    tpu.vector_store %arg10[%c2_20, %c10_21, %c0_22], %19 {strides = array<i32>} : memref<12x12x16xbf16, #tpu.memory_space<vmem>>, vector<8x2x16xbf16>,
    %21 = vector.shape_cast %12 : vector<64x16xbf16> to vector<8x8x16xbf16>
    %c2_23 = arith.constant 2 : index
    %c2_24 = arith.constant 2 : index
    %c0_25 = arith.constant 0 : index
    %22 = vector.load %arg10[%c2_23, %c2_24, %c0_25] : memref<12x12x16xbf16, #tpu.memory_space<vmem>>, vector<8x8x16xbf16>
    tpu.vector_store %arg10[%c2_23, %c2_24, %c0_25], %21 {strides = array<i32>} : memref<12x12x16xbf16, #tpu.memory_space<vmem>>, vector<8x8x16xbf16>,
    %cst_26 = arith.constant 0.000000e+00 : f32
    %23 = vector.broadcast %cst_26 : f32 to vector<1x16xf32>
    %c1 = arith.constant 1 : index
    %c1_27 = arith.constant 1 : index
    %c0_28 = arith.constant 0 : index
    %24 = vector.load %arg10[%c1, %c1_27, %c0_28] : memref<12x12x16xbf16, #tpu.memory_space<vmem>>, vector<8x8x8xbf16>
    %c0_29 = arith.constant 0 : index
    %c0_30 = arith.constant 0 : index
    %c0_31 = arith.constant 0 : index
    %25 = vector.load %arg11[%c0_29, %c0_30, %c0_31] : memref<8x8x72xbf16, #tpu.memory_space<vmem>>, vector<8x8x8xbf16>
    tpu.vector_store %arg11[%c0_29, %c0_30, %c0_31], %24 {strides = array<i32>} : memref<8x8x72xbf16, #tpu.memory_space<vmem>>, vector<8x8x8xbf16>,
    %c1_32 = arith.constant 1 : index
    %c2_33 = arith.constant 2 : index
    %c0_34 = arith.constant 0 : index
    %26 = vector.load %arg10[%c1_32, %c2_33, %c0_34] : memref<12x12x16xbf16, #tpu.memory_space<vmem>>, vector<8x8x8xbf16>
    %c0_35 = arith.constant 0 : index
    %c0_36 = arith.constant 0 : index
    %c8 = arith.constant 8 : index
    %27 = vector.load %arg11[%c0_35, %c0_36, %c8] : memref<8x8x72xbf16, #tpu.memory_space<vmem>>, vector<8x8x8xbf16>
    tpu.vector_store %arg11[%c0_35, %c0_36, %c8], %26 {strides = array<i32>} : memref<8x8x72xbf16, #tpu.memory_space<vmem>>, vector<8x8x8xbf16>,
    %c1_37 = arith.constant 1 : index
    %c3 = arith.constant 3 : index
    %c0_38 = arith.constant 0 : index
    %28 = vector.load %arg10[%c1_37, %c3, %c0_38] : memref<12x12x16xbf16, #tpu.memory_space<vmem>>, vector<8x8x8xbf16>
    %c0_39 = arith.constant 0 : index
    %c0_40 = arith.constant 0 : index
    %c16 = arith.constant 16 : index
    %29 = vector.load %arg11[%c0_39, %c0_40, %c16] : memref<8x8x72xbf16, #tpu.memory_space<vmem>>, vector<8x8x8xbf16>
    tpu.vector_store %arg11[%c0_39, %c0_40, %c16], %28 {strides = array<i32>} : memref<8x8x72xbf16, #tpu.memory_space<vmem>>, vector<8x8x8xbf16>,
    %c2_41 = arith.constant 2 : index
    %c1_42 = arith.constant 1 : index
    %c0_43 = arith.constant 0 : index
    %30 = vector.load %arg10[%c2_41, %c1_42, %c0_43] : memref<12x12x16xbf16, #tpu.memory_space<vmem>>, vector<8x8x8xbf16>
    %c0_44 = arith.constant 0 : index
    %c0_45 = arith.constant 0 : index
    %c24 = arith.constant 24 : index
    %31 = vector.load %arg11[%c0_44, %c0_45, %c24] : memref<8x8x72xbf16, #tpu.memory_space<vmem>>, vector<8x8x8xbf16>
    tpu.vector_store %arg11[%c0_44, %c0_45, %c24], %30 {strides = array<i32>} : memref<8x8x72xbf16, #tpu.memory_space<vmem>>, vector<8x8x8xbf16>,
    %c2_46 = arith.constant 2 : index
    %c2_47 = arith.constant 2 : index
    %c0_48 = arith.constant 0 : index
    %32 = vector.load %arg10[%c2_46, %c2_47, %c0_48] : memref<12x12x16xbf16, #tpu.memory_space<vmem>>, vector<8x8x8xbf16>
    %c0_49 = arith.constant 0 : index
    %c0_50 = arith.constant 0 : index
    %c32 = arith.constant 32 : index
    %33 = vector.load %arg11[%c0_49, %c0_50, %c32] : memref<8x8x72xbf16, #tpu.memory_space<vmem>>, vector<8x8x8xbf16>
    tpu.vector_store %arg11[%c0_49, %c0_50, %c32], %32 {strides = array<i32>} : memref<8x8x72xbf16, #tpu.memory_space<vmem>>, vector<8x8x8xbf16>,
    %c2_51 = arith.constant 2 : index
    %c3_52 = arith.constant 3 : index
    %c0_53 = arith.constant 0 : index
    %34 = vector.load %arg10[%c2_51, %c3_52, %c0_53] : memref<12x12x16xbf16, #tpu.memory_space<vmem>>, vector<8x8x8xbf16>
    %c0_54 = arith.constant 0 : index
    %c0_55 = arith.constant 0 : index
    %c40 = arith.constant 40 : index
    %35 = vector.load %arg11[%c0_54, %c0_55, %c40] : memref<8x8x72xbf16, #tpu.memory_space<vmem>>, vector<8x8x8xbf16>
    tpu.vector_store %arg11[%c0_54, %c0_55, %c40], %34 {strides = array<i32>} : memref<8x8x72xbf16, #tpu.memory_space<vmem>>, vector<8x8x8xbf16>,
    %c3_56 = arith.constant 3 : index
    %c1_57 = arith.constant 1 : index
    %c0_58 = arith.constant 0 : index
    %36 = vector.load %arg10[%c3_56, %c1_57, %c0_58] : memref<12x12x16xbf16, #tpu.memory_space<vmem>>, vector<8x8x8xbf16>
    %c0_59 = arith.constant 0 : index
    %c0_60 = arith.constant 0 : index
    %c48 = arith.constant 48 : index
    %37 = vector.load %arg11[%c0_59, %c0_60, %c48] : memref<8x8x72xbf16, #tpu.memory_space<vmem>>, vector<8x8x8xbf16>
    tpu.vector_store %arg11[%c0_59, %c0_60, %c48], %36 {strides = array<i32>} : memref<8x8x72xbf16, #tpu.memory_space<vmem>>, vector<8x8x8xbf16>,
    %c3_61 = arith.constant 3 : index
    %c2_62 = arith.constant 2 : index
    %c0_63 = arith.constant 0 : index
    %38 = vector.load %arg10[%c3_61, %c2_62, %c0_63] : memref<12x12x16xbf16, #tpu.memory_space<vmem>>, vector<8x8x8xbf16>
    %c0_64 = arith.constant 0 : index
    %c0_65 = arith.constant 0 : index
    %c56 = arith.constant 56 : index
    %39 = vector.load %arg11[%c0_64, %c0_65, %c56] : memref<8x8x72xbf16, #tpu.memory_space<vmem>>, vector<8x8x8xbf16>
    tpu.vector_store %arg11[%c0_64, %c0_65, %c56], %38 {strides = array<i32>} : memref<8x8x72xbf16, #tpu.memory_space<vmem>>, vector<8x8x8xbf16>,
    %c3_66 = arith.constant 3 : index
    %c3_67 = arith.constant 3 : index
    %c0_68 = arith.constant 0 : index
    %40 = vector.load %arg10[%c3_66, %c3_67, %c0_68] : memref<12x12x16xbf16, #tpu.memory_space<vmem>>, vector<8x8x8xbf16>
    %c0_69 = arith.constant 0 : index
    %c0_70 = arith.constant 0 : index
    %c64 = arith.constant 64 : index
    %41 = vector.load %arg11[%c0_69, %c0_70, %c64] : memref<8x8x72xbf16, #tpu.memory_space<vmem>>, vector<8x8x8xbf16>
    tpu.vector_store %arg11[%c0_69, %c0_70, %c64], %40 {strides = array<i32>} : memref<8x8x72xbf16, #tpu.memory_space<vmem>>, vector<8x8x8xbf16>,
    %c0_71 = arith.constant 0 : index
    %c0_72 = arith.constant 0 : index
    %c0_73 = arith.constant 0 : index
    %42 = vector.load %arg11[%c0_71, %c0_72, %c0_73] : memref<8x8x72xbf16, #tpu.memory_space<vmem>>, vector<8x8x72xbf16>
    %43 = vector.shape_cast %42 : vector<8x8x72xbf16> to vector<64x72xbf16>
    %c0_74 = arith.constant 0 : index
    %c0_75 = arith.constant 0 : index
    %c0_76 = arith.constant 0 : index
    %44 = vector.load %arg5[%c0_74, %c0_75, %c0_76] : memref<2x72x16xbf16, #tpu.memory_space<vmem>>, vector<1x72x16xbf16>
    %45 = vector.shape_cast %44 : vector<1x72x16xbf16> to vector<72x16xbf16>
    %cst_77 = arith.constant dense<0.000000e+00> : vector<64x16xf32>
    %46 = tpu.matmul %43, %45, %cst_77 {dimension_numbers = #tpu.dot_dimension_numbers<[1], [0], [0], [1], [0, 0, 1, 1], [], []>} : vector<64x72xbf16>, vector<72x16xbf16>, vector<64x16xf32> -> vector<64x16xf32>
    %c0_78 = arith.constant 0 : index
    %c0_79 = arith.constant 0 : index
    %c0_80 = arith.constant 0 : index
    %47 = vector.load %arg6[%c0_78, %c0_79, %c0_80] : memref<2x1x16xf32, #tpu.memory_space<vmem>>, vector<1x1x16xf32>
    %48 = vector.shape_cast %47 : vector<1x1x16xf32> to vector<1x16xf32>
    %49 = vector.broadcast %48 : vector<1x16xf32> to vector<64x16xf32>
    %50 = arith.mulf %46, %49 : vector<64x16xf32>
    %c0_81 = arith.constant 0 : index
    %c0_82 = arith.constant 0 : index
    %c0_83 = arith.constant 0 : index
    %51 = vector.load %arg7[%c0_81, %c0_82, %c0_83] : memref<2x1x16xf32, #tpu.memory_space<vmem>>, vector<1x1x16xf32>
    %52 = vector.shape_cast %51 : vector<1x1x16xf32> to vector<1x16xf32>
    %53 = vector.broadcast %52 : vector<1x16xf32> to vector<64x16xf32>
    %54 = arith.addf %50, %53 : vector<64x16xf32>
    %cst_84 = arith.constant 0.000000e+00 : f32
    %55 = vector.broadcast %cst_84 : f32 to vector<64x16xf32>
    %56 = arith.maximumf %54, %55 : vector<64x16xf32>
    %57 = arith.truncf %56 : vector<64x16xf32> to vector<64x16xbf16>
    %c0_85 = arith.constant 0 : index
    %c0_86 = arith.constant 0 : index
    %c0_87 = arith.constant 0 : index
    %58 = vector.load %arg8[%c0_85, %c0_86, %c0_87] : memref<1x64x32xbf16, #tpu.memory_space<vmem>>, vector<1x64x16xbf16>
    %59 = vector.shape_cast %58 : vector<1x64x16xbf16> to vector<64x16xbf16>
    %60 = vector.shape_cast %57 : vector<64x16xbf16> to vector<1x64x16xbf16>
    tpu.vector_store %arg8[%c0_85, %c0_86, %c0_87], %60 {strides = array<i32>} : memref<1x64x32xbf16, #tpu.memory_space<vmem>>, vector<1x64x16xbf16>,
    %cst_88 = arith.constant dense<0.000000e+00> : vector<16xf32>
    %61 = vector.multi_reduction <add>, %56, %cst_88 [0] : vector<64x16xf32> to vector<16xf32>
    %62 = vector.shape_cast %61 : vector<16xf32> to vector<1x16xf32>
    %63 = arith.addf %23, %62 : vector<1x16xf32>
    %c0_89 = arith.constant 0 : index
    %c0_90 = arith.constant 0 : index
    %c8_91 = arith.constant 8 : index
    %64 = vector.load %arg10[%c0_89, %c0_90, %c8_91] : memref<12x12x16xbf16, #tpu.memory_space<vmem>>, vector<8x8x8xbf16>
    %c0_92 = arith.constant 0 : index
    %c0_93 = arith.constant 0 : index
    %c0_94 = arith.constant 0 : index
    %65 = vector.load %arg11[%c0_92, %c0_93, %c0_94] : memref<8x8x72xbf16, #tpu.memory_space<vmem>>, vector<8x8x8xbf16>
    tpu.vector_store %arg11[%c0_92, %c0_93, %c0_94], %64 {strides = array<i32>} : memref<8x8x72xbf16, #tpu.memory_space<vmem>>, vector<8x8x8xbf16>,
    %c0_95 = arith.constant 0 : index
    %c2_96 = arith.constant 2 : index
    %c8_97 = arith.constant 8 : index
    %66 = vector.load %arg10[%c0_95, %c2_96, %c8_97] : memref<12x12x16xbf16, #tpu.memory_space<vmem>>, vector<8x8x8xbf16>
    %c0_98 = arith.constant 0 : index
    %c0_99 = arith.constant 0 : index
    %c8_100 = arith.constant 8 : index
    %67 = vector.load %arg11[%c0_98, %c0_99, %c8_100] : memref<8x8x72xbf16, #tpu.memory_space<vmem>>, vector<8x8x8xbf16>
    tpu.vector_store %arg11[%c0_98, %c0_99, %c8_100], %66 {strides = array<i32>} : memref<8x8x72xbf16, #tpu.memory_space<vmem>>, vector<8x8x8xbf16>,
    %c0_101 = arith.constant 0 : index
    %c4 = arith.constant 4 : index
    %c8_102 = arith.constant 8 : index
    %68 = vector.load %arg10[%c0_101, %c4, %c8_102] : memref<12x12x16xbf16, #tpu.memory_space<vmem>>, vector<8x8x8xbf16>
    %c0_103 = arith.constant 0 : index
    %c0_104 = arith.constant 0 : index
    %c16_105 = arith.constant 16 : index
    %69 = vector.load %arg11[%c0_103, %c0_104, %c16_105] : memref<8x8x72xbf16, #tpu.memory_space<vmem>>, vector<8x8x8xbf16>
    tpu.vector_store %arg11[%c0_103, %c0_104, %c16_105], %68 {strides = array<i32>} : memref<8x8x72xbf16, #tpu.memory_space<vmem>>, vector<8x8x8xbf16>,
    %c2_106 = arith.constant 2 : index
    %c0_107 = arith.constant 0 : index
    %c8_108 = arith.constant 8 : index
    %70 = vector.load %arg10[%c2_106, %c0_107, %c8_108] : memref<12x12x16xbf16, #tpu.memory_space<vmem>>, vector<8x8x8xbf16>
    %c0_109 = arith.constant 0 : index
    %c0_110 = arith.constant 0 : index
    %c24_111 = arith.constant 24 : index
    %71 = vector.load %arg11[%c0_109, %c0_110, %c24_111] : memref<8x8x72xbf16, #tpu.memory_space<vmem>>, vector<8x8x8xbf16>
    tpu.vector_store %arg11[%c0_109, %c0_110, %c24_111], %70 {strides = array<i32>} : memref<8x8x72xbf16, #tpu.memory_space<vmem>>, vector<8x8x8xbf16>,
    %c2_112 = arith.constant 2 : index
    %c2_113 = arith.constant 2 : index
    %c8_114 = arith.constant 8 : index
    %72 = vector.load %arg10[%c2_112, %c2_113, %c8_114] : memref<12x12x16xbf16, #tpu.memory_space<vmem>>, vector<8x8x8xbf16>
    %c0_115 = arith.constant 0 : index
    %c0_116 = arith.constant 0 : index
    %c32_117 = arith.constant 32 : index
    %73 = vector.load %arg11[%c0_115, %c0_116, %c32_117] : memref<8x8x72xbf16, #tpu.memory_space<vmem>>, vector<8x8x8xbf16>
    tpu.vector_store %arg11[%c0_115, %c0_116, %c32_117], %72 {strides = array<i32>} : memref<8x8x72xbf16, #tpu.memory_space<vmem>>, vector<8x8x8xbf16>,
    %c2_118 = arith.constant 2 : index
    %c4_119 = arith.constant 4 : index
    %c8_120 = arith.constant 8 : index
    %74 = vector.load %arg10[%c2_118, %c4_119, %c8_120] : memref<12x12x16xbf16, #tpu.memory_space<vmem>>, vector<8x8x8xbf16>
    %c0_121 = arith.constant 0 : index
    %c0_122 = arith.constant 0 : index
    %c40_123 = arith.constant 40 : index
    %75 = vector.load %arg11[%c0_121, %c0_122, %c40_123] : memref<8x8x72xbf16, #tpu.memory_space<vmem>>, vector<8x8x8xbf16>
    tpu.vector_store %arg11[%c0_121, %c0_122, %c40_123], %74 {strides = array<i32>} : memref<8x8x72xbf16, #tpu.memory_space<vmem>>, vector<8x8x8xbf16>,
    %c4_124 = arith.constant 4 : index
    %c0_125 = arith.constant 0 : index
    %c8_126 = arith.constant 8 : index
    %76 = vector.load %arg10[%c4_124, %c0_125, %c8_126] : memref<12x12x16xbf16, #tpu.memory_space<vmem>>, vector<8x8x8xbf16>
    %c0_127 = arith.constant 0 : index
    %c0_128 = arith.constant 0 : index
    %c48_129 = arith.constant 48 : index
    %77 = vector.load %arg11[%c0_127, %c0_128, %c48_129] : memref<8x8x72xbf16, #tpu.memory_space<vmem>>, vector<8x8x8xbf16>
    tpu.vector_store %arg11[%c0_127, %c0_128, %c48_129], %76 {strides = array<i32>} : memref<8x8x72xbf16, #tpu.memory_space<vmem>>, vector<8x8x8xbf16>,
    %c4_130 = arith.constant 4 : index
    %c2_131 = arith.constant 2 : index
    %c8_132 = arith.constant 8 : index
    %78 = vector.load %arg10[%c4_130, %c2_131, %c8_132] : memref<12x12x16xbf16, #tpu.memory_space<vmem>>, vector<8x8x8xbf16>
    %c0_133 = arith.constant 0 : index
    %c0_134 = arith.constant 0 : index
    %c56_135 = arith.constant 56 : index
    %79 = vector.load %arg11[%c0_133, %c0_134, %c56_135] : memref<8x8x72xbf16, #tpu.memory_space<vmem>>, vector<8x8x8xbf16>
    tpu.vector_store %arg11[%c0_133, %c0_134, %c56_135], %78 {strides = array<i32>} : memref<8x8x72xbf16, #tpu.memory_space<vmem>>, vector<8x8x8xbf16>,
    %c4_136 = arith.constant 4 : index
    %c4_137 = arith.constant 4 : index
    %c8_138 = arith.constant 8 : index
    %80 = vector.load %arg10[%c4_136, %c4_137, %c8_138] : memref<12x12x16xbf16, #tpu.memory_space<vmem>>, vector<8x8x8xbf16>
    %c0_139 = arith.constant 0 : index
    %c0_140 = arith.constant 0 : index
    %c64_141 = arith.constant 64 : index
    %81 = vector.load %arg11[%c0_139, %c0_140, %c64_141] : memref<8x8x72xbf16, #tpu.memory_space<vmem>>, vector<8x8x8xbf16>
    tpu.vector_store %arg11[%c0_139, %c0_140, %c64_141], %80 {strides = array<i32>} : memref<8x8x72xbf16, #tpu.memory_space<vmem>>, vector<8x8x8xbf16>,
    %c0_142 = arith.constant 0 : index
    %c0_143 = arith.constant 0 : index
    %c0_144 = arith.constant 0 : index
    %82 = vector.load %arg11[%c0_142, %c0_143, %c0_144] : memref<8x8x72xbf16, #tpu.memory_space<vmem>>, vector<8x8x72xbf16>
    %83 = vector.shape_cast %82 : vector<8x8x72xbf16> to vector<64x72xbf16>
    %c1_145 = arith.constant 1 : index
    %c0_146 = arith.constant 0 : index
    %c0_147 = arith.constant 0 : index
    %84 = vector.load %arg5[%c1_145, %c0_146, %c0_147] : memref<2x72x16xbf16, #tpu.memory_space<vmem>>, vector<1x72x16xbf16>
    %85 = vector.shape_cast %84 : vector<1x72x16xbf16> to vector<72x16xbf16>
    %cst_148 = arith.constant dense<0.000000e+00> : vector<64x16xf32>
    %86 = tpu.matmul %83, %85, %cst_148 {dimension_numbers = #tpu.dot_dimension_numbers<[1], [0], [0], [1], [0, 0, 1, 1], [], []>} : vector<64x72xbf16>, vector<72x16xbf16>, vector<64x16xf32> -> vector<64x16xf32>
    %c1_149 = arith.constant 1 : index
    %c0_150 = arith.constant 0 : index
    %c0_151 = arith.constant 0 : index
    %87 = vector.load %arg6[%c1_149, %c0_150, %c0_151] : memref<2x1x16xf32, #tpu.memory_space<vmem>>, vector<1x1x16xf32>
    %88 = vector.shape_cast %87 : vector<1x1x16xf32> to vector<1x16xf32>
    %89 = vector.broadcast %88 : vector<1x16xf32> to vector<64x16xf32>
    %90 = arith.mulf %86, %89 : vector<64x16xf32>
    %c1_152 = arith.constant 1 : index
    %c0_153 = arith.constant 0 : index
    %c0_154 = arith.constant 0 : index
    %91 = vector.load %arg7[%c1_152, %c0_153, %c0_154] : memref<2x1x16xf32, #tpu.memory_space<vmem>>, vector<1x1x16xf32>
    %92 = vector.shape_cast %91 : vector<1x1x16xf32> to vector<1x16xf32>
    %93 = vector.broadcast %92 : vector<1x16xf32> to vector<64x16xf32>
    %94 = arith.addf %90, %93 : vector<64x16xf32>
    %cst_155 = arith.constant 0.000000e+00 : f32
    %95 = vector.broadcast %cst_155 : f32 to vector<64x16xf32>
    %96 = arith.maximumf %94, %95 : vector<64x16xf32>
    %97 = arith.truncf %96 : vector<64x16xf32> to vector<64x16xbf16>
    %c0_156 = arith.constant 0 : index
    %c0_157 = arith.constant 0 : index
    %c16_158 = arith.constant 16 : index
    %98 = vector.load %arg8[%c0_156, %c0_157, %c16_158] : memref<1x64x32xbf16, #tpu.memory_space<vmem>>, vector<1x64x16xbf16>
    %99 = vector.shape_cast %98 : vector<1x64x16xbf16> to vector<64x16xbf16>
    %100 = vector.shape_cast %97 : vector<64x16xbf16> to vector<1x64x16xbf16>
    tpu.vector_store %arg8[%c0_156, %c0_157, %c16_158], %100 {strides = array<i32>} : memref<1x64x32xbf16, #tpu.memory_space<vmem>>, vector<1x64x16xbf16>,
    %cst_159 = arith.constant dense<0.000000e+00> : vector<16xf32>
    %101 = vector.multi_reduction <add>, %96, %cst_159 [0] : vector<64x16xf32> to vector<16xf32>
    %102 = vector.shape_cast %101 : vector<16xf32> to vector<1x16xf32>
    %103 = arith.addf %63, %102 : vector<1x16xf32>
    %cst_160 = arith.constant 1.562500e-02 : f32
    %104 = vector.broadcast %cst_160 : f32 to vector<1x16xf32>
    %105 = arith.mulf %103, %104 : vector<1x16xf32>
    %c0_161 = arith.constant 0 : index
    %c0_162 = arith.constant 0 : index
    %c0_163 = arith.constant 0 : index
    %106 = vector.load %arg9[%c0_161, %c0_162, %c0_163] : memref<1x1x16xf32, #tpu.memory_space<vmem>>, vector<1x1x16xf32>
    %107 = vector.shape_cast %106 : vector<1x1x16xf32> to vector<1x16xf32>
    %108 = vector.shape_cast %105 : vector<1x16xf32> to vector<1x1x16xf32>
    tpu.vector_store %arg9[%c0_161, %c0_162, %c0_163], %108 {strides = array<i32>} : memref<1x1x16xf32, #tpu.memory_space<vmem>>, vector<1x1x16xf32>,
    return
  }
  func.func @transform_0(%arg0: i32) -> (i32, i32, i32) {
    %c0_i32 = arith.constant 0 : i32
    %c0_i32_0 = arith.constant 0 : i32
    %c0_i32_1 = arith.constant 0 : i32
    return %arg0, %c0_i32, %c0_i32_0 : i32, i32, i32
  }
  func.func @transform_1(%arg0: i32) -> (i32, i32) {
    %c0_i32 = arith.constant 0 : i32
    %c0_i32_0 = arith.constant 0 : i32
    %c0_i32_1 = arith.constant 0 : i32
    return %c0_i32, %c0_i32_0 : i32, i32
  }
  func.func @transform_2(%arg0: i32) -> (i32, i32) {
    %c0_i32 = arith.constant 0 : i32
    %c0_i32_0 = arith.constant 0 : i32
    %c0_i32_1 = arith.constant 0 : i32
    return %c0_i32, %c0_i32_0 : i32, i32
  }
  func.func @transform_3(%arg0: i32) -> (i32, i32) {
    %c0_i32 = arith.constant 0 : i32
    %c0_i32_0 = arith.constant 0 : i32
    %c0_i32_1 = arith.constant 0 : i32
    return %c0_i32, %c0_i32_0 : i32, i32
  }
  func.func @transform_4(%arg0: i32) -> (i32, i32, i32) {
    %c0_i32 = arith.constant 0 : i32
    %c0_i32_0 = arith.constant 0 : i32
    %c0_i32_1 = arith.constant 0 : i32
    %c0_i32_2 = arith.constant 0 : i32
    return %c0_i32, %c0_i32_0, %c0_i32_1 : i32, i32, i32
  }
  func.func @transform_5(%arg0: i32) -> (i32, i32, i32) {
    %c0_i32 = arith.constant 0 : i32
    %c0_i32_0 = arith.constant 0 : i32
    %c0_i32_1 = arith.constant 0 : i32
    %c0_i32_2 = arith.constant 0 : i32
    return %c0_i32, %c0_i32_0, %c0_i32_1 : i32, i32, i32
  }
  func.func @transform_6(%arg0: i32) -> (i32, i32, i32) {
    %c0_i32 = arith.constant 0 : i32
    %c0_i32_0 = arith.constant 0 : i32
    %c0_i32_1 = arith.constant 0 : i32
    %c0_i32_2 = arith.constant 0 : i32
    return %c0_i32, %c0_i32_0, %c0_i32_1 : i32, i32, i32
  }
  func.func @transform_7(%arg0: i32) -> (i32, i32, i32) {
    %c0_i32 = arith.constant 0 : i32
    %c0_i32_0 = arith.constant 0 : i32
    %c0_i32_1 = arith.constant 0 : i32
    return %arg0, %c0_i32, %c0_i32_0 : i32, i32, i32
  }
  func.func @transform_8(%arg0: i32) -> (i32, i32, i32) {
    %c0_i32 = arith.constant 0 : i32
    %c0_i32_0 = arith.constant 0 : i32
    %c0_i32_1 = arith.constant 0 : i32
    return %arg0, %c0_i32, %c0_i32_0 : i32, i32, i32
  }
}

module attributes {stable_mosaic.version = 11 : i64} {
  func.func @_sk_attn_kernel(%arg0: memref<2x1x16xf32, #tpu.memory_space<vmem>>, %arg1: memref<16x8xbf16, #tpu.memory_space<vmem>>, %arg2: memref<1x8xf32, #tpu.memory_space<vmem>>, %arg3: memref<1x8xf32, #tpu.memory_space<vmem>>, %arg4: memref<8x32xbf16, #tpu.memory_space<vmem>>, %arg5: memref<2x32xf32, #tpu.memory_space<vmem>>) attributes {dimension_semantics = [], scalar_prefetch = 0 : i64, scratch_operands = 0 : i64, tpu.core_type = #tpu.core_type<tc>} {
    %c0 = arith.constant 0 : index
    %c0_0 = arith.constant 0 : index
    %c0_1 = arith.constant 0 : index
    %0 = vector.load %arg0[%c0, %c0_0, %c0_1] : memref<2x1x16xf32, #tpu.memory_space<vmem>>, vector<2x1x16xf32>
    %1 = vector.shape_cast %0 : vector<2x1x16xf32> to vector<2x16xf32>
    %2 = arith.truncf %1 : vector<2x16xf32> to vector<2x16xbf16>
    %c0_2 = arith.constant 0 : index
    %c0_3 = arith.constant 0 : index
    %3 = vector.load %arg1[%c0_2, %c0_3] : memref<16x8xbf16, #tpu.memory_space<vmem>>, vector<16x8xbf16>
    %cst = arith.constant dense<0.000000e+00> : vector<2x8xf32>
    %4 = tpu.matmul %2, %3, %cst {dimension_numbers = #tpu.dot_dimension_numbers<[1], [0], [0], [1], [0, 0, 1, 1], [], []>} : vector<2x16xbf16>, vector<16x8xbf16>, vector<2x8xf32> -> vector<2x8xf32>
    %c0_4 = arith.constant 0 : index
    %c0_5 = arith.constant 0 : index
    %5 = vector.load %arg2[%c0_4, %c0_5] : memref<1x8xf32, #tpu.memory_space<vmem>>, vector<1x8xf32>
    %6 = vector.broadcast %5 : vector<1x8xf32> to vector<2x8xf32>
    %7 = arith.mulf %4, %6 : vector<2x8xf32>
    %c0_6 = arith.constant 0 : index
    %c0_7 = arith.constant 0 : index
    %8 = vector.load %arg3[%c0_6, %c0_7] : memref<1x8xf32, #tpu.memory_space<vmem>>, vector<1x8xf32>
    %9 = vector.broadcast %8 : vector<1x8xf32> to vector<2x8xf32>
    %10 = arith.addf %7, %9 : vector<2x8xf32>
    %cst_8 = arith.constant 0.000000e+00 : f32
    %11 = vector.broadcast %cst_8 : f32 to vector<2x8xf32>
    %12 = arith.maximumf %10, %11 : vector<2x8xf32>
    %13 = arith.truncf %12 : vector<2x8xf32> to vector<2x8xbf16>
    %c0_9 = arith.constant 0 : index
    %c0_10 = arith.constant 0 : index
    %14 = vector.load %arg4[%c0_9, %c0_10] : memref<8x32xbf16, #tpu.memory_space<vmem>>, vector<8x32xbf16>
    %cst_11 = arith.constant dense<0.000000e+00> : vector<2x32xf32>
    %15 = tpu.matmul %13, %14, %cst_11 {dimension_numbers = #tpu.dot_dimension_numbers<[1], [0], [0], [1], [0, 0, 1, 1], [], []>} : vector<2x8xbf16>, vector<8x32xbf16>, vector<2x32xf32> -> vector<2x32xf32>
    %16 = vector.extract_strided_slice %15 {offsets = [0, 0], sizes = [2, 16], strides = [1, 1]} : vector<2x32xf32> to vector<2x16xf32>
    %17 = vector.extract_strided_slice %15 {offsets = [0, 16], sizes = [2, 16], strides = [1, 1]} : vector<2x32xf32> to vector<2x16xf32>
    %18 = arith.maximumf %16, %17 : vector<2x16xf32>
    %19 = arith.subf %16, %18 : vector<2x16xf32>
    %20 = math.exp %19 : vector<2x16xf32>
    %21 = arith.subf %17, %18 : vector<2x16xf32>
    %22 = math.exp %21 : vector<2x16xf32>
    %23 = arith.addf %20, %22 : vector<2x16xf32>
    %24 = tpu.reciprocal %23 : vector<2x16xf32> -> vector<2x16xf32>
    %25 = arith.mulf %20, %24 : vector<2x16xf32>
    %c0_12 = arith.constant 0 : index
    %c0_13 = arith.constant 0 : index
    %26 = vector.load %arg5[%c0_12, %c0_13] : memref<2x32xf32, #tpu.memory_space<vmem>>, vector<2x16xf32>
    tpu.vector_store %arg5[%c0_12, %c0_13], %25 {strides = array<i32>} : memref<2x32xf32, #tpu.memory_space<vmem>>, vector<2x16xf32>,
    %27 = arith.mulf %22, %24 : vector<2x16xf32>
    %c0_14 = arith.constant 0 : index
    %c16 = arith.constant 16 : index
    %28 = vector.load %arg5[%c0_14, %c16] : memref<2x32xf32, #tpu.memory_space<vmem>>, vector<2x16xf32>
    tpu.vector_store %arg5[%c0_14, %c16], %27 {strides = array<i32>} : memref<2x32xf32, #tpu.memory_space<vmem>>, vector<2x16xf32>,
    return
  }
}

module attributes {stable_mosaic.version = 11 : i64} {
  func.func @_conv3_combine_kernel(%arg0: i32, %arg1: i32, %arg2: memref<1x64x32xbf16, #tpu.memory_space<vmem>>, %arg3: memref<1x32x1xf32, #tpu.memory_space<vmem>>, %arg4: memref<32x64xf32, #tpu.memory_space<vmem>>, %arg5: memref<1x64xf32, #tpu.memory_space<vmem>>, %arg6: memref<1x64xf32, #tpu.memory_space<vmem>>, %arg7: memref<1x64x64xf32, #tpu.memory_space<vmem>>, %arg8: memref<1x64x64xf32, #tpu.memory_space<vmem>>) attributes {dimension_semantics = [#tpu.dimension_semantics<parallel>, #tpu.dimension_semantics<parallel>], iteration_bounds = array<i64: 2, 1>, scalar_prefetch = 0 : i64, scratch_operands = 0 : i64, tpu.core_type = #tpu.core_type<tc>, window_params = [{transform_indices = @transform_0, window_bounds = array<i64: 1, 64, 32>}, {transform_indices = @transform_1, window_bounds = array<i64: 1, 32, 1>}, {pipeline_mode = #tpu.pipeline_mode<synchronous>, transform_indices = @transform_2, window_bounds = array<i64: 32, 64>}, {pipeline_mode = #tpu.pipeline_mode<synchronous>, transform_indices = @transform_3, window_bounds = array<i64: 1, 64>}, {pipeline_mode = #tpu.pipeline_mode<synchronous>, transform_indices = @transform_4, window_bounds = array<i64: 1, 64>}, {transform_indices = @transform_5, window_bounds = array<i64: 1, 64, 64>}, {transform_indices = @transform_6, window_bounds = array<i64: 1, 64, 64>}]} {
    %c0 = arith.constant 0 : index
    %c0_0 = arith.constant 0 : index
    %c0_1 = arith.constant 0 : index
    %0 = vector.load %arg3[%c0, %c0_0, %c0_1] : memref<1x32x1xf32, #tpu.memory_space<vmem>>, vector<1x32x1xf32>
    %1 = vector.shape_cast %0 : vector<1x32x1xf32> to vector<32x1xf32>
    %c0_2 = arith.constant 0 : index
    %c0_3 = arith.constant 0 : index
    %2 = vector.load %arg4[%c0_2, %c0_3] : memref<32x64xf32, #tpu.memory_space<vmem>>, vector<32x64xf32>
    %3 = vector.broadcast %1 : vector<32x1xf32> to vector<32x64xf32>
    %4 = arith.mulf %2, %3 : vector<32x64xf32>
    %5 = arith.truncf %4 : vector<32x64xf32> to vector<32x64xbf16>
    %c0_4 = arith.constant 0 : index
    %c0_5 = arith.constant 0 : index
    %c0_6 = arith.constant 0 : index
    %6 = vector.load %arg2[%c0_4, %c0_5, %c0_6] : memref<1x64x32xbf16, #tpu.memory_space<vmem>>, vector<1x64x32xbf16>
    %7 = vector.shape_cast %6 : vector<1x64x32xbf16> to vector<64x32xbf16>
    %cst = arith.constant dense<0.000000e+00> : vector<64x64xf32>
    %8 = tpu.matmul %7, %5, %cst {dimension_numbers = #tpu.dot_dimension_numbers<[1], [0], [0], [1], [0, 0, 1, 1], [], []>} : vector<64x32xbf16>, vector<32x64xbf16>, vector<64x64xf32> -> vector<64x64xf32>
    %c0_7 = arith.constant 0 : index
    %c0_8 = arith.constant 0 : index
    %9 = vector.load %arg5[%c0_7, %c0_8] : memref<1x64xf32, #tpu.memory_space<vmem>>, vector<1x64xf32>
    %10 = vector.broadcast %9 : vector<1x64xf32> to vector<64x64xf32>
    %11 = arith.mulf %8, %10 : vector<64x64xf32>
    %c0_9 = arith.constant 0 : index
    %c0_10 = arith.constant 0 : index
    %12 = vector.load %arg6[%c0_9, %c0_10] : memref<1x64xf32, #tpu.memory_space<vmem>>, vector<1x64xf32>
    %13 = vector.broadcast %12 : vector<1x64xf32> to vector<64x64xf32>
    %14 = arith.addf %11, %13 : vector<64x64xf32>
    %c0_11 = arith.constant 0 : index
    %c0_12 = arith.constant 0 : index
    %c0_13 = arith.constant 0 : index
    %15 = vector.load %arg7[%c0_11, %c0_12, %c0_13] : memref<1x64x64xf32, #tpu.memory_space<vmem>>, vector<1x64x64xf32>
    %16 = vector.shape_cast %15 : vector<1x64x64xf32> to vector<64x64xf32>
    %17 = arith.addf %14, %16 : vector<64x64xf32>
    %cst_14 = arith.constant 0.000000e+00 : f32
    %18 = vector.broadcast %cst_14 : f32 to vector<64x64xf32>
    %19 = arith.maximumf %17, %18 : vector<64x64xf32>
    %c0_15 = arith.constant 0 : index
    %c0_16 = arith.constant 0 : index
    %c0_17 = arith.constant 0 : index
    %20 = vector.load %arg8[%c0_15, %c0_16, %c0_17] : memref<1x64x64xf32, #tpu.memory_space<vmem>>, vector<1x64x64xf32>
    %21 = vector.shape_cast %20 : vector<1x64x64xf32> to vector<64x64xf32>
    %22 = vector.shape_cast %19 : vector<64x64xf32> to vector<1x64x64xf32>
    tpu.vector_store %arg8[%c0_15, %c0_16, %c0_17], %22 {strides = array<i32>} : memref<1x64x64xf32, #tpu.memory_space<vmem>>, vector<1x64x64xf32>,
    return
  }
  func.func @transform_0(%arg0: i32, %arg1: i32) -> (i32, i32, i32) {
    %c0_i32 = arith.constant 0 : i32
    %c0_i32_0 = arith.constant 0 : i32
    return %arg0, %arg1, %c0_i32 : i32, i32, i32
  }
  func.func @transform_1(%arg0: i32, %arg1: i32) -> (i32, i32, i32) {
    %c0_i32 = arith.constant 0 : i32
    %c0_i32_0 = arith.constant 0 : i32
    %c0_i32_1 = arith.constant 0 : i32
    return %arg0, %c0_i32, %c0_i32_0 : i32, i32, i32
  }
  func.func @transform_2(%arg0: i32, %arg1: i32) -> (i32, i32) {
    %c0_i32 = arith.constant 0 : i32
    %c0_i32_0 = arith.constant 0 : i32
    %c0_i32_1 = arith.constant 0 : i32
    return %c0_i32, %c0_i32_0 : i32, i32
  }
  func.func @transform_3(%arg0: i32, %arg1: i32) -> (i32, i32) {
    %c0_i32 = arith.constant 0 : i32
    %c0_i32_0 = arith.constant 0 : i32
    %c0_i32_1 = arith.constant 0 : i32
    return %c0_i32, %c0_i32_0 : i32, i32
  }
  func.func @transform_4(%arg0: i32, %arg1: i32) -> (i32, i32) {
    %c0_i32 = arith.constant 0 : i32
    %c0_i32_0 = arith.constant 0 : i32
    %c0_i32_1 = arith.constant 0 : i32
    return %c0_i32, %c0_i32_0 : i32, i32
  }
  func.func @transform_5(%arg0: i32, %arg1: i32) -> (i32, i32, i32) {
    %c0_i32 = arith.constant 0 : i32
    %c0_i32_0 = arith.constant 0 : i32
    return %arg0, %arg1, %c0_i32 : i32, i32, i32
  }
  func.func @transform_6(%arg0: i32, %arg1: i32) -> (i32, i32, i32) {
    %c0_i32 = arith.constant 0 : i32
    %c0_i32_0 = arith.constant 0 : i32
    return %arg0, %arg1, %c0_i32 : i32, i32, i32
  }
}

</mosaic_0001>

<llo_original>
// kernel: _lambda_.5
$region0: #{_lambda_.5}
  #allocation0 [shape = 'u32[]', space=smem, size = 0x4, offset = 0x4, fixed_abs, tag = 'smem constant byte address 0x4 - core index']
  #allocation1 [shape = 'u32[144,128]{1,0:T(1,128)}', space=vmem, size = 0x12000, scoped, tag = 'internal scratch']
  %s0 = inlined_call_operand.vmem [shape: bf16[2,64,32], index: 0, kind: input, shape index: {}]
  %s1 = inlined_call_operand.vmem [shape: f32[2,32,1], index: 1, kind: input, shape index: {}]
  %s2 = inlined_call_operand.vmem [shape: f32[32,64], index: 2, kind: input, shape index: {}]
  %s3 = inlined_call_operand.vmem [shape: f32[1,64], index: 3, kind: input, shape index: {}]
  %s4 = inlined_call_operand.vmem [shape: f32[1,64], index: 4, kind: input, shape index: {}]
  %s5 = inlined_call_operand.vmem [shape: f32[2,64,64], index: 5, kind: input, shape index: {}]
  %s6 = inlined_call_operand.hbm [shape: f32[2,64,64], index: 6, kind: output, shape index: {}]
  %s7 = sld [smem:[#allocation0]]
  $region57: #{_lambda_.5} parent=0
    _
  %s9 = ssub.s32 1, %s7
  %s10 = scalar_select 0, %s9, %s7
  $region1: #{_lambda_.5} parent=0
    #allocation2 [shape = 'u8[65536]{0}', space=vmem, size = 0x10000, scoped, tag = 'output window, operand 0']
    #allocation3 [shape = 's32[2]{0}', space=sflag, size = 0x8, scoped, tag = 'scoped memory for _lambda_.5']
    %11 = vsyncpa [#allocation3], 0
    %s12 = scalar_lea.sflag [#allocation3], 1
    %13 = vsyncpa %s12, 0
    loop: start=0, step=1, limit=4
    $region2: #{_lambda_.5} parent=1 // loop_pre_header
      _
    $region3: #{_lambda_.5} parent=1 // loop_header
      %s15 = sphi 0, %s19
      %p16 = scmp.ge.s32.totalorder %s15, 4
      %s22 = sphi 0, %s34
      %s23 = sphi 0, %s30
      %s24 = sphi 0, %s22
      %s25 = sphi 0, %s23
      %s26 = sphi 0, %s24
      %s27 = sphi 0, %s25
      %s39 = sphi 0, %s41
      %s42 = sphi 0, %s39
      %s43 = sphi 0, %s42
      %s59 = sphi 0, %s43
      %s65 = sphi 0, %s67
      %s68 = sphi 0, %s65
      %s69 = sphi 0, %s68
      %s85 = sphi 0, %s69
      %s89 = sphi 0, %s89
      %s91 = sphi 0, %s89
      %s92 = sphi 0, %s91
      %s106 = sphi 0, %s92
      %s110 = sphi 0, %s110
      %s112 = sphi 0, %s110
      %s113 = sphi 0, %s112
      %s127 = sphi 0, %s113
      %s131 = sphi 0, %s131
      %s133 = sphi 0, %s131
      %s134 = sphi 0, %s133
      %s148 = sphi 0, %s134
      %s156 = sphi 0, %s158
      %s159 = sphi 0, %s156
      %s160 = sphi 0, %s159
      %s176 = sphi 0, %s160
      %s184 = sphi 0, %s186
      %s187 = sphi 0, %s184
      %s188 = sphi 0, %s187
      %s204 = sphi 0, %s188
    $region4: #{_lambda_.5} parent=1 // loop_header_branch
      %18 = sbr.rel (%p16) target = $region8
    $region5: #{_lambda_.5} parent=1 // loop_body
      %s20 = ssub.s32 %s15, 1
      %s21 = ssub.s32 %s15, 2
      %s28 = sadd.s32 1, %s23
      %p29 = scmp.ge.s32.totalorder %s28, 1
      %s30 = scalar_select %p29, 0, %s28
      %s31 = sadd.s32 1, %s22
      %s32 = scalar_select %p29, %s31, %s22
      %p33 = scmp.ge.s32.totalorder %s32, 2
      %s34 = scalar_select %p33, 0, %s32
      %s35 = ssub.s32 %s22, %s34
      %s36 = ssub.s32 %s23, %s30
      %s37 = sor.u32 %s35, %s36
      %p38 = scmp.eq.s32.totalorder %s37, 0
      %s40 = sadd.s32 %s39, 1
      %s41 = scalar_select %p38, %s39, %s40
      %p44 = pneg %p38
      %p45 = scmp.eq.s32.totalorder %s15, 1
      %p46 = por %p44, %p45
      %p47 = scmp.ne.s32.totalorder %s39, %s42
      %p48 = scmp.eq.s32.totalorder %s15, 0
      %p49 = por %p47, %p48
      %p50 = scmp.ne.s32.totalorder %s39, %s42
      %p51 = scmp.eq.s32.totalorder %s20, 1
      %p52 = por %p50, %p51
      %p53 = scmp.ne.s32.totalorder %s42, %s43
      %p54 = scmp.eq.s32.totalorder %s20, 0
      %p55 = por %p53, %p54
      %p56 = scmp.ne.s32.totalorder %s42, %s43
      %p57 = scmp.eq.s32.totalorder %s21, 1
      %p58 = por %p56, %p57
      %p60 = scmp.ne.s32.totalorder %s43, %s59
      %p61 = scmp.eq.s32.totalorder %s21, 0
      %p62 = por %p60, %p61
      %s63 = ssub.s32 %s22, %s34
      %p64 = scmp.eq.s32.totalorder %s63, 0
      %s66 = sadd.s32 %s65, 1
      %s67 = scalar_select %p64, %s65, %s66
      %p70 = pneg %p64
      %p71 = scmp.eq.s32.totalorder %s15, 1
      %p72 = por %p70, %p71
      %p73 = scmp.ne.s32.totalorder %s65, %s68
      %p74 = scmp.eq.s32.totalorder %s15, 0
      %p75 = por %p73, %p74
      %p76 = scmp.ne.s32.totalorder %s65, %s68
      %p77 = scmp.eq.s32.totalorder %s20, 1
      %p78 = por %p76, %p77
      %p79 = scmp.ne.s32.totalorder %s68, %s69
      %p80 = scmp.eq.s32.totalorder %s20, 0
      %p81 = por %p79, %p80
      %p82 = scmp.ne.s32.totalorder %s68, %s69
      %p83 = scmp.eq.s32.totalorder %s21, 1
      %p84 = por %p82, %p83
      %p86 = scmp.ne.s32.totalorder %s69, %s85
      %p87 = scmp.eq.s32.totalorder %s21, 0
      %p88 = por %p86, %p87
      %s90 = sadd.s32 %s89, 1
      %p93 = scmp.eq.s32.totalorder %s15, 1
      %p94 = scmp.ne.s32.totalorder %s89, %s91
      %p95 = scmp.eq.s32.totalorder %s15, 0
      %p96 = por %p94, %p95
      %p97 = scmp.ne.s32.totalorder %s89, %s91
      %p98 = scmp.eq.s32.totalorder %s20, 1
      %p99 = por %p97, %p98
      %p100 = scmp.ne.s32.totalorder %s91, %s92
      %p101 = scmp.eq.s32.totalorder %s20, 0
      %p102 = por %p100, %p101
      %p103 = scmp.ne.s32.totalorder %s91, %s92
      %p104 = scmp.eq.s32.totalorder %s21, 1
      %p105 = por %p103, %p104
      %p107 = scmp.ne.s32.totalorder %s92, %s106
      %p108 = scmp.eq.s32.totalorder %s21, 0
      %p109 = por %p107, %p108
      %s111 = sadd.s32 %s110, 1
      %p114 = scmp.eq.s32.totalorder %s15, 1
      %p115 = scmp.ne.s32.totalorder %s110, %s112
      %p116 = scmp.eq.s32.totalorder %s15, 0
      %p117 = por %p115, %p116
      %p118 = scmp.ne.s32.totalorder %s110, %s112
      %p119 = scmp.eq.s32.totalorder %s20, 1
      %p120 = por %p118, %p119
      %p121 = scmp.ne.s32.totalorder %s112, %s113
      %p122 = scmp.eq.s32.totalorder %s20, 0
      %p123 = por %p121, %p122
      %p124 = scmp.ne.s32.totalorder %s112, %s113
      %p125 = scmp.eq.s32.totalorder %s21, 1
      %p126 = por %p124, %p125
      %p128 = scmp.ne.s32.totalorder %s113, %s127
      %p129 = scmp.eq.s32.totalorder %s21, 0
      %p130 = por %p128, %p129
      %s132 = sadd.s32 %s131, 1
      %p135 = scmp.eq.s32.totalorder %s15, 1
      %p136 = scmp.ne.s32.totalorder %s131, %s133
      %p137 = scmp.eq.s32.totalorder %s15, 0
      %p138 = por %p136, %p137
      %p139 = scmp.ne.s32.totalorder %s131, %s133
      %p140 = scmp.eq.s32.totalorder %s20, 1
      %p141 = por %p139, %p140
      %p142 = scmp.ne.s32.totalorder %s133, %s134
      %p143 = scmp.eq.s32.totalorder %s20, 0
      %p144 = por %p142, %p143
      %p145 = scmp.ne.s32.totalorder %s133, %s134
      %p146 = scmp.eq.s32.totalorder %s21, 1
      %p147 = por %p145, %p146
      %p149 = scmp.ne.s32.totalorder %s134, %s148
      %p150 = scmp.eq.s32.totalorder %s21, 0
      %p151 = por %p149, %p150
      %s152 = ssub.s32 %s22, %s34
      %s153 = ssub.s32 %s23, %s30
      %s154 = sor.u32 %s152, %s153
      %p155 = scmp.eq.s32.totalorder %s154, 0
      %s157 = sadd.s32 %s156, 1
      %s158 = scalar_select %p155, %s156, %s157
      %p161 = pneg %p155
      %p162 = scmp.eq.s32.totalorder %s15, 1
      %p163 = por %p161, %p162
      %p164 = scmp.ne.s32.totalorder %s156, %s159
      %p165 = scmp.eq.s32.totalorder %s15, 0
      %p166 = por %p164, %p165
      %p167 = scmp.ne.s32.totalorder %s156, %s159
      %p168 = scmp.eq.s32.totalorder %s20, 1
      %p169 = por %p167, %p168
      %p170 = scmp.ne.s32.totalorder %s159, %s160
      %p171 = scmp.eq.s32.totalorder %s20, 0
      %p172 = por %p170, %p171
      %p173 = scmp.ne.s32.totalorder %s159, %s160
      %p174 = scmp.eq.s32.totalorder %s21, 1
      %p175 = por %p173, %p174
      %p177 = scmp.ne.s32.totalorder %s160, %s176
      %p178 = scmp.eq.s32.totalorder %s21, 0
      %p179 = por %p177, %p178
      %s180 = ssub.s32 %s22, %s34
      %s181 = ssub.s32 %s23, %s30
      %s182 = sor.u32 %s180, %s181
      %p183 = scmp.eq.s32.totalorder %s182, 0
      %s185 = sadd.s32 %s184, 1
      %s186 = scalar_select %p183, %s184, %s185
      %p189 = pneg %p183
      %p190 = scmp.eq.s32.totalorder %s15, 1
      %p191 = por %p189, %p190
      %p192 = scmp.ne.s32.totalorder %s184, %s187
      %p193 = scmp.eq.s32.totalorder %s15, 0
      %p194 = por %p192, %p193
      %p195 = scmp.ne.s32.totalorder %s184, %s187
      %p196 = scmp.eq.s32.totalorder %s20, 1
      %p197 = por %p195, %p196
      %p198 = scmp.ne.s32.totalorder %s187, %s188
      %p199 = scmp.eq.s32.totalorder %s20, 0
      %p200 = por %p198, %p199
      %p201 = scmp.ne.s32.totalorder %s187, %s188
      %p202 = scmp.eq.s32.totalorder %s21, 1
      %p203 = por %p201, %p202
      %p205 = scmp.ne.s32.totalorder %s188, %s204
      %p206 = scmp.eq.s32.totalorder %s21, 0
      %p207 = por %p205, %p206
      %p208 = scmp.le.s32.totalorder 1, %s15
      %p209 = scmp.lt.s32.totalorder %s15, 3
      %p210 = pnand %p208, %p209
      %p211 = pneg %p210
      // Predicated region
      $region9: #{_lambda_.5} parent=5 // pred_check
        _
      $region10: #{_lambda_.5} parent=5 // pred_check_branch
        %213 = sbr.rel (%p210) target = $region12
      $region11: #{_lambda_.5} parent=5 // pred_region
        %s214 = ssub.s32 %s15, 1
        // Predicated region
        $region13: #{_lambda_.5} parent=11 // pred_check
          %p215 = pneg %p102
        $region14: #{_lambda_.5} parent=11 // pred_check_branch
          %217 = sbr.rel (%p215) target = $region16
        $region15: #{_lambda_.5} parent=11 // pred_region
          _
        $region16: #{_lambda_.5} parent=11 // pred_fallthru
          _
        // Predicated region
        $region17: #{_lambda_.5} parent=11 // pred_check
          %p218 = pneg %p123
        $region18: #{_lambda_.5} parent=11 // pred_check_branch
          %220 = sbr.rel (%p218) target = $region20
        $region19: #{_lambda_.5} parent=11 // pred_region
          _
        $region20: #{_lambda_.5} parent=11 // pred_fallthru
          _
        // Predicated region
        $region21: #{_lambda_.5} parent=11 // pred_check
          %p221 = pneg %p144
        $region22: #{_lambda_.5} parent=11 // pred_check_branch
          %223 = sbr.rel (%p221) target = $region24
        $region23: #{_lambda_.5} parent=11 // pred_region
          _
        $region24: #{_lambda_.5} parent=11 // pred_fallthru
          _
      $region12: #{_lambda_.5} parent=5 // pred_fallthru
        _
      %p224 = scmp.lt.s32.totalorder %s15, 2
      // Predicated region
      $region25: #{_lambda_.5} parent=5 // pred_check
        %p225 = pneg %p224
      $region26: #{_lambda_.5} parent=5 // pred_check_branch
        %227 = sbr.rel (%p225) target = $region28
      $region27: #{_lambda_.5} parent=5 // pred_region
        // Predicated region
        $region29: #{_lambda_.5} parent=27 // pred_check
          %p228 = pneg %p49
        $region30: #{_lambda_.5} parent=27 // pred_check_branch
          %230 = sbr.rel (%p228) target = $region32
        $region31: #{_lambda_.5} parent=27 // pred_region
          %s231 = smul.u32 8, %s23
          %p232 = scmp.lt.s32.totalorder %s22, 1
          %s233 = scalar_select %p232, %s22, 1
          %p234 = scmp.lt.s32.totalorder %s231, 7
          %s235 = scalar_select %p234, %s231, 7
          %s236 = smul.addr %s233, 8
          %s237 = sadd.s32 %s235, %s236
          %s238 = smul.addr %s237, 4
          %s239 = scalar_lea.vmem %s0, %s238
          %s240 = smul.u32 8, %s23
        $region32: #{_lambda_.5} parent=27 // pred_fallthru
          _
        // Predicated region
        $region33: #{_lambda_.5} parent=27 // pred_check
          %p241 = pneg %p75
        $region34: #{_lambda_.5} parent=27 // pred_check_branch
          %243 = sbr.rel (%p241) target = $region36
        $region35: #{_lambda_.5} parent=27 // pred_region
          %p244 = scmp.lt.s32.totalorder %s22, 1
          %s245 = scalar_select %p244, %s22, 1
          %s246 = smul.addr %s245, 4
          %s247 = smul.addr %s246, 8
          %s248 = scalar_lea.vmem %s1, %s247
        $region36: #{_lambda_.5} parent=27 // pred_fallthru
          _
        // Predicated region
        $region37: #{_lambda_.5} parent=27 // pred_check
          %p249 = pneg %p166
        $region38: #{_lambda_.5} parent=27 // pred_check_branch
          %251 = sbr.rel (%p249) target = $region40
        $region39: #{_lambda_.5} parent=27 // pred_region
          %s252 = smul.u32 8, %s23
          %p253 = scmp.lt.s32.totalorder %s22, 1
          %s254 = scalar_select %p253, %s22, 1
          %p255 = scmp.lt.s32.totalorder %s252, 7
          %s256 = scalar_select %p255, %s252, 7
          %s257 = smul.addr %s254, 8
          %s258 = sadd.s32 %s256, %s257
          %s259 = smul.addr %s258, 8
          %s260 = scalar_lea.vmem %s5, %s259
          %s261 = smul.u32 8, %s23
        $region40: #{_lambda_.5} parent=27 // pred_fallthru
          _
      $region28: #{_lambda_.5} parent=5 // pred_fallthru
        _
      %p262 = scmp.le.s32.totalorder 1, %s15
      %p263 = scmp.lt.s32.totalorder %s15, 3
      %p264 = pnand %p262, %p263
      %p265 = pneg %p264
      // Predicated region
      $region41: #{_lambda_.5} parent=5 // pred_check
        _
      $region42: #{_lambda_.5} parent=5 // pred_check_branch
        %267 = sbr.rel (%p264) target = $region44
      $region43: #{_lambda_.5} parent=5 // pred_region
        %s268 = ssub.s32 %s15, 1
        %s269 = smul.u32 8, %s25
        %p270 = scmp.lt.s32.totalorder %s24, 1
        %s271 = scalar_select %p270, %s24, 1
        %p272 = scmp.lt.s32.totalorder %s269, 7
        %s273 = scalar_select %p272, %s269, 7
        %s274 = smul.addr %s271, 8
        %s275 = sadd.s32 %s273, %s274
        %s276 = smul.addr %s275, 4
        %s277 = scalar_lea.vmem %s0, %s276
        %p278 = pneg %p55
        %p279 = pneg %p52
        %p280 = scmp.lt.s32.totalorder %s24, 1
        %s281 = scalar_select %p280, %s24, 1
        %s282 = smul.addr %s281, 4
        %s283 = smul.addr %s282, 8
        %s284 = scalar_lea.vmem %s1, %s283
        %p285 = pneg %p81
        %p286 = pneg %p78
        %p287 = pneg %p102
        %p288 = pneg %p99
        %p289 = pneg %p123
        %p290 = pneg %p120
        %p291 = pneg %p144
        %p292 = pneg %p141
        %s293 = smul.u32 8, %s25
        %p294 = scmp.lt.s32.totalorder %s24, 1
        %s295 = scalar_select %p294, %s24, 1
        %p296 = scmp.lt.s32.totalorder %s293, 7
        %s297 = scalar_select %p296, %s293, 7
        %s298 = smul.addr %s295, 8
        %s299 = sadd.s32 %s297, %s298
        %s300 = smul.addr %s299, 8
        %s301 = scalar_lea.vmem %s5, %s300
        %p302 = pneg %p172
        %p303 = pneg %p169
        %p304 = pneg %p200
        %p305 = pneg %p197
        %s306 = sand.u32 %s187, 1
        %s307 = scalar_lea.sflag [#allocation3], %s306
        %s308 = sand.u32 %s187, 1
        %s309 = smul.addr %s308, 64
        %s310 = scalar_lea.vmem [#allocation2], %s309
        %s311 = smul.u32 8, %s25
        %p312 = scmp.lt.s32.totalorder %s24, 1
        %s313 = scalar_select %p312, %s24, 1
        %p314 = scmp.lt.s32.totalorder %s311, 7
        %s315 = scalar_select %p314, %s311, 7
        %s316 = smul.addr %s313, 8
        %s317 = sadd.s32 %s315, %s316
        %s318 = smul.addr %s317, 4
        %s319 = scalar_lea.vmem %s0, %s318
        %s320 = smul.u32 8, %s25
        %p321 = scmp.lt.s32.totalorder %s24, 1
        %s322 = scalar_select %p321, %s24, 1
        %s323 = smul.addr %s322, 4
        %s324 = smul.addr %s323, 8
        %s325 = scalar_lea.vmem %s1, %s324
        %s326 = smul.u32 8, %s25
        %p327 = scmp.lt.s32.totalorder %s24, 1
        %s328 = scalar_select %p327, %s24, 1
        %p329 = scmp.lt.s32.totalorder %s326, 7
        %s330 = scalar_select %p329, %s326, 7
        %s331 = smul.addr %s328, 8
        %s332 = sadd.s32 %s330, %s331
        %s333 = smul.addr %s332, 8
        %s334 = scalar_lea.vmem %s5, %s333
        %s335 = smul.u32 8, %s25
        %s336 = smul.u32 8, %s25
        %v338 = vld [vmem:[%s325] sm:$0xff]
        %v339 = vld [vmem:[%s325 + $0x8] sm:$0xff]
        %v340 = vld [vmem:[%s325 + $0x10] sm:$0xff]
        %v341 = vld [vmem:[%s325 + $0x18] sm:$0xff]
        %v342 = vld [vmem:[%s2] sm:$0xff]
        %v343 = vld [vmem:[%s2 + $0x8] sm:$0xff]
        %v344 = vld [vmem:[%s2 + $0x10] sm:$0xff]
        %v345 = vld [vmem:[%s2 + $0x18] sm:$0xff]
        %347 = vset.pattern.permute.xlu0 0
        %348 = vperm.xlu0 %347, %v338
        %v349 = vpop.permute.xlu0 %348
        %352 = vset.pattern.permute.xlu0 0
        %353 = vperm.xlu0 %352, %v339
        %v354 = vpop.permute.xlu0 %353
        %357 = vset.pattern.permute.xlu0 0
        %358 = vperm.xlu0 %357, %v340
        %v359 = vpop.permute.xlu0 %358
        %362 = vset.pattern.permute.xlu0 0
        %363 = vperm.xlu0 %362, %v341
        %v364 = vpop.permute.xlu0 %363
        %v366 = vmul.f32 %v342, %v349
        %v367 = vmul.f32 %v343, %v354
        %v368 = vmul.f32 %v344, %v359
        %v369 = vmul.f32 %v345, %v364
        %v370 = vpack.c.bf16 %v367, %v366
        %v371 = vpack.c.bf16 %v369, %v368
        %v372 = vld [vmem:[%s319] sm:$0xf]
        %v373 = vld [vmem:[%s319 + $0x4] sm:$0xf]
        %v374 = vld [vmem:[%s319 + $0x8] sm:$0xf]
        %v375 = vld [vmem:[%s319 + $0xc] sm:$0xf]
        %v376 = vld [vmem:[%s319 + $0x10] sm:$0xf]
        %v377 = vld [vmem:[%s319 + $0x14] sm:$0xf]
        %v378 = vld [vmem:[%s319 + $0x18] sm:$0xf]
        %v379 = vld [vmem:[%s319 + $0x1c] sm:$0xf]
        %v388 = vunpack.c.l.b16 %v372
        %v389 = vunpack.c.l.b16 %v373
        %v390 = vunpack.c.l.b16 %v374
        %v391 = vunpack.c.l.b16 %v375
        %v392 = vunpack.c.l.b16 %v376
        %v393 = vunpack.c.l.b16 %v377
        %v394 = vunpack.c.l.b16 %v378
        %v395 = vunpack.c.l.b16 %v379
        %v396 = vpack.c.b16 %v389, %v388
        %v397 = vpack.c.b16 %v391, %v390
        %v398 = vpack.c.b16 %v393, %v392
        %v399 = vpack.c.b16 %v395, %v394
        %vm400 = vcmask 261120
        %v402 = vsel %vm400, %v396, 0
        %v405 = vsel %vm400, %v397, 0
        %v408 = vsel %vm400, %v398, 0
        %v411 = vsel %vm400, %v399, 0
        %413 = vmatprep.subr.bf16.mxu0 0
        %414 = vmatpush1.bf16.msra.mxu0 0
        %415 = vmatprep.subr.bf16.mxu0 0
        %416 = vmatpush1.bf16.msra.mxu0 0
        %417 = vmatprep.subr.bf16.mxu0 0
        %418 = vmatpush1.bf16.msra.mxu0 0
        %419 = vmatprep.subr.bf16.mxu0 0
        %420 = vmatpush1.bf16.msra.mxu0 0
        %421 = vmatprep.subr.bf16.mxu0 0
        %422 = vmatpush1.bf16.msra.mxu0 0
        %423 = vmatprep.subr.bf16.mxu0 0
        %424 = vmatpush1.bf16.msra.mxu0 0
        %425 = vmatprep.subr.bf16.mxu0 0
        %426 = vmatpush1.bf16.msra.mxu0 %v371
        %427 = vmatprep.subr.bf16.mxu0 0
        %428 = vmatpush1.bf16.msra.mxu0 %v370
        %429 = vmatprep.subr.bf16.mxu0 0
        %430 = vmatpush2.bf16.msra.mxu0 0
        %431 = vmatprep.subr.bf16.mxu0 0
        %432 = vmatpush2.bf16.msra.mxu0 0
        %433 = vmatprep.subr.bf16.mxu0 0
        %434 = vmatpush2.bf16.msra.mxu0 0
        %435 = vmatprep.subr.bf16.mxu0 0
        %436 = vmatpush2.bf16.msra.mxu0 0
        %437 = vmatprep.subr.bf16.mxu0 0
        %438 = vmatpush2.bf16.msra.mxu0 0
        %439 = vmatprep.subr.bf16.mxu0 0
        %440 = vmatpush2.bf16.msra.mxu0 0
        %441 = vmatprep.subr.bf16.mxu0 0
        %442 = vmatpush2.bf16.msra.mxu0 0
        %443 = vmatprep.subr.bf16.mxu0 0
        %444 = vmatpush2.bf16.msra.mxu0 0
        %445 = vmatprep.mubr.bf16.mxu0 0
        %446 = vmatmul.mubr.bf16.gmra.mxu0 %v402
        %v447 = vpop.f32.mrf.mxu0
        %v448 = vadd.f32 0.0, %v447
        %v449 = vpop.f32.mrf.mxu0
        %v450 = vpop.f32.mrf.mxu0
        %v451 = vadd.f32 0.0, %v450
        %v452 = vpop.f32.mrf.mxu0
        %453 = vmatprep.mubr.bf16.mxu0 0
        %454 = vmatmul.mubr.bf16.gmra.mxu0 %v405
        %v455 = vpop.f32.mrf.mxu0
        %v456 = vadd.f32 0.0, %v455
        %v457 = vpop.f32.mrf.mxu0
        %v458 = vpop.f32.mrf.mxu0
        %v459 = vadd.f32 0.0, %v458
        %v460 = vpop.f32.mrf.mxu0
        %461 = vmatprep.mubr.bf16.mxu0 0
        %462 = vmatmul.mubr.bf16.gmra.mxu0 %v408
        %v463 = vpop.f32.mrf.mxu0
        %v464 = vadd.f32 0.0, %v463
        %v465 = vpop.f32.mrf.mxu0
        %v466 = vpop.f32.mrf.mxu0
        %v467 = vadd.f32 0.0, %v466
        %v468 = vpop.f32.mrf.mxu0
        %469 = vmatprep.mubr.bf16.mxu0 0
        %470 = vmatmul.mubr.bf16.gmra.mxu0 %v411
        %v471 = vpop.f32.mrf.mxu0
        %v472 = vadd.f32 0.0, %v471
        %v473 = vpop.f32.mrf.mxu0
        %v474 = vpop.f32.mrf.mxu0
        %v475 = vadd.f32 0.0, %v474
        %v476 = vpop.f32.mrf.mxu0
        %477 = vdwg.mxu0
        %v478 = vld [vmem:[%s3] sm:$0x1]
        %v480 = vlaneseq
        %v481 = vshrl.u32 %v480, 7
        %v482 = vsub.s32 0, %v481
        %v483 = vrot.slane %v478, %v482
        %v485 = vmul.f32 %v448, %v483
        %v486 = vmul.f32 %v451, %v483
        %v487 = vmul.f32 %v456, %v483
        %v488 = vmul.f32 %v459, %v483
        %v489 = vmul.f32 %v464, %v483
        %v490 = vmul.f32 %v467, %v483
        %v491 = vmul.f32 %v472, %v483
        %v492 = vmul.f32 %v475, %v483
        %v493 = vld [vmem:[%s4] sm:$0x1]
        %v495 = vlaneseq
        %v496 = vshrl.u32 %v495, 7
        %v497 = vsub.s32 0, %v496
        %v498 = vrot.slane %v493, %v497
        %v500 = vadd.f32 %v485, %v498
        %v501 = vadd.f32 %v486, %v498
        %v502 = vadd.f32 %v487, %v498
        %v503 = vadd.f32 %v488, %v498
        %v504 = vadd.f32 %v489, %v498
        %v505 = vadd.f32 %v490, %v498
        %v506 = vadd.f32 %v491, %v498
        %v507 = vadd.f32 %v492, %v498
        %v508 = vld [vmem:[%s334] sm:$0xff]
        %v509 = vld [vmem:[%s334 + $0x8] sm:$0xff]
        %v510 = vld [vmem:[%s334 + $0x10] sm:$0xff]
        %v511 = vld [vmem:[%s334 + $0x18] sm:$0xff]
        %v512 = vld [vmem:[%s334 + $0x20] sm:$0xff]
        %v513 = vld [vmem:[%s334 + $0x28] sm:$0xff]
        %v514 = vld [vmem:[%s334 + $0x30] sm:$0xff]
        %v515 = vld [vmem:[%s334 + $0x38] sm:$0xff]
        %v516 = vadd.f32 %v500, %v508
        %v517 = vadd.f32 %v501, %v509
        %v518 = vadd.f32 %v502, %v510
        %v519 = vadd.f32 %v503, %v511
        %v520 = vadd.f32 %v504, %v512
        %v521 = vadd.f32 %v505, %v513
        %v522 = vadd.f32 %v506, %v514
        %v523 = vadd.f32 %v507, %v515
        %v524 = vmax.f32 %v516, 0.0
        %v525 = vmax.f32 %v517, 0.0
        %v526 = vmax.f32 %v518, 0.0
        %v527 = vmax.f32 %v519, 0.0
        %v528 = vmax.f32 %v520, 0.0
        %v529 = vmax.f32 %v521, 0.0
        %v530 = vmax.f32 %v522, 0.0
        %v531 = vmax.f32 %v523, 0.0
        %vm532 = vcmask 523264
        %533 = vst.msk [vmem:[%s310] sm:$0xff] %vm532, %v524
        %534 = vst.msk [vmem:[%s310 + $0x8] sm:$0xff] %vm532, %v525
        %535 = vst.msk [vmem:[%s310 + $0x10] sm:$0xff] %vm532, %v526
        %536 = vst.msk [vmem:[%s310 + $0x18] sm:$0xff] %vm532, %v527
        %537 = vst.msk [vmem:[%s310 + $0x20] sm:$0xff] %vm532, %v528
        %538 = vst.msk [vmem:[%s310 + $0x28] sm:$0xff] %vm532, %v529
        %539 = vst.msk [vmem:[%s310 + $0x30] sm:$0xff] %vm532, %v530
        %540 = vst.msk [vmem:[%s310 + $0x38] sm:$0xff] %vm532, %v531
        %s541 = sand.u32 %s187, 1
        %s542 = scalar_lea.sflag [#allocation3], %s541
        %s543 = sand.u32 %s187, 1
        %s544 = smul.addr %s543, 64
        %s545 = scalar_lea.vmem [#allocation2], %s544
        // Predicated region
        $region45: #{_lambda_.5} parent=43 // pred_check
          %p546 = pneg %p197
        $region46: #{_lambda_.5} parent=43 // pred_check_branch
          %548 = sbr.rel (%p546) target = $region48
        $region47: #{_lambda_.5} parent=43 // pred_region
          %s549 = smul.u32 8, %s25
          %s551 = ssub.s32 1024, 1024
          %552 = vsyncadd %s542, %s551
          %s553 = smul.addr %s24, 8
          %s554 = sadd.s32 %s549, %s553
          %s555 = smul.addr %s554, 128
          %s556 = scalar_lea.hbm %s6, %s555
          %s557 = sshll.u32 %s545, 4
          %s558 = int_to_ptr.vmem [resolvable:$true] %s557
          %563 = dma.vmem_to_hbm [thread:$0]  %s558, 1024, %s556, %s542, 128, 128, 8
        $region48: #{_lambda_.5} parent=43 // pred_fallthru
          _
      $region44: #{_lambda_.5} parent=5 // pred_fallthru
        _
      %p564 = scmp.le.s32.totalorder 2, %s15
      // Predicated region
      $region49: #{_lambda_.5} parent=5 // pred_check
        %p565 = pneg %p564
      $region50: #{_lambda_.5} parent=5 // pred_check_branch
        %567 = sbr.rel (%p565) target = $region52
      $region51: #{_lambda_.5} parent=5 // pred_region
        %s568 = ssub.s32 %s15, 2
        // Predicated region
        $region53: #{_lambda_.5} parent=51 // pred_check
          %p569 = pneg %p203
        $region54: #{_lambda_.5} parent=51 // pred_check_branch
          %571 = sbr.rel (%p569) target = $region56
        $region55: #{_lambda_.5} parent=51 // pred_region
          %s572 = sand.u32 %s188, 1
          %s573 = scalar_lea.sflag [#allocation3], %s572
          %s574 = sand.u32 %s188, 1
          %s575 = smul.addr %s574, 64
          %s576 = scalar_lea.vmem [#allocation2], %s575
          %577 = dma.done %s573, 1024
        $region56: #{_lambda_.5} parent=51 // pred_fallthru
          _
      $region52: #{_lambda_.5} parent=5 // pred_fallthru
        _
    $region6: #{_lambda_.5} parent=1 // loop_footer
      %s19 = sadd.s32 1, %s15
    $region7: #{_lambda_.5} parent=1 // loop_footer_branch
      %14 = sbr.rel target = $region3
    $region8: #{_lambda_.5} parent=1 // loop_exit
      _
    %578 = vsyncpa [#allocation3], 1
    %s579 = scalar_lea.sflag [#allocation3], 1
    %580 = vsyncpa %s579, 1

// kernel: _lambda_.4
$region0: #{_lambda_.4}
  #allocation0 [shape = 'u32[]', space=smem, size = 0x4, offset = 0x4, fixed_abs, tag = 'smem constant byte address 0x4 - core index']
  #allocation1 [shape = 'u32[144,128]{1,0:T(1,128)}', space=vmem, size = 0x12000, scoped, tag = 'internal scratch']
  %s0 = inlined_call_operand.vmem [shape: f32[2,1,16], index: 0, kind: input, shape index: {}]
  %s1 = inlined_call_operand.vmem [shape: bf16[16,8], index: 1, kind: input, shape index: {}]
  %s2 = inlined_call_operand.vmem [shape: f32[1,8], index: 2, kind: input, shape index: {}]
  %s3 = inlined_call_operand.vmem [shape: f32[1,8], index: 3, kind: input, shape index: {}]
  %s4 = inlined_call_operand.vmem [shape: bf16[8,32], index: 4, kind: input, shape index: {}]
  %s5 = inlined_call_operand.vmem [shape: f32[2,32], index: 5, kind: output, shape index: {}]
  %s6 = sld [smem:[#allocation0]]
  $region30: #{_lambda_.4} parent=0
    _
  %s8 = ssub.s32 1, %s6
  %s9 = scalar_select 0, %s8, %s6
  // Predicated region
  $region2: #{_lambda_.4} parent=0 // pred_check
    _
  $region3: #{_lambda_.4} parent=0 // pred_check_branch
    %11 = sbr.rel (0) target = $region5
  $region4: #{_lambda_.4} parent=0 // pred_region
    _
  $region5: #{_lambda_.4} parent=0 // pred_fallthru
    _
  // Predicated region
  $region6: #{_lambda_.4} parent=0 // pred_check
    _
  $region7: #{_lambda_.4} parent=0 // pred_check_branch
    %13 = sbr.rel (0) target = $region9
  $region8: #{_lambda_.4} parent=0 // pred_region
    _
  $region9: #{_lambda_.4} parent=0 // pred_fallthru
    _
  // Predicated region
  $region10: #{_lambda_.4} parent=0 // pred_check
    _
  $region11: #{_lambda_.4} parent=0 // pred_check_branch
    %15 = sbr.rel (0) target = $region13
  $region12: #{_lambda_.4} parent=0 // pred_region
    _
  $region13: #{_lambda_.4} parent=0 // pred_fallthru
    _
  // Predicated region
  $region14: #{_lambda_.4} parent=0 // pred_check
    _
  $region15: #{_lambda_.4} parent=0 // pred_check_branch
    %17 = sbr.rel (0) target = $region17
  $region16: #{_lambda_.4} parent=0 // pred_region
    _
  $region17: #{_lambda_.4} parent=0 // pred_fallthru
    _
  // Predicated region
  $region18: #{_lambda_.4} parent=0 // pred_check
    _
  $region19: #{_lambda_.4} parent=0 // pred_check_branch
    %19 = sbr.rel (0) target = $region21
  $region20: #{_lambda_.4} parent=0 // pred_region
    _
  $region21: #{_lambda_.4} parent=0 // pred_fallthru
    _
  %v21 = vld [vmem:[%s0] sm:$0x1]
  %v22 = vld [vmem:[%s0 + $0x1] sm:$0x1]
  %v23 = vpack.c.bf16 %v21, %v21
  %v24 = vpack.c.bf16 %v22, %v22
  %v25 = vld [vmem:[%s1] sm:$0xf]
  %v26 = vld [vmem:[%s1 + $0x4] sm:$0xf]
  %v29 = vunpack.c.l.b16 %v23
  %v30 = vunpack.c.l.b16 %v24
  %v31 = vrot.slane %v30, 7
  %vm32 = vcmask 1041409
  %v33 = vsel %vm32, %v31, %v29
  %v34 = vpack.c.b16 %v33, %v33
  %v37 = vunpack.c.l.b16 %v25
  %v38 = vunpack.c.l.b16 %v26
  %v39 = vpack.c.b16 %v38, %v37
  %vm41 = vcmask 130048
  %v43 = vsel %vm41, %v34, 0
  %45 = vmatprep.subr.bf16.mxu0 0
  %46 = vmatpush1.bf16.msra.mxu0 0
  %47 = vmatprep.subr.bf16.mxu0 0
  %48 = vmatpush1.bf16.msra.mxu0 0
  %49 = vmatprep.subr.bf16.mxu0 0
  %50 = vmatpush1.bf16.msra.mxu0 0
  %51 = vmatprep.subr.bf16.mxu0 0
  %52 = vmatpush1.bf16.msra.mxu0 0
  %53 = vmatprep.subr.bf16.mxu0 0
  %54 = vmatpush1.bf16.msra.mxu0 0
  %55 = vmatprep.subr.bf16.mxu0 0
  %56 = vmatpush1.bf16.msra.mxu0 0
  %57 = vmatprep.subr.bf16.mxu0 0
  %58 = vmatpush1.bf16.msra.mxu0 0
  %59 = vmatprep.subr.bf16.mxu0 0
  %60 = vmatpush1.bf16.msra.mxu0 %v39
  %61 = vmatprep.subr.bf16.mxu0 0
  %62 = vmatpush2.bf16.msra.mxu0 0
  %63 = vmatprep.subr.bf16.mxu0 0
  %64 = vmatpush2.bf16.msra.mxu0 0
  %65 = vmatprep.subr.bf16.mxu0 0
  %66 = vmatpush2.bf16.msra.mxu0 0
  %67 = vmatprep.subr.bf16.mxu0 0
  %68 = vmatpush2.bf16.msra.mxu0 0
  %69 = vmatprep.subr.bf16.mxu0 0
  %70 = vmatpush2.bf16.msra.mxu0 0
  %71 = vmatprep.subr.bf16.mxu0 0
  %72 = vmatpush2.bf16.msra.mxu0 0
  %73 = vmatprep.subr.bf16.mxu0 0
  %74 = vmatpush2.bf16.msra.mxu0 0
  %75 = vmatprep.subr.bf16.mxu0 0
  %76 = vmatpush2.bf16.msra.mxu0 0
  %77 = vmatprep.mubr.bf16.mxu0 0
  %78 = vmatmul.mubr.bf16.gmra.mxu0 %v43
  %v79 = vpop.f32.mrf.mxu0
  %v80 = vadd.f32 0.0, %v79
  %v81 = vpop.f32.mrf.mxu0
  %v82 = vpop.f32.mrf.mxu0
  %v83 = vpop.f32.mrf.mxu0
  %84 = vdwg.mxu0
  %v85 = vld [vmem:[%s2] sm:$0x1]
  %v87 = vlaneseq
  %v88 = vshrl.u32 %v87, 7
  %v89 = vsub.s32 0, %v88
  %v90 = vrot.slane %v85, %v89
  %v92 = vmul.f32 %v80, %v90
  %v93 = vld [vmem:[%s3] sm:$0x1]
  %v95 = vlaneseq
  %v96 = vshrl.u32 %v95, 7
  %v97 = vsub.s32 0, %v96
  %v98 = vrot.slane %v93, %v97
  %v100 = vadd.f32 %v92, %v98
  %v101 = vmax.f32 %v100, 0.0
  %v102 = vpack.c.bf16 %v101, %v101
  %v103 = vld [vmem:[%s4] sm:$0xf]
  %vm104 = vcmask 64512
  %v106 = vsel %vm104, %v102, 0
  %vm108 = vcmask 1043456
  %v110 = vsel %vm108, %v103, 0
  %112 = vmatprep.subr.bf16.mxu0 0
  %113 = vmatpush1.bf16.msra.mxu0 0
  %114 = vmatprep.subr.bf16.mxu0 0
  %115 = vmatpush1.bf16.msra.mxu0 0
  %116 = vmatprep.subr.bf16.mxu0 0
  %117 = vmatpush1.bf16.msra.mxu0 0
  %118 = vmatprep.subr.bf16.mxu0 0
  %119 = vmatpush1.bf16.msra.mxu0 0
  %120 = vmatprep.subr.bf16.mxu0 0
  %121 = vmatpush1.bf16.msra.mxu0 0
  %122 = vmatprep.subr.bf16.mxu0 0
  %123 = vmatpush1.bf16.msra.mxu0 0
  %124 = vmatprep.subr.bf16.mxu0 0
  %125 = vmatpush1.bf16.msra.mxu0 0
  %126 = vmatprep.subr.bf16.mxu0 0
  %127 = vmatpush1.bf16.msra.mxu0 %v110
  %128 = vmatprep.subr.bf16.mxu0 0
  %129 = vmatpush2.bf16.msra.mxu0 0
  %130 = vmatprep.subr.bf16.mxu0 0
  %131 = vmatpush2.bf16.msra.mxu0 0
  %132 = vmatprep.subr.bf16.mxu0 0
  %133 = vmatpush2.bf16.msra.mxu0 0
  %134 = vmatprep.subr.bf16.mxu0 0
  %135 = vmatpush2.bf16.msra.mxu0 0
  %136 = vmatprep.subr.bf16.mxu0 0
  %137 = vmatpush2.bf16.msra.mxu0 0
  %138 = vmatprep.subr.bf16.mxu0 0
  %139 = vmatpush2.bf16.msra.mxu0 0
  %140 = vmatprep.subr.bf16.mxu0 0
  %141 = vmatpush2.bf16.msra.mxu0 0
  %142 = vmatprep.subr.bf16.mxu0 0
  %143 = vmatpush2.bf16.msra.mxu0 0
  %144 = vmatprep.mubr.bf16.mxu0 0
  %145 = vmatmul.mubr.bf16.gmra.mxu0 %v106
  %v146 = vpop.f32.mrf.mxu0
  %v147 = vadd.f32 0.0, %v146
  %v148 = vpop.f32.mrf.mxu0
  %v149 = vpop.f32.mrf.mxu0
  %v150 = vpop.f32.mrf.mxu0
  %151 = vdwg.mxu0
  %153 = vrot.lane.b32.xlu0 %v147, 112
  %v154 = vpop.permute.xlu0 %153
  %v156 = vmax.f32 %v147, %v154
  %v157 = vsub.f32 %v147, %v156
  %v158 = vmul.f32 %v157, 1.442695
  %v159 = vpow.pop %v158
  %161 = vrot.lane.b32.xlu0 %v156, 16
  %v162 = vpop.permute.xlu0 %161
  %v164 = vsub.f32 %v147, %v162
  %v165 = vmul.f32 %v164, 1.442695
  %v166 = vpow.pop %v165
  %168 = vrot.lane.b32.xlu0 %v166, 112
  %v169 = vpop.permute.xlu0 %168
  %v171 = vadd.f32 %v159, %v169
  %v172 = vrcp.pop %v171
  %v173 = vmul.f32 %v159, %v172
  %vm174 = vcmask 123904
  %175 = vst.msk [vmem:[%s5] sm:$0x3] %vm174, %v173
  %177 = vrot.lane.b32.xlu0 %v172, 16
  %v178 = vpop.permute.xlu0 %177
  %v180 = vmul.f32 %v166, %v178
  %vm181 = vcmask 255104
  %182 = vst.msk [vmem:[%s5] sm:$0x3] %vm181, %v180
  // Predicated region
  $region22: #{_lambda_.4} parent=0 // pred_check
    _
  $region23: #{_lambda_.4} parent=0 // pred_check_branch
    %184 = sbr.rel (0) target = $region25
  $region24: #{_lambda_.4} parent=0 // pred_region
    _
  $region25: #{_lambda_.4} parent=0 // pred_fallthru
    _
  // Predicated region
  $region26: #{_lambda_.4} parent=0 // pred_check
    _
  $region27: #{_lambda_.4} parent=0 // pred_check_branch
    %186 = sbr.rel (0) target = $region29
  $region28: #{_lambda_.4} parent=0 // pred_region
    _
  $region29: #{_lambda_.4} parent=0 // pred_fallthru
    _

// kernel: _lambda_.3
$region0: #{_lambda_.3}
  #allocation0 [shape = 'u32[]', space=smem, size = 0x4, offset = 0x4, fixed_abs, tag = 'smem constant byte address 0x4 - core index']
  #allocation1 [shape = 'u32[144,128]{1,0:T(1,128)}', space=vmem, size = 0x12000, scoped, tag = 'internal scratch']
  #allocation2 [shape = 'bf16[12,12,16]{2,1,0:T(8,128)(2,1)}', space=vmem, size = 0xc000, scoped, tag = 'scratch operand']
  #allocation3 [shape = 'bf16[8,8,72]{2,1,0:T(8,128)(2,1)}', space=vmem, size = 0x4000, scoped, tag = 'scratch operand']
  %s0 = inlined_call_operand.vmem [shape: bf16[2,64,64], index: 0, kind: input, shape index: {}]
  %s1 = inlined_call_operand.vmem [shape: bf16[64,16], index: 1, kind: input, shape index: {}]
  %s2 = inlined_call_operand.vmem [shape: f32[1,16], index: 2, kind: input, shape index: {}]
  %s3 = inlined_call_operand.vmem [shape: f32[1,16], index: 3, kind: input, shape index: {}]
  %s4 = inlined_call_operand.vmem [shape: bf16[2,72,16], index: 4, kind: input, shape index: {}]
  %s5 = inlined_call_operand.vmem [shape: f32[2,1,16], index: 5, kind: input, shape index: {}]
  %s6 = inlined_call_operand.vmem [shape: f32[2,1,16], index: 6, kind: input, shape index: {}]
  %s7 = inlined_call_operand.vmem [shape: bf16[2,64,32], index: 7, kind: output, shape index: {0}]
  %s8 = inlined_call_operand.vmem [shape: f32[2,1,16], index: 8, kind: output, shape index: {1}]
  %9 = xla_tuple %s7, %s8
  %s10 = sld [smem:[#allocation0]]
  $region69: #{_lambda_.3} parent=0
    _
  %s12 = ssub.s32 1, %s10
  %s13 = scalar_select 0, %s12, %s10
  loop: start=0, step=1, limit=4
  $region2: #{_lambda_.3} parent=0 // loop_pre_header
    _
  $region3: #{_lambda_.3} parent=0 // loop_header
    %s15 = sphi 0, %s19
    %p16 = scmp.ge.s32.totalorder %s15, 4
    %s25 = sphi 0, %s27
    %s28 = sphi 0, %s25
    %s29 = sphi 0, %s28
    %s45 = sphi 0, %s29
    %s49 = sphi 0, %s49
    %s51 = sphi 0, %s49
    %s52 = sphi 0, %s51
    %s66 = sphi 0, %s52
    %s70 = sphi 0, %s70
    %s72 = sphi 0, %s70
    %s73 = sphi 0, %s72
    %s87 = sphi 0, %s73
    %s91 = sphi 0, %s91
    %s93 = sphi 0, %s91
    %s94 = sphi 0, %s93
    %s108 = sphi 0, %s94
    %s112 = sphi 0, %s112
    %s114 = sphi 0, %s112
    %s115 = sphi 0, %s114
    %s129 = sphi 0, %s115
    %s133 = sphi 0, %s133
    %s135 = sphi 0, %s133
    %s136 = sphi 0, %s135
    %s150 = sphi 0, %s136
    %s154 = sphi 0, %s154
    %s156 = sphi 0, %s154
    %s157 = sphi 0, %s156
    %s171 = sphi 0, %s157
    %s177 = sphi 0, %s179
    %s180 = sphi 0, %s177
    %s181 = sphi 0, %s180
    %s197 = sphi 0, %s181
    %s203 = sphi 0, %s205
    %s206 = sphi 0, %s203
    %s207 = sphi 0, %s206
    %s223 = sphi 0, %s207
  $region4: #{_lambda_.3} parent=0 // loop_header_branch
    %18 = sbr.rel (%p16) target = $region8
  $region5: #{_lambda_.3} parent=0 // loop_body
    %s20 = ssub.s32 %s15, 1
    %s21 = ssub.s32 %s15, 2
    %s22 = sadd.s32 %s15, 1
    %s23 = ssub.s32 %s15, %s22
    %p24 = scmp.eq.s32.totalorder %s23, 0
    %s26 = sadd.s32 %s25, 1
    %s27 = scalar_select %p24, %s25, %s26
    %p30 = pneg %p24
    %p31 = scmp.eq.s32.totalorder %s15, 1
    %p32 = por %p30, %p31
    %p33 = scmp.ne.s32.totalorder %s25, %s28
    %p34 = scmp.eq.s32.totalorder %s15, 0
    %p35 = por %p33, %p34
    %p36 = scmp.ne.s32.totalorder %s25, %s28
    %p37 = scmp.eq.s32.totalorder %s20, 1
    %p38 = por %p36, %p37
    %p39 = scmp.ne.s32.totalorder %s28, %s29
    %p40 = scmp.eq.s32.totalorder %s20, 0
    %p41 = por %p39, %p40
    %p42 = scmp.ne.s32.totalorder %s28, %s29
    %p43 = scmp.eq.s32.totalorder %s21, 1
    %p44 = por %p42, %p43
    %p46 = scmp.ne.s32.totalorder %s29, %s45
    %p47 = scmp.eq.s32.totalorder %s21, 0
    %p48 = por %p46, %p47
    %s50 = sadd.s32 %s49, 1
    %p53 = scmp.eq.s32.totalorder %s15, 1
    %p54 = scmp.ne.s32.totalorder %s49, %s51
    %p55 = scmp.eq.s32.totalorder %s15, 0
    %p56 = por %p54, %p55
    %p57 = scmp.ne.s32.totalorder %s49, %s51
    %p58 = scmp.eq.s32.totalorder %s20, 1
    %p59 = por %p57, %p58
    %p60 = scmp.ne.s32.totalorder %s51, %s52
    %p61 = scmp.eq.s32.totalorder %s20, 0
    %p62 = por %p60, %p61
    %p63 = scmp.ne.s32.totalorder %s51, %s52
    %p64 = scmp.eq.s32.totalorder %s21, 1
    %p65 = por %p63, %p64
    %p67 = scmp.ne.s32.totalorder %s52, %s66
    %p68 = scmp.eq.s32.totalorder %s21, 0
    %p69 = por %p67, %p68
    %s71 = sadd.s32 %s70, 1
    %p74 = scmp.eq.s32.totalorder %s15, 1
    %p75 = scmp.ne.s32.totalorder %s70, %s72
    %p76 = scmp.eq.s32.totalorder %s15, 0
    %p77 = por %p75, %p76
    %p78 = scmp.ne.s32.totalorder %s70, %s72
    %p79 = scmp.eq.s32.totalorder %s20, 1
    %p80 = por %p78, %p79
    %p81 = scmp.ne.s32.totalorder %s72, %s73
    %p82 = scmp.eq.s32.totalorder %s20, 0
    %p83 = por %p81, %p82
    %p84 = scmp.ne.s32.totalorder %s72, %s73
    %p85 = scmp.eq.s32.totalorder %s21, 1
    %p86 = por %p84, %p85
    %p88 = scmp.ne.s32.totalorder %s73, %s87
    %p89 = scmp.eq.s32.totalorder %s21, 0
    %p90 = por %p88, %p89
    %s92 = sadd.s32 %s91, 1
    %p95 = scmp.eq.s32.totalorder %s15, 1
    %p96 = scmp.ne.s32.totalorder %s91, %s93
    %p97 = scmp.eq.s32.totalorder %s15, 0
    %p98 = por %p96, %p97
    %p99 = scmp.ne.s32.totalorder %s91, %s93
    %p100 = scmp.eq.s32.totalorder %s20, 1
    %p101 = por %p99, %p100
    %p102 = scmp.ne.s32.totalorder %s93, %s94
    %p103 = scmp.eq.s32.totalorder %s20, 0
    %p104 = por %p102, %p103
    %p105 = scmp.ne.s32.totalorder %s93, %s94
    %p106 = scmp.eq.s32.totalorder %s21, 1
    %p107 = por %p105, %p106
    %p109 = scmp.ne.s32.totalorder %s94, %s108
    %p110 = scmp.eq.s32.totalorder %s21, 0
    %p111 = por %p109, %p110
    %s113 = sadd.s32 %s112, 1
    %p116 = scmp.eq.s32.totalorder %s15, 1
    %p117 = scmp.ne.s32.totalorder %s112, %s114
    %p118 = scmp.eq.s32.totalorder %s15, 0
    %p119 = por %p117, %p118
    %p120 = scmp.ne.s32.totalorder %s112, %s114
    %p121 = scmp.eq.s32.totalorder %s20, 1
    %p122 = por %p120, %p121
    %p123 = scmp.ne.s32.totalorder %s114, %s115
    %p124 = scmp.eq.s32.totalorder %s20, 0
    %p125 = por %p123, %p124
    %p126 = scmp.ne.s32.totalorder %s114, %s115
    %p127 = scmp.eq.s32.totalorder %s21, 1
    %p128 = por %p126, %p127
    %p130 = scmp.ne.s32.totalorder %s115, %s129
    %p131 = scmp.eq.s32.totalorder %s21, 0
    %p132 = por %p130, %p131
    %s134 = sadd.s32 %s133, 1
    %p137 = scmp.eq.s32.totalorder %s15, 1
    %p138 = scmp.ne.s32.totalorder %s133, %s135
    %p139 = scmp.eq.s32.totalorder %s15, 0
    %p140 = por %p138, %p139
    %p141 = scmp.ne.s32.totalorder %s133, %s135
    %p142 = scmp.eq.s32.totalorder %s20, 1
    %p143 = por %p141, %p142
    %p144 = scmp.ne.s32.totalorder %s135, %s136
    %p145 = scmp.eq.s32.totalorder %s20, 0
    %p146 = por %p144, %p145
    %p147 = scmp.ne.s32.totalorder %s135, %s136
    %p148 = scmp.eq.s32.totalorder %s21, 1
    %p149 = por %p147, %p148
    %p151 = scmp.ne.s32.totalorder %s136, %s150
    %p152 = scmp.eq.s32.totalorder %s21, 0
    %p153 = por %p151, %p152
    %s155 = sadd.s32 %s154, 1
    %p158 = scmp.eq.s32.totalorder %s15, 1
    %p159 = scmp.ne.s32.totalorder %s154, %s156
    %p160 = scmp.eq.s32.totalorder %s15, 0
    %p161 = por %p159, %p160
    %p162 = scmp.ne.s32.totalorder %s154, %s156
    %p163 = scmp.eq.s32.totalorder %s20, 1
    %p164 = por %p162, %p163
    %p165 = scmp.ne.s32.totalorder %s156, %s157
    %p166 = scmp.eq.s32.totalorder %s20, 0
    %p167 = por %p165, %p166
    %p168 = scmp.ne.s32.totalorder %s156, %s157
    %p169 = scmp.eq.s32.totalorder %s21, 1
    %p170 = por %p168, %p169
    %p172 = scmp.ne.s32.totalorder %s157, %s171
    %p173 = scmp.eq.s32.totalorder %s21, 0
    %p174 = por %p172, %p173
    %s175 = ssub.s32 %s15, %s22
    %p176 = scmp.eq.s32.totalorder %s175, 0
    %s178 = sadd.s32 %s177, 1
    %s179 = scalar_select %p176, %s177, %s178
    %p182 = pneg %p176
    %p183 = scmp.eq.s32.totalorder %s15, 1
    %p184 = por %p182, %p183
    %p185 = scmp.ne.s32.totalorder %s177, %s180
    %p186 = scmp.eq.s32.totalorder %s15, 0
    %p187 = por %p185, %p186
    %p188 = scmp.ne.s32.totalorder %s177, %s180
    %p189 = scmp.eq.s32.totalorder %s20, 1
    %p190 = por %p188, %p189
    %p191 = scmp.ne.s32.totalorder %s180, %s181
    %p192 = scmp.eq.s32.totalorder %s20, 0
    %p193 = por %p191, %p192
    %p194 = scmp.ne.s32.totalorder %s180, %s181
    %p195 = scmp.eq.s32.totalorder %s21, 1
    %p196 = por %p194, %p195
    %p198 = scmp.ne.s32.totalorder %s181, %s197
    %p199 = scmp.eq.s32.totalorder %s21, 0
    %p200 = por %p198, %p199
    %s201 = ssub.s32 %s15, %s22
    %p202 = scmp.eq.s32.totalorder %s201, 0
    %s204 = sadd.s32 %s203, 1
    %s205 = scalar_select %p202, %s203, %s204
    %p208 = pneg %p202
    %p209 = scmp.eq.s32.totalorder %s15, 1
    %p210 = por %p208, %p209
    %p211 = scmp.ne.s32.totalorder %s203, %s206
    %p212 = scmp.eq.s32.totalorder %s15, 0
    %p213 = por %p211, %p212
    %p214 = scmp.ne.s32.totalorder %s203, %s206
    %p215 = scmp.eq.s32.totalorder %s20, 1
    %p216 = por %p214, %p215
    %p217 = scmp.ne.s32.totalorder %s206, %s207
    %p218 = scmp.eq.s32.totalorder %s20, 0
    %p219 = por %p217, %p218
    %p220 = scmp.ne.s32.totalorder %s206, %s207
    %p221 = scmp.eq.s32.totalorder %s21, 1
    %p222 = por %p220, %p221
    %p224 = scmp.ne.s32.totalorder %s207, %s223
    %p225 = scmp.eq.s32.totalorder %s21, 0
    %p226 = por %p224, %p225
    %p227 = scmp.le.s32.totalorder 1, %s15
    %p228 = scmp.lt.s32.totalorder %s15, 3
    %p229 = pnand %p227, %p228
    %p230 = pneg %p229
    // Predicated region
    $region9: #{_lambda_.3} parent=5 // pred_check
      _
    $region10: #{_lambda_.3} parent=5 // pred_check_branch
      %232 = sbr.rel (%p229) target = $region12
    $region11: #{_lambda_.3} parent=5 // pred_region
      %s233 = ssub.s32 %s15, 1
      // Predicated region
      $region13: #{_lambda_.3} parent=11 // pred_check
        %p234 = pneg %p62
      $region14: #{_lambda_.3} parent=11 // pred_check_branch
        %236 = sbr.rel (%p234) target = $region16
      $region15: #{_lambda_.3} parent=11 // pred_region
        _
      $region16: #{_lambda_.3} parent=11 // pred_fallthru
        _
      // Predicated region
      $region17: #{_lambda_.3} parent=11 // pred_check
        %p237 = pneg %p83
      $region18: #{_lambda_.3} parent=11 // pred_check_branch
        %239 = sbr.rel (%p237) target = $region20
      $region19: #{_lambda_.3} parent=11 // pred_region
        _
      $region20: #{_lambda_.3} parent=11 // pred_fallthru
        _
      // Predicated region
      $region21: #{_lambda_.3} parent=11 // pred_check
        %p240 = pneg %p104
      $region22: #{_lambda_.3} parent=11 // pred_check_branch
        %242 = sbr.rel (%p240) target = $region24
      $region23: #{_lambda_.3} parent=11 // pred_region
        _
      $region24: #{_lambda_.3} parent=11 // pred_fallthru
        _
      // Predicated region
      $region25: #{_lambda_.3} parent=11 // pred_check
        %p243 = pneg %p125
      $region26: #{_lambda_.3} parent=11 // pred_check_branch
        %245 = sbr.rel (%p243) target = $region28
      $region27: #{_lambda_.3} parent=11 // pred_region
        _
      $region28: #{_lambda_.3} parent=11 // pred_fallthru
        _
      // Predicated region
      $region29: #{_lambda_.3} parent=11 // pred_check
        %p246 = pneg %p146
      $region30: #{_lambda_.3} parent=11 // pred_check_branch
        %248 = sbr.rel (%p246) target = $region32
      $region31: #{_lambda_.3} parent=11 // pred_region
        _
      $region32: #{_lambda_.3} parent=11 // pred_fallthru
        _
      // Predicated region
      $region33: #{_lambda_.3} parent=11 // pred_check
        %p249 = pneg %p167
      $region34: #{_lambda_.3} parent=11 // pred_check_branch
        %251 = sbr.rel (%p249) target = $region36
      $region35: #{_lambda_.3} parent=11 // pred_region
        _
      $region36: #{_lambda_.3} parent=11 // pred_fallthru
        _
    $region12: #{_lambda_.3} parent=5 // pred_fallthru
      _
    %p252 = scmp.lt.s32.totalorder %s15, 2
    // Predicated region
    $region37: #{_lambda_.3} parent=5 // pred_check
      %p253 = pneg %p252
    $region38: #{_lambda_.3} parent=5 // pred_check_branch
      %255 = sbr.rel (%p253) target = $region40
    $region39: #{_lambda_.3} parent=5 // pred_region
      // Predicated region
      $region41: #{_lambda_.3} parent=39 // pred_check
        %p256 = pneg %p35
      $region42: #{_lambda_.3} parent=39 // pred_check_branch
        %258 = sbr.rel (%p256) target = $region44
      $region43: #{_lambda_.3} parent=39 // pred_region
        %p259 = scmp.lt.s32.totalorder %s15, 1
        %s260 = scalar_select %p259, %s15, 1
        %s261 = smul.addr %s260, 8
        %s262 = smul.addr %s261, 4
        %s263 = scalar_lea.vmem %s0, %s262
      $region44: #{_lambda_.3} parent=39 // pred_fallthru
        _
    $region40: #{_lambda_.3} parent=5 // pred_fallthru
      _
    %p264 = scmp.le.s32.totalorder 1, %s15
    %p265 = scmp.lt.s32.totalorder %s15, 3
    %p266 = pnand %p264, %p265
    %p267 = pneg %p266
    // Predicated region
    $region45: #{_lambda_.3} parent=5 // pred_check
      _
    $region46: #{_lambda_.3} parent=5 // pred_check_branch
      %269 = sbr.rel (%p266) target = $region48
    $region47: #{_lambda_.3} parent=5 // pred_region
      %s270 = ssub.s32 %s15, 1
      %p271 = scmp.lt.s32.totalorder %s20, 1
      %s272 = scalar_select %p271, %s20, 1
      %s273 = smul.addr %s272, 8
      %s274 = smul.addr %s273, 4
      %s275 = scalar_lea.vmem %s0, %s274
      %p276 = pneg %p41
      %p277 = pneg %p38
      %p278 = pneg %p62
      %p279 = pneg %p59
      %p280 = pneg %p83
      %p281 = pneg %p80
      %p282 = pneg %p104
      %p283 = pneg %p101
      %p284 = pneg %p125
      %p285 = pneg %p122
      %p286 = pneg %p146
      %p287 = pneg %p143
      %p288 = pneg %p167
      %p289 = pneg %p164
      %p290 = pneg %p193
      %p291 = pneg %p190
      %p292 = scmp.lt.s32.totalorder %s20, 1
      %s293 = scalar_select %p292, %s20, 1
      %s294 = smul.addr %s293, 8
      %s295 = smul.addr %s294, 4
      %s296 = scalar_lea.vmem %s7, %s295
      %p297 = pneg %p219
      %p298 = pneg %p216
      %p299 = scmp.lt.s32.totalorder %s20, 1
      %s300 = scalar_select %p299, %s20, 1
      %s301 = scalar_lea.vmem %s8, %s300
      %p302 = scmp.lt.s32.totalorder %s20, 1
      %s303 = scalar_select %p302, %s20, 1
      %s304 = smul.addr %s303, 8
      %s305 = smul.addr %s304, 4
      %s306 = scalar_lea.vmem %s0, %s305
      %p307 = scmp.lt.s32.totalorder %s20, 1
      %s308 = scalar_select %p307, %s20, 1
      %s309 = smul.addr %s308, 8
      %s310 = smul.addr %s309, 4
      %s311 = scalar_lea.vmem %s7, %s310
      %p312 = scmp.lt.s32.totalorder %s20, 1
      %s313 = scalar_select %p312, %s20, 1
      %s314 = scalar_lea.vmem %s8, %s313
      %v316 = vld [vmem:[%s306] sm:$0xf]
      %v317 = vld [vmem:[%s306 + $0x4] sm:$0xf]
      %v318 = vld [vmem:[%s306 + $0x8] sm:$0xf]
      %v319 = vld [vmem:[%s306 + $0xc] sm:$0xf]
      %v320 = vld [vmem:[%s306 + $0x10] sm:$0xf]
      %v321 = vld [vmem:[%s306 + $0x14] sm:$0xf]
      %v322 = vld [vmem:[%s306 + $0x18] sm:$0xf]
      %v323 = vld [vmem:[%s306 + $0x1c] sm:$0xf]
      %v324 = vld [vmem:[%s1] sm:$0xf]
      %v325 = vld [vmem:[%s1 + $0x4] sm:$0xf]
      %v326 = vld [vmem:[%s1 + $0x8] sm:$0xf]
      %v327 = vld [vmem:[%s1 + $0xc] sm:$0xf]
      %v328 = vld [vmem:[%s1 + $0x10] sm:$0xf]
      %v329 = vld [vmem:[%s1 + $0x14] sm:$0xf]
      %v330 = vld [vmem:[%s1 + $0x18] sm:$0xf]
      %v331 = vld [vmem:[%s1 + $0x1c] sm:$0xf]
      %v340 = vunpack.c.l.b16 %v316
      %v341 = vunpack.c.l.b16 %v317
      %v342 = vunpack.c.l.b16 %v318
      %v343 = vunpack.c.l.b16 %v319
      %v344 = vunpack.c.l.b16 %v320
      %v345 = vunpack.c.l.b16 %v321
      %v346 = vunpack.c.l.b16 %v322
      %v347 = vunpack.c.l.b16 %v323
      %v348 = vpack.c.b16 %v341, %v340
      %v349 = vpack.c.b16 %v343, %v342
      %v350 = vpack.c.b16 %v345, %v344
      %v351 = vpack.c.b16 %v347, %v346
      %v360 = vunpack.c.l.b16 %v324
      %v361 = vunpack.c.l.b16 %v325
      %v362 = vunpack.c.l.b16 %v326
      %v363 = vunpack.c.l.b16 %v327
      %v364 = vunpack.c.l.b16 %v328
      %v365 = vunpack.c.l.b16 %v329
      %v366 = vunpack.c.l.b16 %v330
      %v367 = vunpack.c.l.b16 %v331
      %v368 = vpack.c.b16 %v361, %v360
      %v369 = vpack.c.b16 %v363, %v362
      %v370 = vpack.c.b16 %v365, %v364
      %v371 = vpack.c.b16 %v367, %v366
      %vm376 = vcmask 523264
      %v378 = vsel %vm376, %v348, 0
      %v381 = vsel %vm376, %v349, 0
      %v384 = vsel %vm376, %v350, 0
      %v387 = vsel %vm376, %v351, 0
      %389 = vmatprep.subr.bf16.mxu0 0
      %390 = vmatpush1.bf16.msra.mxu0 0
      %391 = vmatprep.subr.bf16.mxu0 0
      %392 = vmatpush1.bf16.msra.mxu0 0
      %393 = vmatprep.subr.bf16.mxu0 0
      %394 = vmatpush1.bf16.msra.mxu0 0
      %395 = vmatprep.subr.bf16.mxu0 0
      %396 = vmatpush1.bf16.msra.mxu0 0
      %397 = vmatprep.subr.bf16.mxu0 0
      %398 = vmatpush1.bf16.msra.mxu0 %v371
      %399 = vmatprep.subr.bf16.mxu0 0
      %400 = vmatpush1.bf16.msra.mxu0 %v370
      %401 = vmatprep.subr.bf16.mxu0 0
      %402 = vmatpush1.bf16.msra.mxu0 %v369
      %403 = vmatprep.subr.bf16.mxu0 0
      %404 = vmatpush1.bf16.msra.mxu0 %v368
      %405 = vmatprep.subr.bf16.mxu0 0
      %406 = vmatpush2.bf16.msra.mxu0 0
      %407 = vmatprep.subr.bf16.mxu0 0
      %408 = vmatpush2.bf16.msra.mxu0 0
      %409 = vmatprep.subr.bf16.mxu0 0
      %410 = vmatpush2.bf16.msra.mxu0 0
      %411 = vmatprep.subr.bf16.mxu0 0
      %412 = vmatpush2.bf16.msra.mxu0 0
      %413 = vmatprep.subr.bf16.mxu0 0
      %414 = vmatpush2.bf16.msra.mxu0 0
      %415 = vmatprep.subr.bf16.mxu0 0
      %416 = vmatpush2.bf16.msra.mxu0 0
      %417 = vmatprep.subr.bf16.mxu0 0
      %418 = vmatpush2.bf16.msra.mxu0 0
      %419 = vmatprep.subr.bf16.mxu0 0
      %420 = vmatpush2.bf16.msra.mxu0 0
      %421 = vmatprep.mubr.bf16.mxu0 0
      %422 = vmatmul.mubr.bf16.gmra.mxu0 %v378
      %v423 = vpop.f32.mrf.mxu0
      %v424 = vadd.f32 0.0, %v423
      %v425 = vpop.f32.mrf.mxu0
      %v426 = vpop.f32.mrf.mxu0
      %v427 = vadd.f32 0.0, %v426
      %v428 = vpop.f32.mrf.mxu0
      %429 = vmatprep.mubr.bf16.mxu0 0
      %430 = vmatmul.mubr.bf16.gmra.mxu0 %v381
      %v431 = vpop.f32.mrf.mxu0
      %v432 = vadd.f32 0.0, %v431
      %v433 = vpop.f32.mrf.mxu0
      %v434 = vpop.f32.mrf.mxu0
      %v435 = vadd.f32 0.0, %v434
      %v436 = vpop.f32.mrf.mxu0
      %437 = vmatprep.mubr.bf16.mxu0 0
      %438 = vmatmul.mubr.bf16.gmra.mxu0 %v384
      %v439 = vpop.f32.mrf.mxu0
      %v440 = vadd.f32 0.0, %v439
      %v441 = vpop.f32.mrf.mxu0
      %v442 = vpop.f32.mrf.mxu0
      %v443 = vadd.f32 0.0, %v442
      %v444 = vpop.f32.mrf.mxu0
      %445 = vmatprep.mubr.bf16.mxu0 0
      %446 = vmatmul.mubr.bf16.gmra.mxu0 %v387
      %v447 = vpop.f32.mrf.mxu0
      %v448 = vadd.f32 0.0, %v447
      %v449 = vpop.f32.mrf.mxu0
      %v450 = vpop.f32.mrf.mxu0
      %v451 = vadd.f32 0.0, %v450
      %v452 = vpop.f32.mrf.mxu0
      %453 = vdwg.mxu0
      %v454 = vld [vmem:[%s2] sm:$0x1]
      %v456 = vlaneseq
      %v457 = vshrl.u32 %v456, 7
      %v458 = vsub.s32 0, %v457
      %v459 = vrot.slane %v454, %v458
      %v461 = vmul.f32 %v424, %v459
      %v462 = vmul.f32 %v427, %v459
      %v463 = vmul.f32 %v432, %v459
      %v464 = vmul.f32 %v435, %v459
      %v465 = vmul.f32 %v440, %v459
      %v466 = vmul.f32 %v443, %v459
      %v467 = vmul.f32 %v448, %v459
      %v468 = vmul.f32 %v451, %v459
      %v469 = vld [vmem:[%s3] sm:$0x1]
      %v471 = vlaneseq
      %v472 = vshrl.u32 %v471, 7
      %v473 = vsub.s32 0, %v472
      %v474 = vrot.slane %v469, %v473
      %v476 = vadd.f32 %v461, %v474
      %v477 = vadd.f32 %v462, %v474
      %v478 = vadd.f32 %v463, %v474
      %v479 = vadd.f32 %v464, %v474
      %v480 = vadd.f32 %v465, %v474
      %v481 = vadd.f32 %v466, %v474
      %v482 = vadd.f32 %v467, %v474
      %v483 = vadd.f32 %v468, %v474
      %v484 = vmax.f32 %v476, 0.0
      %v485 = vmax.f32 %v477, 0.0
      %v486 = vmax.f32 %v478, 0.0
      %v487 = vmax.f32 %v479, 0.0
      %v488 = vmax.f32 %v480, 0.0
      %v489 = vmax.f32 %v481, 0.0
      %v490 = vmax.f32 %v482, 0.0
      %v491 = vmax.f32 %v483, 0.0
      %v492 = vpack.c.bf16 %v485, %v484
      %v493 = vpack.c.bf16 %v487, %v486
      %v494 = vpack.c.bf16 %v489, %v488
      %v495 = vpack.c.bf16 %v491, %v490
      %vm496 = vcmask 125952
      %497 = vst.msk [vmem:[#allocation2] sm:$0xf] %vm496, 0
      %vm498 = vcmask 123904
      %499 = vst.msk [vmem:[#allocation2 + $0x4] sm:$0x3] %vm498, 0
      %500 = vst.msk [vmem:[#allocation2 + $0x8] sm:$0xf] %vm496, 0
      %501 = vst.msk [vmem:[#allocation2 + $0xc] sm:$0x3] %vm498, 0
      %s502 = scalar_lea.vmem [#allocation2], 80
      %503 = vst.msk [vmem:[%s502] sm:$0xf] %vm496, 0
      %504 = vst.msk [vmem:[%s502 + $0x4] sm:$0x3] %vm498, 0
      %505 = vst.msk [vmem:[%s502 + $0x8] sm:$0xf] %vm496, 0
      %506 = vst.msk [vmem:[%s502 + $0xc] sm:$0x3] %vm498, 0
      %s507 = scalar_lea.vmem [#allocation2], 16
      %vm508 = vcmask 122880
      %509 = vst.msk [vmem:[%s507] sm:$0x1] %vm508, 0
      %510 = vst.msk [vmem:[%s507 + $0x8] sm:$0x1] %vm508, 0
      %511 = vst.msk [vmem:[%s507 + $0x10] sm:$0x1] %vm508, 0
      %512 = vst.msk [vmem:[%s507 + $0x18] sm:$0x1] %vm508, 0
      %513 = vst.msk [vmem:[%s507 + $0x20] sm:$0x1] %vm508, 0
      %514 = vst.msk [vmem:[%s507 + $0x28] sm:$0x1] %vm508, 0
      %515 = vst.msk [vmem:[%s507 + $0x30] sm:$0x1] %vm508, 0
      %516 = vst.msk [vmem:[%s507 + $0x38] sm:$0x1] %vm508, 0
      %vm517 = vcmask 123905
      %518 = vst.msk [vmem:[%s507 + $0x4] sm:$0x2] %vm517, 0
      %519 = vst.msk [vmem:[%s507 + $0xc] sm:$0x2] %vm517, 0
      %520 = vst.msk [vmem:[%s507 + $0x14] sm:$0x2] %vm517, 0
      %521 = vst.msk [vmem:[%s507 + $0x1c] sm:$0x2] %vm517, 0
      %522 = vst.msk [vmem:[%s507 + $0x24] sm:$0x2] %vm517, 0
      %523 = vst.msk [vmem:[%s507 + $0x2c] sm:$0x2] %vm517, 0
      %524 = vst.msk [vmem:[%s507 + $0x34] sm:$0x2] %vm517, 0
      %525 = vst.msk [vmem:[%s507 + $0x3c] sm:$0x2] %vm517, 0
      %v530 = vunpack.c.l.b16 %v492
      %v531 = vunpack.c.h.b16 %v492
      %v532 = vunpack.c.l.b16 %v493
      %v533 = vunpack.c.h.b16 %v493
      %v534 = vunpack.c.l.b16 %v494
      %v535 = vunpack.c.h.b16 %v494
      %v536 = vunpack.c.l.b16 %v495
      %v537 = vunpack.c.h.b16 %v495
      %v538 = vpack.c.b16 %v530, %v530
      %v539 = vpack.c.b16 %v531, %v531
      %v540 = vpack.c.b16 %v532, %v532
      %v541 = vpack.c.b16 %v533, %v533
      %v542 = vpack.c.b16 %v534, %v534
      %v543 = vpack.c.b16 %v535, %v535
      %v544 = vpack.c.b16 %v536, %v536
      %v545 = vpack.c.b16 %v537, %v537
      %v546 = vrot.slane %v538, 7
      %v547 = vrot.slane %v546, 4
      %v548 = vrot.slane %v539, 7
      %v549 = vrot.slane %v548, 4
      %v550 = vrot.slane %v540, 7
      %v551 = vrot.slane %v550, 4
      %v552 = vrot.slane %v541, 7
      %v553 = vrot.slane %v552, 4
      %v554 = vrot.slane %v542, 7
      %v555 = vrot.slane %v554, 4
      %v556 = vrot.slane %v543, 7
      %v557 = vrot.slane %v556, 4
      %v558 = vrot.slane %v544, 7
      %v559 = vrot.slane %v558, 4
      %v560 = vrot.slane %v545, 7
      %v561 = vrot.slane %v560, 4
      %vm578 = vcmask 125953
      %579 = vst.msk [vmem:[%s507] sm:$0xe] %vm578, %v546
      %580 = vst.msk [vmem:[%s507 + $0x4] sm:$0x1] %vm508, %v547
      %581 = vst.msk [vmem:[%s507 + $0x8] sm:$0xe] %vm578, %v548
      %582 = vst.msk [vmem:[%s507 + $0xc] sm:$0x1] %vm508, %v549
      %583 = vst.msk [vmem:[%s507 + $0x10] sm:$0xe] %vm578, %v550
      %584 = vst.msk [vmem:[%s507 + $0x14] sm:$0x1] %vm508, %v551
      %585 = vst.msk [vmem:[%s507 + $0x18] sm:$0xe] %vm578, %v552
      %586 = vst.msk [vmem:[%s507 + $0x1c] sm:$0x1] %vm508, %v553
      %587 = vst.msk [vmem:[%s507 + $0x20] sm:$0xe] %vm578, %v554
      %588 = vst.msk [vmem:[%s507 + $0x24] sm:$0x1] %vm508, %v555
      %589 = vst.msk [vmem:[%s507 + $0x28] sm:$0xe] %vm578, %v556
      %590 = vst.msk [vmem:[%s507 + $0x2c] sm:$0x1] %vm508, %v557
      %591 = vst.msk [vmem:[%s507 + $0x30] sm:$0xe] %vm578, %v558
      %592 = vst.msk [vmem:[%s507 + $0x34] sm:$0x1] %vm508, %v559
      %593 = vst.msk [vmem:[%s507 + $0x38] sm:$0xe] %vm578, %v560
      %594 = vst.msk [vmem:[%s507 + $0x3c] sm:$0x1] %vm508, %v561
      %s595 = scalar_lea.vmem [#allocation2], 8
      %v596 = vld [vmem:[%s595] sm:$0xf]
      %v597 = vld [vmem:[%s595 + $0x4] sm:$0x1]
      %v598 = vld [vmem:[%s595 + $0x8] sm:$0xf]
      %v599 = vld [vmem:[%s595 + $0xc] sm:$0x1]
      %v600 = vld [vmem:[%s595 + $0x10] sm:$0xf]
      %v601 = vld [vmem:[%s595 + $0x14] sm:$0x1]
      %v602 = vld [vmem:[%s595 + $0x18] sm:$0xf]
      %v603 = vld [vmem:[%s595 + $0x1c] sm:$0x1]
      %v604 = vld [vmem:[%s595 + $0x20] sm:$0xf]
      %v605 = vld [vmem:[%s595 + $0x24] sm:$0x1]
      %v606 = vld [vmem:[%s595 + $0x28] sm:$0xf]
      %v607 = vld [vmem:[%s595 + $0x2c] sm:$0x1]
      %v608 = vld [vmem:[%s595 + $0x30] sm:$0xf]
      %v609 = vld [vmem:[%s595 + $0x34] sm:$0x1]
      %v610 = vld [vmem:[%s595 + $0x38] sm:$0xf]
      %v611 = vld [vmem:[%s595 + $0x3c] sm:$0x1]
      %vm612 = vsmask.f32 3328
      %vm613 = vsmask.f32 7440
      %vm614 = vmor %vm612, %vm613
      %v616 = vshrl.u32 %v596, 16
      %v618 = vrot.slane %v616, 4
      %v619 = vshll.u32 %v596, 16
      %v621 = vrot.slane %v619, 5
      %v622 = vor.u32 %v618, %v621
      %v623 = vrot.slane %v622, 4
      %v625 = vshll.u32 %v597, 16
      %v627 = vrot.slane %v625, 5
      %v628 = vsel %vm614, %v623, %v627
      %v630 = vshrl.u32 %v598, 16
      %v632 = vrot.slane %v630, 4
      %v633 = vshll.u32 %v598, 16
      %v635 = vrot.slane %v633, 5
      %v636 = vor.u32 %v632, %v635
      %v637 = vrot.slane %v636, 4
      %v639 = vshll.u32 %v599, 16
      %v641 = vrot.slane %v639, 5
      %v642 = vsel %vm614, %v637, %v641
      %v644 = vshrl.u32 %v600, 16
      %v646 = vrot.slane %v644, 4
      %v647 = vshll.u32 %v600, 16
      %v649 = vrot.slane %v647, 5
      %v650 = vor.u32 %v646, %v649
      %v651 = vrot.slane %v650, 4
      %v653 = vshll.u32 %v601, 16
      %v655 = vrot.slane %v653, 5
      %v656 = vsel %vm614, %v651, %v655
      %v658 = vshrl.u32 %v602, 16
      %v660 = vrot.slane %v658, 4
      %v661 = vshll.u32 %v602, 16
      %v663 = vrot.slane %v661, 5
      %v664 = vor.u32 %v660, %v663
      %v665 = vrot.slane %v664, 4
      %v667 = vshll.u32 %v603, 16
      %v669 = vrot.slane %v667, 5
      %v670 = vsel %vm614, %v665, %v669
      %v672 = vshrl.u32 %v604, 16
      %v674 = vrot.slane %v672, 4
      %v675 = vshll.u32 %v604, 16
      %v677 = vrot.slane %v675, 5
      %v678 = vor.u32 %v674, %v677
      %v679 = vrot.slane %v678, 4
      %v681 = vshll.u32 %v605, 16
      %v683 = vrot.slane %v681, 5
      %v684 = vsel %vm614, %v679, %v683
      %v686 = vshrl.u32 %v606, 16
      %v688 = vrot.slane %v686, 4
      %v689 = vshll.u32 %v606, 16
      %v691 = vrot.slane %v689, 5
      %v692 = vor.u32 %v688, %v691
      %v693 = vrot.slane %v692, 4
      %v695 = vshll.u32 %v607, 16
      %v697 = vrot.slane %v695, 5
      %v698 = vsel %vm614, %v693, %v697
      %v700 = vshrl.u32 %v608, 16
      %v702 = vrot.slane %v700, 4
      %v703 = vshll.u32 %v608, 16
      %v705 = vrot.slane %v703, 5
      %v706 = vor.u32 %v702, %v705
      %v707 = vrot.slane %v706, 4
      %v709 = vshll.u32 %v609, 16
      %v711 = vrot.slane %v709, 5
      %v712 = vsel %vm614, %v707, %v711
      %v714 = vshrl.u32 %v610, 16
      %v716 = vrot.slane %v714, 4
      %v717 = vshll.u32 %v610, 16
      %v719 = vrot.slane %v717, 5
      %v720 = vor.u32 %v716, %v719
      %v721 = vrot.slane %v720, 4
      %v723 = vshll.u32 %v611, 16
      %v725 = vrot.slane %v723, 5
      %v726 = vsel %vm614, %v721, %v725
      %vm735 = vcmask 60416
      %736 = vst.msk [vmem:[#allocation3] sm:$0xf] %vm735, %v628
      %737 = vst.msk [vmem:[#allocation3 + $0x4] sm:$0xf] %vm735, %v642
      %738 = vst.msk [vmem:[#allocation3 + $0x8] sm:$0xf] %vm735, %v656
      %739 = vst.msk [vmem:[#allocation3 + $0xc] sm:$0xf] %vm735, %v670
      %740 = vst.msk [vmem:[#allocation3 + $0x10] sm:$0xf] %vm735, %v684
      %741 = vst.msk [vmem:[#allocation3 + $0x14] sm:$0xf] %vm735, %v698
      %742 = vst.msk [vmem:[#allocation3 + $0x18] sm:$0xf] %vm735, %v712
      %743 = vst.msk [vmem:[#allocation3 + $0x1c] sm:$0xf] %vm735, %v726
      %v744 = vld [vmem:[%s595] sm:$0xe]
      %v745 = vld [vmem:[%s595 + $0x4] sm:$0x1]
      %v746 = vld [vmem:[%s595 + $0x8] sm:$0xe]
      %v747 = vld [vmem:[%s595 + $0xc] sm:$0x1]
      %v748 = vld [vmem:[%s595 + $0x10] sm:$0xe]
      %v749 = vld [vmem:[%s595 + $0x14] sm:$0x1]
      %v750 = vld [vmem:[%s595 + $0x18] sm:$0xe]
      %v751 = vld [vmem:[%s595 + $0x1c] sm:$0x1]
      %v752 = vld [vmem:[%s595 + $0x20] sm:$0xe]
      %v753 = vld [vmem:[%s595 + $0x24] sm:$0x1]
      %v754 = vld [vmem:[%s595 + $0x28] sm:$0xe]
      %v755 = vld [vmem:[%s595 + $0x2c] sm:$0x1]
      %v756 = vld [vmem:[%s595 + $0x30] sm:$0xe]
      %v757 = vld [vmem:[%s595 + $0x34] sm:$0x1]
      %v758 = vld [vmem:[%s595 + $0x38] sm:$0xe]
      %v759 = vld [vmem:[%s595 + $0x3c] sm:$0x1]
      %vm776 = vcmask 1042432
      %vm777 = vcmask 1046532
      %vm778 = vmor %vm776, %vm777
      %v779 = vrot.slane %v744, 5
      %v780 = vrot.slane %v779, 4
      %v781 = vrot.slane %v745, 5
      %v782 = vsel %vm778, %v780, %v781
      %v783 = vrot.slane %v746, 5
      %v784 = vrot.slane %v783, 4
      %v785 = vrot.slane %v747, 5
      %v786 = vsel %vm778, %v784, %v785
      %v787 = vrot.slane %v748, 5
      %v788 = vrot.slane %v787, 4
      %v789 = vrot.slane %v749, 5
      %v790 = vsel %vm778, %v788, %v789
      %v791 = vrot.slane %v750, 5
      %v792 = vrot.slane %v791, 4
      %v793 = vrot.slane %v751, 5
      %v794 = vsel %vm778, %v792, %v793
      %v795 = vrot.slane %v752, 5
      %v796 = vrot.slane %v795, 4
      %v797 = vrot.slane %v753, 5
      %v798 = vsel %vm778, %v796, %v797
      %v799 = vrot.slane %v754, 5
      %v800 = vrot.slane %v799, 4
      %v801 = vrot.slane %v755, 5
      %v802 = vsel %vm778, %v800, %v801
      %v803 = vrot.slane %v756, 5
      %v804 = vrot.slane %v803, 4
      %v805 = vrot.slane %v757, 5
      %v806 = vsel %vm778, %v804, %v805
      %v807 = vrot.slane %v758, 5
      %v808 = vrot.slane %v807, 4
      %v809 = vrot.slane %v759, 5
      %v810 = vsel %vm778, %v808, %v809
      %811 = vrot.lane.b32.xlu0 %v782, 8
      %v812 = vpop.permute.xlu0 %811
      %813 = vrot.lane.b32.xlu0 %v786, 8
      %v814 = vpop.permute.xlu0 %813
      %815 = vrot.lane.b32.xlu0 %v790, 8
      %v816 = vpop.permute.xlu0 %815
      %817 = vrot.lane.b32.xlu0 %v794, 8
      %v818 = vpop.permute.xlu0 %817
      %819 = vrot.lane.b32.xlu0 %v798, 8
      %v820 = vpop.permute.xlu0 %819
      %821 = vrot.lane.b32.xlu0 %v802, 8
      %v822 = vpop.permute.xlu0 %821
      %823 = vrot.lane.b32.xlu0 %v806, 8
      %v824 = vpop.permute.xlu0 %823
      %825 = vrot.lane.b32.xlu0 %v810, 8
      %v826 = vpop.permute.xlu0 %825
      %vm835 = vcmask 126016
      %836 = vst.msk [vmem:[#allocation3] sm:$0xf] %vm835, %v812
      %837 = vst.msk [vmem:[#allocation3 + $0x4] sm:$0xf] %vm835, %v814
      %838 = vst.msk [vmem:[#allocation3 + $0x8] sm:$0xf] %vm835, %v816
      %839 = vst.msk [vmem:[#allocation3 + $0xc] sm:$0xf] %vm835, %v818
      %840 = vst.msk [vmem:[#allocation3 + $0x10] sm:$0xf] %vm835, %v820
      %841 = vst.msk [vmem:[#allocation3 + $0x14] sm:$0xf] %vm835, %v822
      %842 = vst.msk [vmem:[#allocation3 + $0x18] sm:$0xf] %vm835, %v824
      %843 = vst.msk [vmem:[#allocation3 + $0x1c] sm:$0xf] %vm835, %v826
      %v844 = vld [vmem:[%s595] sm:$0xe]
      %v845 = vld [vmem:[%s595 + $0x4] sm:$0x3]
      %v846 = vld [vmem:[%s595 + $0x8] sm:$0xe]
      %v847 = vld [vmem:[%s595 + $0xc] sm:$0x3]
      %v848 = vld [vmem:[%s595 + $0x10] sm:$0xe]
      %v849 = vld [vmem:[%s595 + $0x14] sm:$0x3]
      %v850 = vld [vmem:[%s595 + $0x18] sm:$0xe]
      %v851 = vld [vmem:[%s595 + $0x1c] sm:$0x3]
      %v852 = vld [vmem:[%s595 + $0x20] sm:$0xe]
      %v853 = vld [vmem:[%s595 + $0x24] sm:$0x3]
      %v854 = vld [vmem:[%s595 + $0x28] sm:$0xe]
      %v855 = vld [vmem:[%s595 + $0x2c] sm:$0x3]
      %v856 = vld [vmem:[%s595 + $0x30] sm:$0xe]
      %v857 = vld [vmem:[%s595 + $0x34] sm:$0x3]
      %v858 = vld [vmem:[%s595 + $0x38] sm:$0xe]
      %v859 = vld [vmem:[%s595 + $0x3c] sm:$0x3]
      %vm860 = vsmask.f32 2304
      %vm861 = vsmask.f32 6416
      %vm862 = vmor %vm860, %vm861
      %v864 = vshrl.u32 %v844, 16
      %v866 = vrot.slane %v864, 5
      %v867 = vshll.u32 %v844, 16
      %v869 = vrot.slane %v867, 6
      %v870 = vor.u32 %v866, %v869
      %v871 = vrot.slane %v870, 4
      %v873 = vshrl.u32 %v845, 16
      %v875 = vrot.slane %v873, 5
      %v876 = vshll.u32 %v845, 16
      %v878 = vrot.slane %v876, 6
      %v879 = vor.u32 %v875, %v878
      %v880 = vsel %vm862, %v871, %v879
      %v882 = vshrl.u32 %v846, 16
      %v884 = vrot.slane %v882, 5
      %v885 = vshll.u32 %v846, 16
      %v887 = vrot.slane %v885, 6
      %v888 = vor.u32 %v884, %v887
      %v889 = vrot.slane %v888, 4
      %v891 = vshrl.u32 %v847, 16
      %v893 = vrot.slane %v891, 5
      %v894 = vshll.u32 %v847, 16
      %v896 = vrot.slane %v894, 6
      %v897 = vor.u32 %v893, %v896
      %v898 = vsel %vm862, %v889, %v897
      %v900 = vshrl.u32 %v848, 16
      %v902 = vrot.slane %v900, 5
      %v903 = vshll.u32 %v848, 16
      %v905 = vrot.slane %v903, 6
      %v906 = vor.u32 %v902, %v905
      %v907 = vrot.slane %v906, 4
      %v909 = vshrl.u32 %v849, 16
      %v911 = vrot.slane %v909, 5
      %v912 = vshll.u32 %v849, 16
      %v914 = vrot.slane %v912, 6
      %v915 = vor.u32 %v911, %v914
      %v916 = vsel %vm862, %v907, %v915
      %v918 = vshrl.u32 %v850, 16
      %v920 = vrot.slane %v918, 5
      %v921 = vshll.u32 %v850, 16
      %v923 = vrot.slane %v921, 6
      %v924 = vor.u32 %v920, %v923
      %v925 = vrot.slane %v924, 4
      %v927 = vshrl.u32 %v851, 16
      %v929 = vrot.slane %v927, 5
      %v930 = vshll.u32 %v851, 16
      %v932 = vrot.slane %v930, 6
      %v933 = vor.u32 %v929, %v932
      %v934 = vsel %vm862, %v925, %v933
      %v936 = vshrl.u32 %v852, 16
      %v938 = vrot.slane %v936, 5
      %v939 = vshll.u32 %v852, 16
      %v941 = vrot.slane %v939, 6
      %v942 = vor.u32 %v938, %v941
      %v943 = vrot.slane %v942, 4
      %v945 = vshrl.u32 %v853, 16
      %v947 = vrot.slane %v945, 5
      %v948 = vshll.u32 %v853, 16
      %v950 = vrot.slane %v948, 6
      %v951 = vor.u32 %v947, %v950
      %v952 = vsel %vm862, %v943, %v951
      %v954 = vshrl.u32 %v854, 16
      %v956 = vrot.slane %v954, 5
      %v957 = vshll.u32 %v854, 16
      %v959 = vrot.slane %v957, 6
      %v960 = vor.u32 %v956, %v959
      %v961 = vrot.slane %v960, 4
      %v963 = vshrl.u32 %v855, 16
      %v965 = vrot.slane %v963, 5
      %v966 = vshll.u32 %v855, 16
      %v968 = vrot.slane %v966, 6
      %v969 = vor.u32 %v965, %v968
      %v970 = vsel %vm862, %v961, %v969
      %v972 = vshrl.u32 %v856, 16
      %v974 = vrot.slane %v972, 5
      %v975 = vshll.u32 %v856, 16
      %v977 = vrot.slane %v975, 6
      %v978 = vor.u32 %v974, %v977
      %v979 = vrot.slane %v978, 4
      %v981 = vshrl.u32 %v857, 16
      %v983 = vrot.slane %v981, 5
      %v984 = vshll.u32 %v857, 16
      %v986 = vrot.slane %v984, 6
      %v987 = vor.u32 %v983, %v986
      %v988 = vsel %vm862, %v979, %v987
      %v990 = vshrl.u32 %v858, 16
      %v992 = vrot.slane %v990, 5
      %v993 = vshll.u32 %v858, 16
      %v995 = vrot.slane %v993, 6
      %v996 = vor.u32 %v992, %v995
      %v997 = vrot.slane %v996, 4
      %v999 = vshrl.u32 %v859, 16
      %v1001 = vrot.slane %v999, 5
      %v1002 = vshll.u32 %v859, 16
      %v1004 = vrot.slane %v1002, 6
      %v1005 = vor.u32 %v1001, %v1004
      %v1006 = vsel %vm862, %v997, %v1005
      %1007 = vrot.lane.b32.xlu0 %v880, 16
      %v1008 = vpop.permute.xlu0 %1007
      %1009 = vrot.lane.b32.xlu0 %v898, 16
      %v1010 = vpop.permute.xlu0 %1009
      %1011 = vrot.lane.b32.xlu0 %v916, 16
      %v1012 = vpop.permute.xlu0 %1011
      %1013 = vrot.lane.b32.xlu0 %v934, 16
      %v1014 = vpop.permute.xlu0 %1013
      %1015 = vrot.lane.b32.xlu0 %v952, 16
      %v1016 = vpop.permute.xlu0 %1015
      %1017 = vrot.lane.b32.xlu0 %v970, 16
      %v1018 = vpop.permute.xlu0 %1017
      %1019 = vrot.lane.b32.xlu0 %v988, 16
      %v1020 = vpop.permute.xlu0 %1019
      %1021 = vrot.lane.b32.xlu0 %v1006, 16
      %v1022 = vpop.permute.xlu0 %1021
      %vm1031 = vcmask 191616
      %1032 = vst.msk [vmem:[#allocation3] sm:$0xf] %vm1031, %v1008
      %1033 = vst.msk [vmem:[#allocation3 + $0x4] sm:$0xf] %vm1031, %v1010
      %1034 = vst.msk [vmem:[#allocation3 + $0x8] sm:$0xf] %vm1031, %v1012
      %1035 = vst.msk [vmem:[#allocation3 + $0xc] sm:$0xf] %vm1031, %v1014
      %1036 = vst.msk [vmem:[#allocation3 + $0x10] sm:$0xf] %vm1031, %v1016
      %1037 = vst.msk [vmem:[#allocation3 + $0x14] sm:$0xf] %vm1031, %v1018
      %1038 = vst.msk [vmem:[#allocation3 + $0x18] sm:$0xf] %vm1031, %v1020
      %1039 = vst.msk [vmem:[#allocation3 + $0x1c] sm:$0xf] %vm1031, %v1022
      %v1040 = vld [vmem:[%s507] sm:$0xf]
      %v1041 = vld [vmem:[%s507 + $0x4] sm:$0x1]
      %v1042 = vld [vmem:[%s507 + $0x8] sm:$0xf]
      %v1043 = vld [vmem:[%s507 + $0xc] sm:$0x1]
      %v1044 = vld [vmem:[%s507 + $0x10] sm:$0xf]
      %v1045 = vld [vmem:[%s507 + $0x14] sm:$0x1]
      %v1046 = vld [vmem:[%s507 + $0x18] sm:$0xf]
      %v1047 = vld [vmem:[%s507 + $0x1c] sm:$0x1]
      %v1048 = vld [vmem:[%s507 + $0x20] sm:$0xf]
      %v1049 = vld [vmem:[%s507 + $0x24] sm:$0x1]
      %v1050 = vld [vmem:[%s507 + $0x28] sm:$0xf]
      %v1051 = vld [vmem:[%s507 + $0x2c] sm:$0x1]
      %v1052 = vld [vmem:[%s507 + $0x30] sm:$0xf]
      %v1053 = vld [vmem:[%s507 + $0x34] sm:$0x1]
      %v1054 = vld [vmem:[%s507 + $0x38] sm:$0xf]
      %v1055 = vld [vmem:[%s507 + $0x3c] sm:$0x1]
      %v1057 = vshrl.u32 %v1040, 16
      %v1059 = vrot.slane %v1057, 4
      %v1060 = vshll.u32 %v1040, 16
      %v1062 = vrot.slane %v1060, 5
      %v1063 = vor.u32 %v1059, %v1062
      %v1064 = vrot.slane %v1063, 4
      %v1066 = vshll.u32 %v1041, 16
      %v1068 = vrot.slane %v1066, 5
      %v1069 = vsel %vm614, %v1064, %v1068
      %v1071 = vshrl.u32 %v1042, 16
      %v1073 = vrot.slane %v1071, 4
      %v1074 = vshll.u32 %v1042, 16
      %v1076 = vrot.slane %v1074, 5
      %v1077 = vor.u32 %v1073, %v1076
      %v1078 = vrot.slane %v1077, 4
      %v1080 = vshll.u32 %v1043, 16
      %v1082 = vrot.slane %v1080, 5
      %v1083 = vsel %vm614, %v1078, %v1082
      %v1085 = vshrl.u32 %v1044, 16
      %v1087 = vrot.slane %v1085, 4
      %v1088 = vshll.u32 %v1044, 16
      %v1090 = vrot.slane %v1088, 5
      %v1091 = vor.u32 %v1087, %v1090
      %v1092 = vrot.slane %v1091, 4
      %v1094 = vshll.u32 %v1045, 16
      %v1096 = vrot.slane %v1094, 5
      %v1097 = vsel %vm614, %v1092, %v1096
      %v1099 = vshrl.u32 %v1046, 16
      %v1101 = vrot.slane %v1099, 4
      %v1102 = vshll.u32 %v1046, 16
      %v1104 = vrot.slane %v1102, 5
      %v1105 = vor.u32 %v1101, %v1104
      %v1106 = vrot.slane %v1105, 4
      %v1108 = vshll.u32 %v1047, 16
      %v1110 = vrot.slane %v1108, 5
      %v1111 = vsel %vm614, %v1106, %v1110
      %v1113 = vshrl.u32 %v1048, 16
      %v1115 = vrot.slane %v1113, 4
      %v1116 = vshll.u32 %v1048, 16
      %v1118 = vrot.slane %v1116, 5
      %v1119 = vor.u32 %v1115, %v1118
      %v1120 = vrot.slane %v1119, 4
      %v1122 = vshll.u32 %v1049, 16
      %v1124 = vrot.slane %v1122, 5
      %v1125 = vsel %vm614, %v1120, %v1124
      %v1127 = vshrl.u32 %v1050, 16
      %v1129 = vrot.slane %v1127, 4
      %v1130 = vshll.u32 %v1050, 16
      %v1132 = vrot.slane %v1130, 5
      %v1133 = vor.u32 %v1129, %v1132
      %v1134 = vrot.slane %v1133, 4
      %v1136 = vshll.u32 %v1051, 16
      %v1138 = vrot.slane %v1136, 5
      %v1139 = vsel %vm614, %v1134, %v1138
      %v1141 = vshrl.u32 %v1052, 16
      %v1143 = vrot.slane %v1141, 4
      %v1144 = vshll.u32 %v1052, 16
      %v1146 = vrot.slane %v1144, 5
      %v1147 = vor.u32 %v1143, %v1146
      %v1148 = vrot.slane %v1147, 4
      %v1150 = vshll.u32 %v1053, 16
      %v1152 = vrot.slane %v1150, 5
      %v1153 = vsel %vm614, %v1148, %v1152
      %v1155 = vshrl.u32 %v1054, 16
      %v1157 = vrot.slane %v1155, 4
      %v1158 = vshll.u32 %v1054, 16
      %v1160 = vrot.slane %v1158, 5
      %v1161 = vor.u32 %v1157, %v1160
      %v1162 = vrot.slane %v1161, 4
      %v1164 = vshll.u32 %v1055, 16
      %v1166 = vrot.slane %v1164, 5
      %v1167 = vsel %vm614, %v1162, %v1166
      %1168 = vrot.lane.b32.xlu0 %v1069, 24
      %v1169 = vpop.permute.xlu0 %1168
      %1170 = vrot.lane.b32.xlu0 %v1083, 24
      %v1171 = vpop.permute.xlu0 %1170
      %1172 = vrot.lane.b32.xlu0 %v1097, 24
      %v1173 = vpop.permute.xlu0 %1172
      %1174 = vrot.lane.b32.xlu0 %v1111, 24
      %v1175 = vpop.permute.xlu0 %1174
      %1176 = vrot.lane.b32.xlu0 %v1125, 24
      %v1177 = vpop.permute.xlu0 %1176
      %1178 = vrot.lane.b32.xlu0 %v1139, 24
      %v1179 = vpop.permute.xlu0 %1178
      %1180 = vrot.lane.b32.xlu0 %v1153, 24
      %v1181 = vpop.permute.xlu0 %1180
      %1182 = vrot.lane.b32.xlu0 %v1167, 24
      %v1183 = vpop.permute.xlu0 %1182
      %vm1192 = vcmask 257216
      %1193 = vst.msk [vmem:[#allocation3] sm:$0xf] %vm1192, %v1169
      %1194 = vst.msk [vmem:[#allocation3 + $0x4] sm:$0xf] %vm1192, %v1171
      %1195 = vst.msk [vmem:[#allocation3 + $0x8] sm:$0xf] %vm1192, %v1173
      %1196 = vst.msk [vmem:[#allocation3 + $0xc] sm:$0xf] %vm1192, %v1175
      %1197 = vst.msk [vmem:[#allocation3 + $0x10] sm:$0xf] %vm1192, %v1177
      %1198 = vst.msk [vmem:[#allocation3 + $0x14] sm:$0xf] %vm1192, %v1179
      %1199 = vst.msk [vmem:[#allocation3 + $0x18] sm:$0xf] %vm1192, %v1181
      %1200 = vst.msk [vmem:[#allocation3 + $0x1c] sm:$0xf] %vm1192, %v1183
      %v1201 = vld [vmem:[%s507] sm:$0xe]
      %v1202 = vld [vmem:[%s507 + $0x4] sm:$0x1]
      %v1203 = vld [vmem:[%s507 + $0x8] sm:$0xe]
      %v1204 = vld [vmem:[%s507 + $0xc] sm:$0x1]
      %v1205 = vld [vmem:[%s507 + $0x10] sm:$0xe]
      %v1206 = vld [vmem:[%s507 + $0x14] sm:$0x1]
      %v1207 = vld [vmem:[%s507 + $0x18] sm:$0xe]
      %v1208 = vld [vmem:[%s507 + $0x1c] sm:$0x1]
      %v1209 = vld [vmem:[%s507 + $0x20] sm:$0xe]
      %v1210 = vld [vmem:[%s507 + $0x24] sm:$0x1]
      %v1211 = vld [vmem:[%s507 + $0x28] sm:$0xe]
      %v1212 = vld [vmem:[%s507 + $0x2c] sm:$0x1]
      %v1213 = vld [vmem:[%s507 + $0x30] sm:$0xe]
      %v1214 = vld [vmem:[%s507 + $0x34] sm:$0x1]
      %v1215 = vld [vmem:[%s507 + $0x38] sm:$0xe]
      %v1216 = vld [vmem:[%s507 + $0x3c] sm:$0x1]
      %v1233 = vrot.slane %v1201, 5
      %v1234 = vrot.slane %v1233, 4
      %v1235 = vrot.slane %v1202, 5
      %v1236 = vsel %vm778, %v1234, %v1235
      %v1237 = vrot.slane %v1203, 5
      %v1238 = vrot.slane %v1237, 4
      %v1239 = vrot.slane %v1204, 5
      %v1240 = vsel %vm778, %v1238, %v1239
      %v1241 = vrot.slane %v1205, 5
      %v1242 = vrot.slane %v1241, 4
      %v1243 = vrot.slane %v1206, 5
      %v1244 = vsel %vm778, %v1242, %v1243
      %v1245 = vrot.slane %v1207, 5
      %v1246 = vrot.slane %v1245, 4
      %v1247 = vrot.slane %v1208, 5
      %v1248 = vsel %vm778, %v1246, %v1247
      %v1249 = vrot.slane %v1209, 5
      %v1250 = vrot.slane %v1249, 4
      %v1251 = vrot.slane %v1210, 5
      %v1252 = vsel %vm778, %v1250, %v1251
      %v1253 = vrot.slane %v1211, 5
      %v1254 = vrot.slane %v1253, 4
      %v1255 = vrot.slane %v1212, 5
      %v1256 = vsel %vm778, %v1254, %v1255
      %v1257 = vrot.slane %v1213, 5
      %v1258 = vrot.slane %v1257, 4
      %v1259 = vrot.slane %v1214, 5
      %v1260 = vsel %vm778, %v1258, %v1259
      %v1261 = vrot.slane %v1215, 5
      %v1262 = vrot.slane %v1261, 4
      %v1263 = vrot.slane %v1216, 5
      %v1264 = vsel %vm778, %v1262, %v1263
      %1265 = vrot.lane.b32.xlu0 %v1236, 32
      %v1266 = vpop.permute.xlu0 %1265
      %1267 = vrot.lane.b32.xlu0 %v1240, 32
      %v1268 = vpop.permute.xlu0 %1267
      %1269 = vrot.lane.b32.xlu0 %v1244, 32
      %v1270 = vpop.permute.xlu0 %1269
      %1271 = vrot.lane.b32.xlu0 %v1248, 32
      %v1272 = vpop.permute.xlu0 %1271
      %1273 = vrot.lane.b32.xlu0 %v1252, 32
      %v1274 = vpop.permute.xlu0 %1273
      %1275 = vrot.lane.b32.xlu0 %v1256, 32
      %v1276 = vpop.permute.xlu0 %1275
      %1277 = vrot.lane.b32.xlu0 %v1260, 32
      %v1278 = vpop.permute.xlu0 %1277
      %1279 = vrot.lane.b32.xlu0 %v1264, 32
      %v1280 = vpop.permute.xlu0 %1279
      %vm1289 = vcmask 322816
      %1290 = vst.msk [vmem:[#allocation3] sm:$0xf] %vm1289, %v1266
      %1291 = vst.msk [vmem:[#allocation3 + $0x4] sm:$0xf] %vm1289, %v1268
      %1292 = vst.msk [vmem:[#allocation3 + $0x8] sm:$0xf] %vm1289, %v1270
      %1293 = vst.msk [vmem:[#allocation3 + $0xc] sm:$0xf] %vm1289, %v1272
      %1294 = vst.msk [vmem:[#allocation3 + $0x10] sm:$0xf] %vm1289, %v1274
      %1295 = vst.msk [vmem:[#allocation3 + $0x14] sm:$0xf] %vm1289, %v1276
      %1296 = vst.msk [vmem:[#allocation3 + $0x18] sm:$0xf] %vm1289, %v1278
      %1297 = vst.msk [vmem:[#allocation3 + $0x1c] sm:$0xf] %vm1289, %v1280
      %v1298 = vld [vmem:[%s507] sm:$0xe]
      %v1299 = vld [vmem:[%s507 + $0x4] sm:$0x3]
      %v1300 = vld [vmem:[%s507 + $0x8] sm:$0xe]
      %v1301 = vld [vmem:[%s507 + $0xc] sm:$0x3]
      %v1302 = vld [vmem:[%s507 + $0x10] sm:$0xe]
      %v1303 = vld [vmem:[%s507 + $0x14] sm:$0x3]
      %v1304 = vld [vmem:[%s507 + $0x18] sm:$0xe]
      %v1305 = vld [vmem:[%s507 + $0x1c] sm:$0x3]
      %v1306 = vld [vmem:[%s507 + $0x20] sm:$0xe]
      %v1307 = vld [vmem:[%s507 + $0x24] sm:$0x3]
      %v1308 = vld [vmem:[%s507 + $0x28] sm:$0xe]
      %v1309 = vld [vmem:[%s507 + $0x2c] sm:$0x3]
      %v1310 = vld [vmem:[%s507 + $0x30] sm:$0xe]
      %v1311 = vld [vmem:[%s507 + $0x34] sm:$0x3]
      %v1312 = vld [vmem:[%s507 + $0x38] sm:$0xe]
      %v1313 = vld [vmem:[%s507 + $0x3c] sm:$0x3]
      %v1315 = vshrl.u32 %v1298, 16
      %v1317 = vrot.slane %v1315, 5
      %v1318 = vshll.u32 %v1298, 16
      %v1320 = vrot.slane %v1318, 6
      %v1321 = vor.u32 %v1317, %v1320
      %v1322 = vrot.slane %v1321, 4
      %v1324 = vshrl.u32 %v1299, 16
      %v1326 = vrot.slane %v1324, 5
      %v1327 = vshll.u32 %v1299, 16
      %v1329 = vrot.slane %v1327, 6
      %v1330 = vor.u32 %v1326, %v1329
      %v1331 = vsel %vm862, %v1322, %v1330
      %v1333 = vshrl.u32 %v1300, 16
      %v1335 = vrot.slane %v1333, 5
      %v1336 = vshll.u32 %v1300, 16
      %v1338 = vrot.slane %v1336, 6
      %v1339 = vor.u32 %v1335, %v1338
      %v1340 = vrot.slane %v1339, 4
      %v1342 = vshrl.u32 %v1301, 16
      %v1344 = vrot.slane %v1342, 5
      %v1345 = vshll.u32 %v1301, 16
      %v1347 = vrot.slane %v1345, 6
      %v1348 = vor.u32 %v1344, %v1347
      %v1349 = vsel %vm862, %v1340, %v1348
      %v1351 = vshrl.u32 %v1302, 16
      %v1353 = vrot.slane %v1351, 5
      %v1354 = vshll.u32 %v1302, 16
      %v1356 = vrot.slane %v1354, 6
      %v1357 = vor.u32 %v1353, %v1356
      %v1358 = vrot.slane %v1357, 4
      %v1360 = vshrl.u32 %v1303, 16
      %v1362 = vrot.slane %v1360, 5
      %v1363 = vshll.u32 %v1303, 16
      %v1365 = vrot.slane %v1363, 6
      %v1366 = vor.u32 %v1362, %v1365
      %v1367 = vsel %vm862, %v1358, %v1366
      %v1369 = vshrl.u32 %v1304, 16
      %v1371 = vrot.slane %v1369, 5
      %v1372 = vshll.u32 %v1304, 16
      %v1374 = vrot.slane %v1372, 6
      %v1375 = vor.u32 %v1371, %v1374
      %v1376 = vrot.slane %v1375, 4
      %v1378 = vshrl.u32 %v1305, 16
      %v1380 = vrot.slane %v1378, 5
      %v1381 = vshll.u32 %v1305, 16
      %v1383 = vrot.slane %v1381, 6
      %v1384 = vor.u32 %v1380, %v1383
      %v1385 = vsel %vm862, %v1376, %v1384
      %v1387 = vshrl.u32 %v1306, 16
      %v1389 = vrot.slane %v1387, 5
      %v1390 = vshll.u32 %v1306, 16
      %v1392 = vrot.slane %v1390, 6
      %v1393 = vor.u32 %v1389, %v1392
      %v1394 = vrot.slane %v1393, 4
      %v1396 = vshrl.u32 %v1307, 16
      %v1398 = vrot.slane %v1396, 5
      %v1399 = vshll.u32 %v1307, 16
      %v1401 = vrot.slane %v1399, 6
      %v1402 = vor.u32 %v1398, %v1401
      %v1403 = vsel %vm862, %v1394, %v1402
      %v1405 = vshrl.u32 %v1308, 16
      %v1407 = vrot.slane %v1405, 5
      %v1408 = vshll.u32 %v1308, 16
      %v1410 = vrot.slane %v1408, 6
      %v1411 = vor.u32 %v1407, %v1410
      %v1412 = vrot.slane %v1411, 4
      %v1414 = vshrl.u32 %v1309, 16
      %v1416 = vrot.slane %v1414, 5
      %v1417 = vshll.u32 %v1309, 16
      %v1419 = vrot.slane %v1417, 6
      %v1420 = vor.u32 %v1416, %v1419
      %v1421 = vsel %vm862, %v1412, %v1420
      %v1423 = vshrl.u32 %v1310, 16
      %v1425 = vrot.slane %v1423, 5
      %v1426 = vshll.u32 %v1310, 16
      %v1428 = vrot.slane %v1426, 6
      %v1429 = vor.u32 %v1425, %v1428
      %v1430 = vrot.slane %v1429, 4
      %v1432 = vshrl.u32 %v1311, 16
      %v1434 = vrot.slane %v1432, 5
      %v1435 = vshll.u32 %v1311, 16
      %v1437 = vrot.slane %v1435, 6
      %v1438 = vor.u32 %v1434, %v1437
      %v1439 = vsel %vm862, %v1430, %v1438
      %v1441 = vshrl.u32 %v1312, 16
      %v1443 = vrot.slane %v1441, 5
      %v1444 = vshll.u32 %v1312, 16
      %v1446 = vrot.slane %v1444, 6
      %v1447 = vor.u32 %v1443, %v1446
      %v1448 = vrot.slane %v1447, 4
      %v1450 = vshrl.u32 %v1313, 16
      %v1452 = vrot.slane %v1450, 5
      %v1453 = vshll.u32 %v1313, 16
      %v1455 = vrot.slane %v1453, 6
      %v1456 = vor.u32 %v1452, %v1455
      %v1457 = vsel %vm862, %v1448, %v1456
      %1458 = vrot.lane.b32.xlu0 %v1331, 40
      %v1459 = vpop.permute.xlu0 %1458
      %1460 = vrot.lane.b32.xlu0 %v1349, 40
      %v1461 = vpop.permute.xlu0 %1460
      %1462 = vrot.lane.b32.xlu0 %v1367, 40
      %v1463 = vpop.permute.xlu0 %1462
      %1464 = vrot.lane.b32.xlu0 %v1385, 40
      %v1465 = vpop.permute.xlu0 %1464
      %1466 = vrot.lane.b32.xlu0 %v1403, 40
      %v1467 = vpop.permute.xlu0 %1466
      %1468 = vrot.lane.b32.xlu0 %v1421, 40
      %v1469 = vpop.permute.xlu0 %1468
      %1470 = vrot.lane.b32.xlu0 %v1439, 40
      %v1471 = vpop.permute.xlu0 %1470
      %1472 = vrot.lane.b32.xlu0 %v1457, 40
      %v1473 = vpop.permute.xlu0 %1472
      %vm1482 = vcmask 388416
      %1483 = vst.msk [vmem:[#allocation3] sm:$0xf] %vm1482, %v1459
      %1484 = vst.msk [vmem:[#allocation3 + $0x4] sm:$0xf] %vm1482, %v1461
      %1485 = vst.msk [vmem:[#allocation3 + $0x8] sm:$0xf] %vm1482, %v1463
      %1486 = vst.msk [vmem:[#allocation3 + $0xc] sm:$0xf] %vm1482, %v1465
      %1487 = vst.msk [vmem:[#allocation3 + $0x10] sm:$0xf] %vm1482, %v1467
      %1488 = vst.msk [vmem:[#allocation3 + $0x14] sm:$0xf] %vm1482, %v1469
      %1489 = vst.msk [vmem:[#allocation3 + $0x18] sm:$0xf] %vm1482, %v1471
      %1490 = vst.msk [vmem:[#allocation3 + $0x1c] sm:$0xf] %vm1482, %v1473
      %s1491 = scalar_lea.vmem [#allocation2], 24
      %v1492 = vld [vmem:[%s1491] sm:$0xf]
      %v1493 = vld [vmem:[%s1491 + $0x4] sm:$0x1]
      %v1494 = vld [vmem:[%s1491 + $0x8] sm:$0xf]
      %v1495 = vld [vmem:[%s1491 + $0xc] sm:$0x1]
      %v1496 = vld [vmem:[%s1491 + $0x10] sm:$0xf]
      %v1497 = vld [vmem:[%s1491 + $0x14] sm:$0x1]
      %v1498 = vld [vmem:[%s1491 + $0x18] sm:$0xf]
      %v1499 = vld [vmem:[%s1491 + $0x1c] sm:$0x1]
      %v1500 = vld [vmem:[%s1491 + $0x20] sm:$0xf]
      %v1501 = vld [vmem:[%s1491 + $0x24] sm:$0x1]
      %v1502 = vld [vmem:[%s1491 + $0x28] sm:$0xf]
      %v1503 = vld [vmem:[%s1491 + $0x2c] sm:$0x1]
      %v1504 = vld [vmem:[%s1491 + $0x30] sm:$0xf]
      %v1505 = vld [vmem:[%s1491 + $0x34] sm:$0x1]
      %v1506 = vld [vmem:[%s1491 + $0x38] sm:$0xf]
      %v1507 = vld [vmem:[%s1491 + $0x3c] sm:$0x1]
      %v1509 = vshrl.u32 %v1492, 16
      %v1511 = vrot.slane %v1509, 4
      %v1512 = vshll.u32 %v1492, 16
      %v1514 = vrot.slane %v1512, 5
      %v1515 = vor.u32 %v1511, %v1514
      %v1516 = vrot.slane %v1515, 4
      %v1518 = vshll.u32 %v1493, 16
      %v1520 = vrot.slane %v1518, 5
      %v1521 = vsel %vm614, %v1516, %v1520
      %v1523 = vshrl.u32 %v1494, 16
      %v1525 = vrot.slane %v1523, 4
      %v1526 = vshll.u32 %v1494, 16
      %v1528 = vrot.slane %v1526, 5
      %v1529 = vor.u32 %v1525, %v1528
      %v1530 = vrot.slane %v1529, 4
      %v1532 = vshll.u32 %v1495, 16
      %v1534 = vrot.slane %v1532, 5
      %v1535 = vsel %vm614, %v1530, %v1534
      %v1537 = vshrl.u32 %v1496, 16
      %v1539 = vrot.slane %v1537, 4
      %v1540 = vshll.u32 %v1496, 16
      %v1542 = vrot.slane %v1540, 5
      %v1543 = vor.u32 %v1539, %v1542
      %v1544 = vrot.slane %v1543, 4
      %v1546 = vshll.u32 %v1497, 16
      %v1548 = vrot.slane %v1546, 5
      %v1549 = vsel %vm614, %v1544, %v1548
      %v1551 = vshrl.u32 %v1498, 16
      %v1553 = vrot.slane %v1551, 4
      %v1554 = vshll.u32 %v1498, 16
      %v1556 = vrot.slane %v1554, 5
      %v1557 = vor.u32 %v1553, %v1556
      %v1558 = vrot.slane %v1557, 4
      %v1560 = vshll.u32 %v1499, 16
      %v1562 = vrot.slane %v1560, 5
      %v1563 = vsel %vm614, %v1558, %v1562
      %v1565 = vshrl.u32 %v1500, 16
      %v1567 = vrot.slane %v1565, 4
      %v1568 = vshll.u32 %v1500, 16
      %v1570 = vrot.slane %v1568, 5
      %v1571 = vor.u32 %v1567, %v1570
      %v1572 = vrot.slane %v1571, 4
      %v1574 = vshll.u32 %v1501, 16
      %v1576 = vrot.slane %v1574, 5
      %v1577 = vsel %vm614, %v1572, %v1576
      %v1579 = vshrl.u32 %v1502, 16
      %v1581 = vrot.slane %v1579, 4
      %v1582 = vshll.u32 %v1502, 16
      %v1584 = vrot.slane %v1582, 5
      %v1585 = vor.u32 %v1581, %v1584
      %v1586 = vrot.slane %v1585, 4
      %v1588 = vshll.u32 %v1503, 16
      %v1590 = vrot.slane %v1588, 5
      %v1591 = vsel %vm614, %v1586, %v1590
      %v1593 = vshrl.u32 %v1504, 16
      %v1595 = vrot.slane %v1593, 4
      %v1596 = vshll.u32 %v1504, 16
      %v1598 = vrot.slane %v1596, 5
      %v1599 = vor.u32 %v1595, %v1598
      %v1600 = vrot.slane %v1599, 4
      %v1602 = vshll.u32 %v1505, 16
      %v1604 = vrot.slane %v1602, 5
      %v1605 = vsel %vm614, %v1600, %v1604
      %v1607 = vshrl.u32 %v1506, 16
      %v1609 = vrot.slane %v1607, 4
      %v1610 = vshll.u32 %v1506, 16
      %v1612 = vrot.slane %v1610, 5
      %v1613 = vor.u32 %v1609, %v1612
      %v1614 = vrot.slane %v1613, 4
      %v1616 = vshll.u32 %v1507, 16
      %v1618 = vrot.slane %v1616, 5
      %v1619 = vsel %vm614, %v1614, %v1618
      %1620 = vrot.lane.b32.xlu0 %v1521, 48
      %v1621 = vpop.permute.xlu0 %1620
      %1622 = vrot.lane.b32.xlu0 %v1535, 48
      %v1623 = vpop.permute.xlu0 %1622
      %1624 = vrot.lane.b32.xlu0 %v1549, 48
      %v1625 = vpop.permute.xlu0 %1624
      %1626 = vrot.lane.b32.xlu0 %v1563, 48
      %v1627 = vpop.permute.xlu0 %1626
      %1628 = vrot.lane.b32.xlu0 %v1577, 48
      %v1629 = vpop.permute.xlu0 %1628
      %1630 = vrot.lane.b32.xlu0 %v1591, 48
      %v1631 = vpop.permute.xlu0 %1630
      %1632 = vrot.lane.b32.xlu0 %v1605, 48
      %v1633 = vpop.permute.xlu0 %1632
      %1634 = vrot.lane.b32.xlu0 %v1619, 48
      %v1635 = vpop.permute.xlu0 %1634
      %vm1644 = vcmask 454016
      %1645 = vst.msk [vmem:[#allocation3] sm:$0xf] %vm1644, %v1621
      %1646 = vst.msk [vmem:[#allocation3 + $0x4] sm:$0xf] %vm1644, %v1623
      %1647 = vst.msk [vmem:[#allocation3 + $0x8] sm:$0xf] %vm1644, %v1625
      %1648 = vst.msk [vmem:[#allocation3 + $0xc] sm:$0xf] %vm1644, %v1627
      %1649 = vst.msk [vmem:[#allocation3 + $0x10] sm:$0xf] %vm1644, %v1629
      %1650 = vst.msk [vmem:[#allocation3 + $0x14] sm:$0xf] %vm1644, %v1631
      %1651 = vst.msk [vmem:[#allocation3 + $0x18] sm:$0xf] %vm1644, %v1633
      %1652 = vst.msk [vmem:[#allocation3 + $0x1c] sm:$0xf] %vm1644, %v1635
      %v1653 = vld [vmem:[%s1491] sm:$0xe]
      %v1654 = vld [vmem:[%s1491 + $0x4] sm:$0x1]
      %v1655 = vld [vmem:[%s1491 + $0x8] sm:$0xe]
      %v1656 = vld [vmem:[%s1491 + $0xc] sm:$0x1]
      %v1657 = vld [vmem:[%s1491 + $0x10] sm:$0xe]
      %v1658 = vld [vmem:[%s1491 + $0x14] sm:$0x1]
      %v1659 = vld [vmem:[%s1491 + $0x18] sm:$0xe]
      %v1660 = vld [vmem:[%s1491 + $0x1c] sm:$0x1]
      %v1661 = vld [vmem:[%s1491 + $0x20] sm:$0xe]
      %v1662 = vld [vmem:[%s1491 + $0x24] sm:$0x1]
      %v1663 = vld [vmem:[%s1491 + $0x28] sm:$0xe]
      %v1664 = vld [vmem:[%s1491 + $0x2c] sm:$0x1]
      %v1665 = vld [vmem:[%s1491 + $0x30] sm:$0xe]
      %v1666 = vld [vmem:[%s1491 + $0x34] sm:$0x1]
      %v1667 = vld [vmem:[%s1491 + $0x38] sm:$0xe]
      %v1668 = vld [vmem:[%s1491 + $0x3c] sm:$0x1]
      %v1685 = vrot.slane %v1653, 5
      %v1686 = vrot.slane %v1685, 4
      %v1687 = vrot.slane %v1654, 5
      %v1688 = vsel %vm778, %v1686, %v1687
      %v1689 = vrot.slane %v1655, 5
      %v1690 = vrot.slane %v1689, 4
      %v1691 = vrot.slane %v1656, 5
      %v1692 = vsel %vm778, %v1690, %v1691
      %v1693 = vrot.slane %v1657, 5
      %v1694 = vrot.slane %v1693, 4
      %v1695 = vrot.slane %v1658, 5
      %v1696 = vsel %vm778, %v1694, %v1695
      %v1697 = vrot.slane %v1659, 5
      %v1698 = vrot.slane %v1697, 4
      %v1699 = vrot.slane %v1660, 5
      %v1700 = vsel %vm778, %v1698, %v1699
      %v1701 = vrot.slane %v1661, 5
      %v1702 = vrot.slane %v1701, 4
      %v1703 = vrot.slane %v1662, 5
      %v1704 = vsel %vm778, %v1702, %v1703
      %v1705 = vrot.slane %v1663, 5
      %v1706 = vrot.slane %v1705, 4
      %v1707 = vrot.slane %v1664, 5
      %v1708 = vsel %vm778, %v1706, %v1707
      %v1709 = vrot.slane %v1665, 5
      %v1710 = vrot.slane %v1709, 4
      %v1711 = vrot.slane %v1666, 5
      %v1712 = vsel %vm778, %v1710, %v1711
      %v1713 = vrot.slane %v1667, 5
      %v1714 = vrot.slane %v1713, 4
      %v1715 = vrot.slane %v1668, 5
      %v1716 = vsel %vm778, %v1714, %v1715
      %1717 = vrot.lane.b32.xlu0 %v1688, 56
      %v1718 = vpop.permute.xlu0 %1717
      %1719 = vrot.lane.b32.xlu0 %v1692, 56
      %v1720 = vpop.permute.xlu0 %1719
      %1721 = vrot.lane.b32.xlu0 %v1696, 56
      %v1722 = vpop.permute.xlu0 %1721
      %1723 = vrot.lane.b32.xlu0 %v1700, 56
      %v1724 = vpop.permute.xlu0 %1723
      %1725 = vrot.lane.b32.xlu0 %v1704, 56
      %v1726 = vpop.permute.xlu0 %1725
      %1727 = vrot.lane.b32.xlu0 %v1708, 56
      %v1728 = vpop.permute.xlu0 %1727
      %1729 = vrot.lane.b32.xlu0 %v1712, 56
      %v1730 = vpop.permute.xlu0 %1729
      %1731 = vrot.lane.b32.xlu0 %v1716, 56
      %v1732 = vpop.permute.xlu0 %1731
      %vm1741 = vcmask 519616
      %1742 = vst.msk [vmem:[#allocation3] sm:$0xf] %vm1741, %v1718
      %1743 = vst.msk [vmem:[#allocation3 + $0x4] sm:$0xf] %vm1741, %v1720
      %1744 = vst.msk [vmem:[#allocation3 + $0x8] sm:$0xf] %vm1741, %v1722
      %1745 = vst.msk [vmem:[#allocation3 + $0xc] sm:$0xf] %vm1741, %v1724
      %1746 = vst.msk [vmem:[#allocation3 + $0x10] sm:$0xf] %vm1741, %v1726
      %1747 = vst.msk [vmem:[#allocation3 + $0x14] sm:$0xf] %vm1741, %v1728
      %1748 = vst.msk [vmem:[#allocation3 + $0x18] sm:$0xf] %vm1741, %v1730
      %1749 = vst.msk [vmem:[#allocation3 + $0x1c] sm:$0xf] %vm1741, %v1732
      %v1750 = vld [vmem:[%s1491] sm:$0xe]
      %v1751 = vld [vmem:[%s1491 + $0x4] sm:$0x3]
      %v1752 = vld [vmem:[%s1491 + $0x8] sm:$0xe]
      %v1753 = vld [vmem:[%s1491 + $0xc] sm:$0x3]
      %v1754 = vld [vmem:[%s1491 + $0x10] sm:$0xe]
      %v1755 = vld [vmem:[%s1491 + $0x14] sm:$0x3]
      %v1756 = vld [vmem:[%s1491 + $0x18] sm:$0xe]
      %v1757 = vld [vmem:[%s1491 + $0x1c] sm:$0x3]
      %v1758 = vld [vmem:[%s1491 + $0x20] sm:$0xe]
      %v1759 = vld [vmem:[%s1491 + $0x24] sm:$0x3]
      %v1760 = vld [vmem:[%s1491 + $0x28] sm:$0xe]
      %v1761 = vld [vmem:[%s1491 + $0x2c] sm:$0x3]
      %v1762 = vld [vmem:[%s1491 + $0x30] sm:$0xe]
      %v1763 = vld [vmem:[%s1491 + $0x34] sm:$0x3]
      %v1764 = vld [vmem:[%s1491 + $0x38] sm:$0xe]
      %v1765 = vld [vmem:[%s1491 + $0x3c] sm:$0x3]
      %v1767 = vshrl.u32 %v1750, 16
      %v1769 = vrot.slane %v1767, 5
      %v1770 = vshll.u32 %v1750, 16
      %v1772 = vrot.slane %v1770, 6
      %v1773 = vor.u32 %v1769, %v1772
      %v1774 = vrot.slane %v1773, 4
      %v1776 = vshrl.u32 %v1751, 16
      %v1778 = vrot.slane %v1776, 5
      %v1779 = vshll.u32 %v1751, 16
      %v1781 = vrot.slane %v1779, 6
      %v1782 = vor.u32 %v1778, %v1781
      %v1783 = vsel %vm862, %v1774, %v1782
      %v1785 = vshrl.u32 %v1752, 16
      %v1787 = vrot.slane %v1785, 5
      %v1788 = vshll.u32 %v1752, 16
      %v1790 = vrot.slane %v1788, 6
      %v1791 = vor.u32 %v1787, %v1790
      %v1792 = vrot.slane %v1791, 4
      %v1794 = vshrl.u32 %v1753, 16
      %v1796 = vrot.slane %v1794, 5
      %v1797 = vshll.u32 %v1753, 16
      %v1799 = vrot.slane %v1797, 6
      %v1800 = vor.u32 %v1796, %v1799
      %v1801 = vsel %vm862, %v1792, %v1800
      %v1803 = vshrl.u32 %v1754, 16
      %v1805 = vrot.slane %v1803, 5
      %v1806 = vshll.u32 %v1754, 16
      %v1808 = vrot.slane %v1806, 6
      %v1809 = vor.u32 %v1805, %v1808
      %v1810 = vrot.slane %v1809, 4
      %v1812 = vshrl.u32 %v1755, 16
      %v1814 = vrot.slane %v1812, 5
      %v1815 = vshll.u32 %v1755, 16
      %v1817 = vrot.slane %v1815, 6
      %v1818 = vor.u32 %v1814, %v1817
      %v1819 = vsel %vm862, %v1810, %v1818
      %v1821 = vshrl.u32 %v1756, 16
      %v1823 = vrot.slane %v1821, 5
      %v1824 = vshll.u32 %v1756, 16
      %v1826 = vrot.slane %v1824, 6
      %v1827 = vor.u32 %v1823, %v1826
      %v1828 = vrot.slane %v1827, 4
      %v1830 = vshrl.u32 %v1757, 16
      %v1832 = vrot.slane %v1830, 5
      %v1833 = vshll.u32 %v1757, 16
      %v1835 = vrot.slane %v1833, 6
      %v1836 = vor.u32 %v1832, %v1835
      %v1837 = vsel %vm862, %v1828, %v1836
      %v1839 = vshrl.u32 %v1758, 16
      %v1841 = vrot.slane %v1839, 5
      %v1842 = vshll.u32 %v1758, 16
      %v1844 = vrot.slane %v1842, 6
      %v1845 = vor.u32 %v1841, %v1844
      %v1846 = vrot.slane %v1845, 4
      %v1848 = vshrl.u32 %v1759, 16
      %v1850 = vrot.slane %v1848, 5
      %v1851 = vshll.u32 %v1759, 16
      %v1853 = vrot.slane %v1851, 6
      %v1854 = vor.u32 %v1850, %v1853
      %v1855 = vsel %vm862, %v1846, %v1854
      %v1857 = vshrl.u32 %v1760, 16
      %v1859 = vrot.slane %v1857, 5
      %v1860 = vshll.u32 %v1760, 16
      %v1862 = vrot.slane %v1860, 6
      %v1863 = vor.u32 %v1859, %v1862
      %v1864 = vrot.slane %v1863, 4
      %v1866 = vshrl.u32 %v1761, 16
      %v1868 = vrot.slane %v1866, 5
      %v1869 = vshll.u32 %v1761, 16
      %v1871 = vrot.slane %v1869, 6
      %v1872 = vor.u32 %v1868, %v1871
      %v1873 = vsel %vm862, %v1864, %v1872
      %v1875 = vshrl.u32 %v1762, 16
      %v1877 = vrot.slane %v1875, 5
      %v1878 = vshll.u32 %v1762, 16
      %v1880 = vrot.slane %v1878, 6
      %v1881 = vor.u32 %v1877, %v1880
      %v1882 = vrot.slane %v1881, 4
      %v1884 = vshrl.u32 %v1763, 16
      %v1886 = vrot.slane %v1884, 5
      %v1887 = vshll.u32 %v1763, 16
      %v1889 = vrot.slane %v1887, 6
      %v1890 = vor.u32 %v1886, %v1889
      %v1891 = vsel %vm862, %v1882, %v1890
      %v1893 = vshrl.u32 %v1764, 16
      %v1895 = vrot.slane %v1893, 5
      %v1896 = vshll.u32 %v1764, 16
      %v1898 = vrot.slane %v1896, 6
      %v1899 = vor.u32 %v1895, %v1898
      %v1900 = vrot.slane %v1899, 4
      %v1902 = vshrl.u32 %v1765, 16
      %v1904 = vrot.slane %v1902, 5
      %v1905 = vshll.u32 %v1765, 16
      %v1907 = vrot.slane %v1905, 6
      %v1908 = vor.u32 %v1904, %v1907
      %v1909 = vsel %vm862, %v1900, %v1908
      %1910 = vrot.lane.b32.xlu0 %v1783, 64
      %v1911 = vpop.permute.xlu0 %1910
      %1912 = vrot.lane.b32.xlu0 %v1801, 64
      %v1913 = vpop.permute.xlu0 %1912
      %1914 = vrot.lane.b32.xlu0 %v1819, 64
      %v1915 = vpop.permute.xlu0 %1914
      %1916 = vrot.lane.b32.xlu0 %v1837, 64
      %v1917 = vpop.permute.xlu0 %1916
      %1918 = vrot.lane.b32.xlu0 %v1855, 64
      %v1919 = vpop.permute.xlu0 %1918
      %1920 = vrot.lane.b32.xlu0 %v1873, 64
      %v1921 = vpop.permute.xlu0 %1920
      %1922 = vrot.lane.b32.xlu0 %v1891, 64
      %v1923 = vpop.permute.xlu0 %1922
      %1924 = vrot.lane.b32.xlu0 %v1909, 64
      %v1925 = vpop.permute.xlu0 %1924
      %vm1934 = vcmask 585216
      %1935 = vst.msk [vmem:[#allocation3] sm:$0xf] %vm1934, %v1911
      %1936 = vst.msk [vmem:[#allocation3 + $0x4] sm:$0xf] %vm1934, %v1913
      %1937 = vst.msk [vmem:[#allocation3 + $0x8] sm:$0xf] %vm1934, %v1915
      %1938 = vst.msk [vmem:[#allocation3 + $0xc] sm:$0xf] %vm1934, %v1917
      %1939 = vst.msk [vmem:[#allocation3 + $0x10] sm:$0xf] %vm1934, %v1919
      %1940 = vst.msk [vmem:[#allocation3 + $0x14] sm:$0xf] %vm1934, %v1921
      %1941 = vst.msk [vmem:[#allocation3 + $0x18] sm:$0xf] %vm1934, %v1923
      %1942 = vst.msk [vmem:[#allocation3 + $0x1c] sm:$0xf] %vm1934, %v1925
      %v1943 = vld [vmem:[#allocation3] sm:$0xf]
      %v1944 = vld [vmem:[#allocation3 + $0x4] sm:$0xf]
      %v1945 = vld [vmem:[#allocation3 + $0x8] sm:$0xf]
      %v1946 = vld [vmem:[#allocation3 + $0xc] sm:$0xf]
      %v1947 = vld [vmem:[#allocation3 + $0x10] sm:$0xf]
      %v1948 = vld [vmem:[#allocation3 + $0x14] sm:$0xf]
      %v1949 = vld [vmem:[#allocation3 + $0x18] sm:$0xf]
      %v1950 = vld [vmem:[#allocation3 + $0x1c] sm:$0xf]
      %v1951 = vld [vmem:[%s4] sm:$0xf]
      %v1952 = vld [vmem:[%s4 + $0x4] sm:$0xf]
      %v1953 = vld [vmem:[%s4 + $0x8] sm:$0xf]
      %v1954 = vld [vmem:[%s4 + $0xc] sm:$0xf]
      %v1955 = vld [vmem:[%s4 + $0x10] sm:$0xf]
      %v1956 = vld [vmem:[%s4 + $0x14] sm:$0xf]
      %v1957 = vld [vmem:[%s4 + $0x18] sm:$0xf]
      %v1958 = vld [vmem:[%s4 + $0x1c] sm:$0xf]
      %v1959 = vld [vmem:[%s4 + $0x20] sm:$0xf]
      %v1968 = vunpack.c.l.b16 %v1943
      %v1969 = vunpack.c.l.b16 %v1944
      %v1970 = vunpack.c.l.b16 %v1945
      %v1971 = vunpack.c.l.b16 %v1946
      %v1972 = vunpack.c.l.b16 %v1947
      %v1973 = vunpack.c.l.b16 %v1948
      %v1974 = vunpack.c.l.b16 %v1949
      %v1975 = vunpack.c.l.b16 %v1950
      %v1976 = vpack.c.b16 %v1969, %v1968
      %v1977 = vpack.c.b16 %v1971, %v1970
      %v1978 = vpack.c.b16 %v1973, %v1972
      %v1979 = vpack.c.b16 %v1975, %v1974
      %v1989 = vunpack.c.l.b16 %v1951
      %v1990 = vunpack.c.l.b16 %v1952
      %v1991 = vunpack.c.l.b16 %v1953
      %v1992 = vunpack.c.l.b16 %v1954
      %v1993 = vunpack.c.l.b16 %v1955
      %v1994 = vunpack.c.l.b16 %v1956
      %v1995 = vunpack.c.l.b16 %v1957
      %v1996 = vunpack.c.l.b16 %v1958
      %v1997 = vunpack.c.l.b16 %v1959
      %v1998 = vpack.c.b16 %v1990, %v1989
      %v1999 = vpack.c.b16 %v1992, %v1991
      %v2000 = vpack.c.b16 %v1994, %v1993
      %v2001 = vpack.c.b16 %v1996, %v1995
      %v2002 = vpack.c.b16 %v1997, %v1997
      %vm2007 = vcmask 588800
      %v2009 = vsel %vm2007, %v1976, 0
      %v2012 = vsel %vm2007, %v1977, 0
      %v2015 = vsel %vm2007, %v1978, 0
      %v2018 = vsel %vm2007, %v1979, 0
      %vm2020 = vcmask 1043456
      %v2022 = vsel %vm2020, %v2002, 0
      %2024 = vmatprep.subr.bf16.mxu0 0
      %2025 = vmatpush1.bf16.msra.mxu0 0
      %2026 = vmatprep.subr.bf16.mxu0 0
      %2027 = vmatpush1.bf16.msra.mxu0 0
      %2028 = vmatprep.subr.bf16.mxu0 0
      %2029 = vmatpush1.bf16.msra.mxu0 0
      %2030 = vmatprep.subr.bf16.mxu0 0
      %2031 = vmatpush1.bf16.msra.mxu0 %v2022
      %2032 = vmatprep.subr.bf16.mxu0 0
      %2033 = vmatpush1.bf16.msra.mxu0 %v2001
      %2034 = vmatprep.subr.bf16.mxu0 0
      %2035 = vmatpush1.bf16.msra.mxu0 %v2000
      %2036 = vmatprep.subr.bf16.mxu0 0
      %2037 = vmatpush1.bf16.msra.mxu0 %v1999
      %2038 = vmatprep.subr.bf16.mxu0 0
      %2039 = vmatpush1.bf16.msra.mxu0 %v1998
      %2040 = vmatprep.subr.bf16.mxu0 0
      %2041 = vmatpush2.bf16.msra.mxu0 0
      %2042 = vmatprep.subr.bf16.mxu0 0
      %2043 = vmatpush2.bf16.msra.mxu0 0
      %2044 = vmatprep.subr.bf16.mxu0 0
      %2045 = vmatpush2.bf16.msra.mxu0 0
      %2046 = vmatprep.subr.bf16.mxu0 0
      %2047 = vmatpush2.bf16.msra.mxu0 0
      %2048 = vmatprep.subr.bf16.mxu0 0
      %2049 = vmatpush2.bf16.msra.mxu0 0
      %2050 = vmatprep.subr.bf16.mxu0 0
      %2051 = vmatpush2.bf16.msra.mxu0 0
      %2052 = vmatprep.subr.bf16.mxu0 0
      %2053 = vmatpush2.bf16.msra.mxu0 0
      %2054 = vmatprep.subr.bf16.mxu0 0
      %2055 = vmatpush2.bf16.msra.mxu0 0
      %2056 = vmatprep.mubr.bf16.mxu0 0
      %2057 = vmatmul.mubr.bf16.gmra.mxu0 %v2009
      %v2058 = vpop.f32.mrf.mxu0
      %v2059 = vadd.f32 0.0, %v2058
      %v2060 = vpop.f32.mrf.mxu0
      %v2061 = vpop.f32.mrf.mxu0
      %v2062 = vadd.f32 0.0, %v2061
      %v2063 = vpop.f32.mrf.mxu0
      %2064 = vmatprep.mubr.bf16.mxu0 0
      %2065 = vmatmul.mubr.bf16.gmra.mxu0 %v2012
      %v2066 = vpop.f32.mrf.mxu0
      %v2067 = vadd.f32 0.0, %v2066
      %v2068 = vpop.f32.mrf.mxu0
      %v2069 = vpop.f32.mrf.mxu0
      %v2070 = vadd.f32 0.0, %v2069
      %v2071 = vpop.f32.mrf.mxu0
      %2072 = vmatprep.mubr.bf16.mxu0 0
      %2073 = vmatmul.mubr.bf16.gmra.mxu0 %v2015
      %v2074 = vpop.f32.mrf.mxu0
      %v2075 = vadd.f32 0.0, %v2074
      %v2076 = vpop.f32.mrf.mxu0
      %v2077 = vpop.f32.mrf.mxu0
      %v2078 = vadd.f32 0.0, %v2077
      %v2079 = vpop.f32.mrf.mxu0
      %2080 = vmatprep.mubr.bf16.mxu0 0
      %2081 = vmatmul.mubr.bf16.gmra.mxu0 %v2018
      %v2082 = vpop.f32.mrf.mxu0
      %v2083 = vadd.f32 0.0, %v2082
      %v2084 = vpop.f32.mrf.mxu0
      %v2085 = vpop.f32.mrf.mxu0
      %v2086 = vadd.f32 0.0, %v2085
      %v2087 = vpop.f32.mrf.mxu0
      %2088 = vdwg.mxu0
      %v2089 = vld [vmem:[%s5] sm:$0x1]
      %v2091 = vlaneseq
      %v2092 = vshrl.u32 %v2091, 7
      %v2093 = vsub.s32 0, %v2092
      %v2094 = vrot.slane %v2089, %v2093
      %v2096 = vmul.f32 %v2059, %v2094
      %v2097 = vmul.f32 %v2062, %v2094
      %v2098 = vmul.f32 %v2067, %v2094
      %v2099 = vmul.f32 %v2070, %v2094
      %v2100 = vmul.f32 %v2075, %v2094
      %v2101 = vmul.f32 %v2078, %v2094
      %v2102 = vmul.f32 %v2083, %v2094
      %v2103 = vmul.f32 %v2086, %v2094
      %v2104 = vld [vmem:[%s6] sm:$0x1]
      %v2106 = vlaneseq
      %v2107 = vshrl.u32 %v2106, 7
      %v2108 = vsub.s32 0, %v2107
      %v2109 = vrot.slane %v2104, %v2108
      %v2111 = vadd.f32 %v2096, %v2109
      %v2112 = vadd.f32 %v2097, %v2109
      %v2113 = vadd.f32 %v2098, %v2109
      %v2114 = vadd.f32 %v2099, %v2109
      %v2115 = vadd.f32 %v2100, %v2109
      %v2116 = vadd.f32 %v2101, %v2109
      %v2117 = vadd.f32 %v2102, %v2109
      %v2118 = vadd.f32 %v2103, %v2109
      %v2119 = vmax.f32 %v2111, 0.0
      %v2120 = vmax.f32 %v2112, 0.0
      %v2121 = vmax.f32 %v2113, 0.0
      %v2122 = vmax.f32 %v2114, 0.0
      %v2123 = vmax.f32 %v2115, 0.0
      %v2124 = vmax.f32 %v2116, 0.0
      %v2125 = vmax.f32 %v2117, 0.0
      %v2126 = vmax.f32 %v2118, 0.0
      %v2127 = vpack.c.bf16 %v2120, %v2119
      %v2128 = vpack.c.bf16 %v2122, %v2121
      %v2129 = vpack.c.bf16 %v2124, %v2123
      %v2130 = vpack.c.bf16 %v2126, %v2125
      %v2135 = vunpack.c.l.b16 %v2127
      %v2136 = vunpack.c.h.b16 %v2127
      %v2137 = vunpack.c.l.b16 %v2128
      %v2138 = vunpack.c.h.b16 %v2128
      %v2139 = vunpack.c.l.b16 %v2129
      %v2140 = vunpack.c.h.b16 %v2129
      %v2141 = vunpack.c.l.b16 %v2130
      %v2142 = vunpack.c.h.b16 %v2130
      %v2143 = vpack.c.b16 %v2135, %v2135
      %v2144 = vpack.c.b16 %v2136, %v2136
      %v2145 = vpack.c.b16 %v2137, %v2137
      %v2146 = vpack.c.b16 %v2138, %v2138
      %v2147 = vpack.c.b16 %v2139, %v2139
      %v2148 = vpack.c.b16 %v2140, %v2140
      %v2149 = vpack.c.b16 %v2141, %v2141
      %v2150 = vpack.c.b16 %v2142, %v2142
      %2159 = vst.msk [vmem:[%s311] sm:$0xf] %vm496, %v2143
      %2160 = vst.msk [vmem:[%s311 + $0x4] sm:$0xf] %vm496, %v2144
      %2161 = vst.msk [vmem:[%s311 + $0x8] sm:$0xf] %vm496, %v2145
      %2162 = vst.msk [vmem:[%s311 + $0xc] sm:$0xf] %vm496, %v2146
      %2163 = vst.msk [vmem:[%s311 + $0x10] sm:$0xf] %vm496, %v2147
      %2164 = vst.msk [vmem:[%s311 + $0x14] sm:$0xf] %vm496, %v2148
      %2165 = vst.msk [vmem:[%s311 + $0x18] sm:$0xf] %vm496, %v2149
      %2166 = vst.msk [vmem:[%s311 + $0x1c] sm:$0xf] %vm496, %v2150
      %vm2167 = vcmask 130048
      %v2168 = vsel %vm2167, %v2119, 0.0
      %v2169 = vsel %vm2167, %v2120, 0.0
      %v2170 = vadd.f32 %v2168, %v2169
      %v2171 = vsel %vm2167, %v2121, 0.0
      %v2172 = vadd.f32 %v2170, %v2171
      %v2173 = vsel %vm2167, %v2122, 0.0
      %v2174 = vadd.f32 %v2172, %v2173
      %v2175 = vsel %vm2167, %v2123, 0.0
      %v2176 = vadd.f32 %v2174, %v2175
      %v2177 = vsel %vm2167, %v2124, 0.0
      %v2178 = vadd.f32 %v2176, %v2177
      %v2179 = vsel %vm2167, %v2125, 0.0
      %v2180 = vadd.f32 %v2178, %v2179
      %v2181 = vsel %vm2167, %v2126, 0.0
      %v2182 = vadd.f32 %v2180, %v2181
      %v2183 = vrot.slane %v2182, 4
      %v2184 = vadd.f32 %v2182, %v2183
      %v2185 = vrot.slane %v2184, 2
      %v2186 = vadd.f32 %v2184, %v2185
      %v2187 = vrot.slane %v2186, 1
      %v2188 = vadd.f32 %v2186, %v2187
      %v2189 = vadd.f32 %v2188, 0.0
      %v2190 = vld [vmem:[#allocation2] sm:$0xf]
      %v2191 = vld [vmem:[#allocation2 + $0x8] sm:$0xf]
      %v2192 = vld [vmem:[#allocation2 + $0x10] sm:$0xf]
      %v2193 = vld [vmem:[#allocation2 + $0x18] sm:$0xf]
      %v2194 = vld [vmem:[#allocation2 + $0x20] sm:$0xf]
      %v2195 = vld [vmem:[#allocation2 + $0x28] sm:$0xf]
      %v2196 = vld [vmem:[#allocation2 + $0x30] sm:$0xf]
      %v2197 = vld [vmem:[#allocation2 + $0x38] sm:$0xf]
      %2206 = vrot.lane.b32.xlu0 %v2190, 120
      %v2207 = vpop.permute.xlu0 %2206
      %2208 = vrot.lane.b32.xlu0 %v2191, 120
      %v2209 = vpop.permute.xlu0 %2208
      %2210 = vrot.lane.b32.xlu0 %v2192, 120
      %v2211 = vpop.permute.xlu0 %2210
      %2212 = vrot.lane.b32.xlu0 %v2193, 120
      %v2213 = vpop.permute.xlu0 %2212
      %2214 = vrot.lane.b32.xlu0 %v2194, 120
      %v2215 = vpop.permute.xlu0 %2214
      %2216 = vrot.lane.b32.xlu0 %v2195, 120
      %v2217 = vpop.permute.xlu0 %2216
      %2218 = vrot.lane.b32.xlu0 %v2196, 120
      %v2219 = vpop.permute.xlu0 %2218
      %2220 = vrot.lane.b32.xlu0 %v2197, 120
      %v2221 = vpop.permute.xlu0 %2220
      %2230 = vst.msk [vmem:[#allocation3] sm:$0xf] %vm735, %v2207
      %2231 = vst.msk [vmem:[#allocation3 + $0x4] sm:$0xf] %vm735, %v2209
      %2232 = vst.msk [vmem:[#allocation3 + $0x8] sm:$0xf] %vm735, %v2211
      %2233 = vst.msk [vmem:[#allocation3 + $0xc] sm:$0xf] %vm735, %v2213
      %2234 = vst.msk [vmem:[#allocation3 + $0x10] sm:$0xf] %vm735, %v2215
      %2235 = vst.msk [vmem:[#allocation3 + $0x14] sm:$0xf] %vm735, %v2217
      %2236 = vst.msk [vmem:[#allocation3 + $0x18] sm:$0xf] %vm735, %v2219
      %2237 = vst.msk [vmem:[#allocation3 + $0x1c] sm:$0xf] %vm735, %v2221
      %v2238 = vld [vmem:[#allocation2] sm:$0xe]
      %v2239 = vld [vmem:[#allocation2 + $0x4] sm:$0x1]
      %v2240 = vld [vmem:[#allocation2 + $0x8] sm:$0xe]
      %v2241 = vld [vmem:[#allocation2 + $0xc] sm:$0x1]
      %v2242 = vld [vmem:[#allocation2 + $0x10] sm:$0xe]
      %v2243 = vld [vmem:[#allocation2 + $0x14] sm:$0x1]
      %v2244 = vld [vmem:[#allocation2 + $0x18] sm:$0xe]
      %v2245 = vld [vmem:[#allocation2 + $0x1c] sm:$0x1]
      %v2246 = vld [vmem:[#allocation2 + $0x20] sm:$0xe]
      %v2247 = vld [vmem:[#allocation2 + $0x24] sm:$0x1]
      %v2248 = vld [vmem:[#allocation2 + $0x28] sm:$0xe]
      %v2249 = vld [vmem:[#allocation2 + $0x2c] sm:$0x1]
      %v2250 = vld [vmem:[#allocation2 + $0x30] sm:$0xe]
      %v2251 = vld [vmem:[#allocation2 + $0x34] sm:$0x1]
      %v2252 = vld [vmem:[#allocation2 + $0x38] sm:$0xe]
      %v2253 = vld [vmem:[#allocation2 + $0x3c] sm:$0x1]
      %v2270 = vrot.slane %v2238, 5
      %v2271 = vrot.slane %v2270, 4
      %v2272 = vrot.slane %v2239, 5
      %v2273 = vsel %vm778, %v2271, %v2272
      %v2274 = vrot.slane %v2240, 5
      %v2275 = vrot.slane %v2274, 4
      %v2276 = vrot.slane %v2241, 5
      %v2277 = vsel %vm778, %v2275, %v2276
      %v2278 = vrot.slane %v2242, 5
      %v2279 = vrot.slane %v2278, 4
      %v2280 = vrot.slane %v2243, 5
      %v2281 = vsel %vm778, %v2279, %v2280
      %v2282 = vrot.slane %v2244, 5
      %v2283 = vrot.slane %v2282, 4
      %v2284 = vrot.slane %v2245, 5
      %v2285 = vsel %vm778, %v2283, %v2284
      %v2286 = vrot.slane %v2246, 5
      %v2287 = vrot.slane %v2286, 4
      %v2288 = vrot.slane %v2247, 5
      %v2289 = vsel %vm778, %v2287, %v2288
      %v2290 = vrot.slane %v2248, 5
      %v2291 = vrot.slane %v2290, 4
      %v2292 = vrot.slane %v2249, 5
      %v2293 = vsel %vm778, %v2291, %v2292
      %v2294 = vrot.slane %v2250, 5
      %v2295 = vrot.slane %v2294, 4
      %v2296 = vrot.slane %v2251, 5
      %v2297 = vsel %vm778, %v2295, %v2296
      %v2298 = vrot.slane %v2252, 5
      %v2299 = vrot.slane %v2298, 4
      %v2300 = vrot.slane %v2253, 5
      %v2301 = vsel %vm778, %v2299, %v2300
      %2310 = vst.msk [vmem:[#allocation3] sm:$0xf] %vm835, %v2273
      %2311 = vst.msk [vmem:[#allocation3 + $0x4] sm:$0xf] %vm835, %v2277
      %2312 = vst.msk [vmem:[#allocation3 + $0x8] sm:$0xf] %vm835, %v2281
      %2313 = vst.msk [vmem:[#allocation3 + $0xc] sm:$0xf] %vm835, %v2285
      %2314 = vst.msk [vmem:[#allocation3 + $0x10] sm:$0xf] %vm835, %v2289
      %2315 = vst.msk [vmem:[#allocation3 + $0x14] sm:$0xf] %vm835, %v2293
      %2316 = vst.msk [vmem:[#allocation3 + $0x18] sm:$0xf] %vm835, %v2297
      %2317 = vst.msk [vmem:[#allocation3 + $0x1c] sm:$0xf] %vm835, %v2301
      %v2318 = vld [vmem:[#allocation2] sm:$0xc]
      %v2319 = vld [vmem:[#allocation2 + $0x4] sm:$0x3]
      %v2320 = vld [vmem:[#allocation2 + $0x8] sm:$0xc]
      %v2321 = vld [vmem:[#allocation2 + $0xc] sm:$0x3]
      %v2322 = vld [vmem:[#allocation2 + $0x10] sm:$0xc]
      %v2323 = vld [vmem:[#allocation2 + $0x14] sm:$0x3]
      %v2324 = vld [vmem:[#allocation2 + $0x18] sm:$0xc]
      %v2325 = vld [vmem:[#allocation2 + $0x1c] sm:$0x3]
      %v2326 = vld [vmem:[#allocation2 + $0x20] sm:$0xc]
      %v2327 = vld [vmem:[#allocation2 + $0x24] sm:$0x3]
      %v2328 = vld [vmem:[#allocation2 + $0x28] sm:$0xc]
      %v2329 = vld [vmem:[#allocation2 + $0x2c] sm:$0x3]
      %v2330 = vld [vmem:[#allocation2 + $0x30] sm:$0xc]
      %v2331 = vld [vmem:[#allocation2 + $0x34] sm:$0x3]
      %v2332 = vld [vmem:[#allocation2 + $0x38] sm:$0xc]
      %v2333 = vld [vmem:[#allocation2 + $0x3c] sm:$0x3]
      %vm2350 = vcmask 1041408
      %vm2351 = vcmask 1045508
      %vm2352 = vmor %vm2350, %vm2351
      %v2353 = vrot.slane %v2318, 6
      %v2354 = vrot.slane %v2353, 4
      %v2355 = vrot.slane %v2319, 6
      %v2356 = vsel %vm2352, %v2354, %v2355
      %v2357 = vrot.slane %v2320, 6
      %v2358 = vrot.slane %v2357, 4
      %v2359 = vrot.slane %v2321, 6
      %v2360 = vsel %vm2352, %v2358, %v2359
      %v2361 = vrot.slane %v2322, 6
      %v2362 = vrot.slane %v2361, 4
      %v2363 = vrot.slane %v2323, 6
      %v2364 = vsel %vm2352, %v2362, %v2363
      %v2365 = vrot.slane %v2324, 6
      %v2366 = vrot.slane %v2365, 4
      %v2367 = vrot.slane %v2325, 6
      %v2368 = vsel %vm2352, %v2366, %v2367
      %v2369 = vrot.slane %v2326, 6
      %v2370 = vrot.slane %v2369, 4
      %v2371 = vrot.slane %v2327, 6
      %v2372 = vsel %vm2352, %v2370, %v2371
      %v2373 = vrot.slane %v2328, 6
      %v2374 = vrot.slane %v2373, 4
      %v2375 = vrot.slane %v2329, 6
      %v2376 = vsel %vm2352, %v2374, %v2375
      %v2377 = vrot.slane %v2330, 6
      %v2378 = vrot.slane %v2377, 4
      %v2379 = vrot.slane %v2331, 6
      %v2380 = vsel %vm2352, %v2378, %v2379
      %v2381 = vrot.slane %v2332, 6
      %v2382 = vrot.slane %v2381, 4
      %v2383 = vrot.slane %v2333, 6
      %v2384 = vsel %vm2352, %v2382, %v2383
      %2385 = vrot.lane.b32.xlu0 %v2356, 8
      %v2386 = vpop.permute.xlu0 %2385
      %2387 = vrot.lane.b32.xlu0 %v2360, 8
      %v2388 = vpop.permute.xlu0 %2387
      %2389 = vrot.lane.b32.xlu0 %v2364, 8
      %v2390 = vpop.permute.xlu0 %2389
      %2391 = vrot.lane.b32.xlu0 %v2368, 8
      %v2392 = vpop.permute.xlu0 %2391
      %2393 = vrot.lane.b32.xlu0 %v2372, 8
      %v2394 = vpop.permute.xlu0 %2393
      %2395 = vrot.lane.b32.xlu0 %v2376, 8
      %v2396 = vpop.permute.xlu0 %2395
      %2397 = vrot.lane.b32.xlu0 %v2380, 8
      %v2398 = vpop.permute.xlu0 %2397
      %2399 = vrot.lane.b32.xlu0 %v2384, 8
      %v2400 = vpop.permute.xlu0 %2399
      %2409 = vst.msk [vmem:[#allocation3] sm:$0xf] %vm1031, %v2386
      %2410 = vst.msk [vmem:[#allocation3 + $0x4] sm:$0xf] %vm1031, %v2388
      %2411 = vst.msk [vmem:[#allocation3 + $0x8] sm:$0xf] %vm1031, %v2390
      %2412 = vst.msk [vmem:[#allocation3 + $0xc] sm:$0xf] %vm1031, %v2392
      %2413 = vst.msk [vmem:[#allocation3 + $0x10] sm:$0xf] %vm1031, %v2394
      %2414 = vst.msk [vmem:[#allocation3 + $0x14] sm:$0xf] %vm1031, %v2396
      %2415 = vst.msk [vmem:[#allocation3 + $0x18] sm:$0xf] %vm1031, %v2398
      %2416 = vst.msk [vmem:[#allocation3 + $0x1c] sm:$0xf] %vm1031, %v2400
      %v2417 = vld [vmem:[%s507] sm:$0xf]
      %v2418 = vld [vmem:[%s507 + $0x8] sm:$0xf]
      %v2419 = vld [vmem:[%s507 + $0x10] sm:$0xf]
      %v2420 = vld [vmem:[%s507 + $0x18] sm:$0xf]
      %v2421 = vld [vmem:[%s507 + $0x20] sm:$0xf]
      %v2422 = vld [vmem:[%s507 + $0x28] sm:$0xf]
      %v2423 = vld [vmem:[%s507 + $0x30] sm:$0xf]
      %v2424 = vld [vmem:[%s507 + $0x38] sm:$0xf]
      %2433 = vrot.lane.b32.xlu0 %v2417, 16
      %v2434 = vpop.permute.xlu0 %2433
      %2435 = vrot.lane.b32.xlu0 %v2418, 16
      %v2436 = vpop.permute.xlu0 %2435
      %2437 = vrot.lane.b32.xlu0 %v2419, 16
      %v2438 = vpop.permute.xlu0 %2437
      %2439 = vrot.lane.b32.xlu0 %v2420, 16
      %v2440 = vpop.permute.xlu0 %2439
      %2441 = vrot.lane.b32.xlu0 %v2421, 16
      %v2442 = vpop.permute.xlu0 %2441
      %2443 = vrot.lane.b32.xlu0 %v2422, 16
      %v2444 = vpop.permute.xlu0 %2443
      %2445 = vrot.lane.b32.xlu0 %v2423, 16
      %v2446 = vpop.permute.xlu0 %2445
      %2447 = vrot.lane.b32.xlu0 %v2424, 16
      %v2448 = vpop.permute.xlu0 %2447
      %2457 = vst.msk [vmem:[#allocation3] sm:$0xf] %vm1192, %v2434
      %2458 = vst.msk [vmem:[#allocation3 + $0x4] sm:$0xf] %vm1192, %v2436
      %2459 = vst.msk [vmem:[#allocation3 + $0x8] sm:$0xf] %vm1192, %v2438
      %2460 = vst.msk [vmem:[#allocation3 + $0xc] sm:$0xf] %vm1192, %v2440
      %2461 = vst.msk [vmem:[#allocation3 + $0x10] sm:$0xf] %vm1192, %v2442
      %2462 = vst.msk [vmem:[#allocation3 + $0x14] sm:$0xf] %vm1192, %v2444
      %2463 = vst.msk [vmem:[#allocation3 + $0x18] sm:$0xf] %vm1192, %v2446
      %2464 = vst.msk [vmem:[#allocation3 + $0x1c] sm:$0xf] %vm1192, %v2448
      %v2465 = vld [vmem:[%s507] sm:$0xe]
      %v2466 = vld [vmem:[%s507 + $0x4] sm:$0x1]
      %v2467 = vld [vmem:[%s507 + $0x8] sm:$0xe]
      %v2468 = vld [vmem:[%s507 + $0xc] sm:$0x1]
      %v2469 = vld [vmem:[%s507 + $0x10] sm:$0xe]
      %v2470 = vld [vmem:[%s507 + $0x14] sm:$0x1]
      %v2471 = vld [vmem:[%s507 + $0x18] sm:$0xe]
      %v2472 = vld [vmem:[%s507 + $0x1c] sm:$0x1]
      %v2473 = vld [vmem:[%s507 + $0x20] sm:$0xe]
      %v2474 = vld [vmem:[%s507 + $0x24] sm:$0x1]
      %v2475 = vld [vmem:[%s507 + $0x28] sm:$0xe]
      %v2476 = vld [vmem:[%s507 + $0x2c] sm:$0x1]
      %v2477 = vld [vmem:[%s507 + $0x30] sm:$0xe]
      %v2478 = vld [vmem:[%s507 + $0x34] sm:$0x1]
      %v2479 = vld [vmem:[%s507 + $0x38] sm:$0xe]
      %v2480 = vld [vmem:[%s507 + $0x3c] sm:$0x1]
      %v2497 = vrot.slane %v2465, 5
      %v2498 = vrot.slane %v2497, 4
      %v2499 = vrot.slane %v2466, 5
      %v2500 = vsel %vm778, %v2498, %v2499
      %v2501 = vrot.slane %v2467, 5
      %v2502 = vrot.slane %v2501, 4
      %v2503 = vrot.slane %v2468, 5
      %v2504 = vsel %vm778, %v2502, %v2503
      %v2505 = vrot.slane %v2469, 5
      %v2506 = vrot.slane %v2505, 4
      %v2507 = vrot.slane %v2470, 5
      %v2508 = vsel %vm778, %v2506, %v2507
      %v2509 = vrot.slane %v2471, 5
      %v2510 = vrot.slane %v2509, 4
      %v2511 = vrot.slane %v2472, 5
      %v2512 = vsel %vm778, %v2510, %v2511
      %v2513 = vrot.slane %v2473, 5
      %v2514 = vrot.slane %v2513, 4
      %v2515 = vrot.slane %v2474, 5
      %v2516 = vsel %vm778, %v2514, %v2515
      %v2517 = vrot.slane %v2475, 5
      %v2518 = vrot.slane %v2517, 4
      %v2519 = vrot.slane %v2476, 5
      %v2520 = vsel %vm778, %v2518, %v2519
      %v2521 = vrot.slane %v2477, 5
      %v2522 = vrot.slane %v2521, 4
      %v2523 = vrot.slane %v2478, 5
      %v2524 = vsel %vm778, %v2522, %v2523
      %v2525 = vrot.slane %v2479, 5
      %v2526 = vrot.slane %v2525, 4
      %v2527 = vrot.slane %v2480, 5
      %v2528 = vsel %vm778, %v2526, %v2527
      %2529 = vrot.lane.b32.xlu0 %v2500, 24
      %v2530 = vpop.permute.xlu0 %2529
      %2531 = vrot.lane.b32.xlu0 %v2504, 24
      %v2532 = vpop.permute.xlu0 %2531
      %2533 = vrot.lane.b32.xlu0 %v2508, 24
      %v2534 = vpop.permute.xlu0 %2533
      %2535 = vrot.lane.b32.xlu0 %v2512, 24
      %v2536 = vpop.permute.xlu0 %2535
      %2537 = vrot.lane.b32.xlu0 %v2516, 24
      %v2538 = vpop.permute.xlu0 %2537
      %2539 = vrot.lane.b32.xlu0 %v2520, 24
      %v2540 = vpop.permute.xlu0 %2539
      %2541 = vrot.lane.b32.xlu0 %v2524, 24
      %v2542 = vpop.permute.xlu0 %2541
      %2543 = vrot.lane.b32.xlu0 %v2528, 24
      %v2544 = vpop.permute.xlu0 %2543
      %2553 = vst.msk [vmem:[#allocation3] sm:$0xf] %vm1289, %v2530
      %2554 = vst.msk [vmem:[#allocation3 + $0x4] sm:$0xf] %vm1289, %v2532
      %2555 = vst.msk [vmem:[#allocation3 + $0x8] sm:$0xf] %vm1289, %v2534
      %2556 = vst.msk [vmem:[#allocation3 + $0xc] sm:$0xf] %vm1289, %v2536
      %2557 = vst.msk [vmem:[#allocation3 + $0x10] sm:$0xf] %vm1289, %v2538
      %2558 = vst.msk [vmem:[#allocation3 + $0x14] sm:$0xf] %vm1289, %v2540
      %2559 = vst.msk [vmem:[#allocation3 + $0x18] sm:$0xf] %vm1289, %v2542
      %2560 = vst.msk [vmem:[#allocation3 + $0x1c] sm:$0xf] %vm1289, %v2544
      %v2561 = vld [vmem:[%s507] sm:$0xc]
      %v2562 = vld [vmem:[%s507 + $0x4] sm:$0x3]
      %v2563 = vld [vmem:[%s507 + $0x8] sm:$0xc]
      %v2564 = vld [vmem:[%s507 + $0xc] sm:$0x3]
      %v2565 = vld [vmem:[%s507 + $0x10] sm:$0xc]
      %v2566 = vld [vmem:[%s507 + $0x14] sm:$0x3]
      %v2567 = vld [vmem:[%s507 + $0x18] sm:$0xc]
      %v2568 = vld [vmem:[%s507 + $0x1c] sm:$0x3]
      %v2569 = vld [vmem:[%s507 + $0x20] sm:$0xc]
      %v2570 = vld [vmem:[%s507 + $0x24] sm:$0x3]
      %v2571 = vld [vmem:[%s507 + $0x28] sm:$0xc]
      %v2572 = vld [vmem:[%s507 + $0x2c] sm:$0x3]
      %v2573 = vld [vmem:[%s507 + $0x30] sm:$0xc]
      %v2574 = vld [vmem:[%s507 + $0x34] sm:$0x3]
      %v2575 = vld [vmem:[%s507 + $0x38] sm:$0xc]
      %v2576 = vld [vmem:[%s507 + $0x3c] sm:$0x3]
      %v2593 = vrot.slane %v2561, 6
      %v2594 = vrot.slane %v2593, 4
      %v2595 = vrot.slane %v2562, 6
      %v2596 = vsel %vm2352, %v2594, %v2595
      %v2597 = vrot.slane %v2563, 6
      %v2598 = vrot.slane %v2597, 4
      %v2599 = vrot.slane %v2564, 6
      %v2600 = vsel %vm2352, %v2598, %v2599
      %v2601 = vrot.slane %v2565, 6
      %v2602 = vrot.slane %v2601, 4
      %v2603 = vrot.slane %v2566, 6
      %v2604 = vsel %vm2352, %v2602, %v2603
      %v2605 = vrot.slane %v2567, 6
      %v2606 = vrot.slane %v2605, 4
      %v2607 = vrot.slane %v2568, 6
      %v2608 = vsel %vm2352, %v2606, %v2607
      %v2609 = vrot.slane %v2569, 6
      %v2610 = vrot.slane %v2609, 4
      %v2611 = vrot.slane %v2570, 6
      %v2612 = vsel %vm2352, %v2610, %v2611
      %v2613 = vrot.slane %v2571, 6
      %v2614 = vrot.slane %v2613, 4
      %v2615 = vrot.slane %v2572, 6
      %v2616 = vsel %vm2352, %v2614, %v2615
      %v2617 = vrot.slane %v2573, 6
      %v2618 = vrot.slane %v2617, 4
      %v2619 = vrot.slane %v2574, 6
      %v2620 = vsel %vm2352, %v2618, %v2619
      %v2621 = vrot.slane %v2575, 6
      %v2622 = vrot.slane %v2621, 4
      %v2623 = vrot.slane %v2576, 6
      %v2624 = vsel %vm2352, %v2622, %v2623
      %2625 = vrot.lane.b32.xlu0 %v2596, 32
      %v2626 = vpop.permute.xlu0 %2625
      %2627 = vrot.lane.b32.xlu0 %v2600, 32
      %v2628 = vpop.permute.xlu0 %2627
      %2629 = vrot.lane.b32.xlu0 %v2604, 32
      %v2630 = vpop.permute.xlu0 %2629
      %2631 = vrot.lane.b32.xlu0 %v2608, 32
      %v2632 = vpop.permute.xlu0 %2631
      %2633 = vrot.lane.b32.xlu0 %v2612, 32
      %v2634 = vpop.permute.xlu0 %2633
      %2635 = vrot.lane.b32.xlu0 %v2616, 32
      %v2636 = vpop.permute.xlu0 %2635
      %2637 = vrot.lane.b32.xlu0 %v2620, 32
      %v2638 = vpop.permute.xlu0 %2637
      %2639 = vrot.lane.b32.xlu0 %v2624, 32
      %v2640 = vpop.permute.xlu0 %2639
      %2649 = vst.msk [vmem:[#allocation3] sm:$0xf] %vm1482, %v2626
      %2650 = vst.msk [vmem:[#allocation3 + $0x4] sm:$0xf] %vm1482, %v2628
      %2651 = vst.msk [vmem:[#allocation3 + $0x8] sm:$0xf] %vm1482, %v2630
      %2652 = vst.msk [vmem:[#allocation3 + $0xc] sm:$0xf] %vm1482, %v2632
      %2653 = vst.msk [vmem:[#allocation3 + $0x10] sm:$0xf] %vm1482, %v2634
      %2654 = vst.msk [vmem:[#allocation3 + $0x14] sm:$0xf] %vm1482, %v2636
      %2655 = vst.msk [vmem:[#allocation3 + $0x18] sm:$0xf] %vm1482, %v2638
      %2656 = vst.msk [vmem:[#allocation3 + $0x1c] sm:$0xf] %vm1482, %v2640
      %s2657 = scalar_lea.vmem [#allocation2], 32
      %v2658 = vld [vmem:[%s2657] sm:$0xf]
      %v2659 = vld [vmem:[%s2657 + $0x8] sm:$0xf]
      %v2660 = vld [vmem:[%s2657 + $0x10] sm:$0xf]
      %v2661 = vld [vmem:[%s2657 + $0x18] sm:$0xf]
      %v2662 = vld [vmem:[%s2657 + $0x20] sm:$0xf]
      %v2663 = vld [vmem:[%s2657 + $0x28] sm:$0xf]
      %v2664 = vld [vmem:[%s2657 + $0x30] sm:$0xf]
      %v2665 = vld [vmem:[%s2657 + $0x38] sm:$0xf]
      %2674 = vrot.lane.b32.xlu0 %v2658, 40
      %v2675 = vpop.permute.xlu0 %2674
      %2676 = vrot.lane.b32.xlu0 %v2659, 40
      %v2677 = vpop.permute.xlu0 %2676
      %2678 = vrot.lane.b32.xlu0 %v2660, 40
      %v2679 = vpop.permute.xlu0 %2678
      %2680 = vrot.lane.b32.xlu0 %v2661, 40
      %v2681 = vpop.permute.xlu0 %2680
      %2682 = vrot.lane.b32.xlu0 %v2662, 40
      %v2683 = vpop.permute.xlu0 %2682
      %2684 = vrot.lane.b32.xlu0 %v2663, 40
      %v2685 = vpop.permute.xlu0 %2684
      %2686 = vrot.lane.b32.xlu0 %v2664, 40
      %v2687 = vpop.permute.xlu0 %2686
      %2688 = vrot.lane.b32.xlu0 %v2665, 40
      %v2689 = vpop.permute.xlu0 %2688
      %2698 = vst.msk [vmem:[#allocation3] sm:$0xf] %vm1644, %v2675
      %2699 = vst.msk [vmem:[#allocation3 + $0x4] sm:$0xf] %vm1644, %v2677
      %2700 = vst.msk [vmem:[#allocation3 + $0x8] sm:$0xf] %vm1644, %v2679
      %2701 = vst.msk [vmem:[#allocation3 + $0xc] sm:$0xf] %vm1644, %v2681
      %2702 = vst.msk [vmem:[#allocation3 + $0x10] sm:$0xf] %vm1644, %v2683
      %2703 = vst.msk [vmem:[#allocation3 + $0x14] sm:$0xf] %vm1644, %v2685
      %2704 = vst.msk [vmem:[#allocation3 + $0x18] sm:$0xf] %vm1644, %v2687
      %2705 = vst.msk [vmem:[#allocation3 + $0x1c] sm:$0xf] %vm1644, %v2689
      %v2706 = vld [vmem:[%s2657] sm:$0xe]
      %v2707 = vld [vmem:[%s2657 + $0x4] sm:$0x1]
      %v2708 = vld [vmem:[%s2657 + $0x8] sm:$0xe]
      %v2709 = vld [vmem:[%s2657 + $0xc] sm:$0x1]
      %v2710 = vld [vmem:[%s2657 + $0x10] sm:$0xe]
      %v2711 = vld [vmem:[%s2657 + $0x14] sm:$0x1]
      %v2712 = vld [vmem:[%s2657 + $0x18] sm:$0xe]
      %v2713 = vld [vmem:[%s2657 + $0x1c] sm:$0x1]
      %v2714 = vld [vmem:[%s2657 + $0x20] sm:$0xe]
      %v2715 = vld [vmem:[%s2657 + $0x24] sm:$0x1]
      %v2716 = vld [vmem:[%s2657 + $0x28] sm:$0xe]
      %v2717 = vld [vmem:[%s2657 + $0x2c] sm:$0x1]
      %v2718 = vld [vmem:[%s2657 + $0x30] sm:$0xe]
      %v2719 = vld [vmem:[%s2657 + $0x34] sm:$0x1]
      %v2720 = vld [vmem:[%s2657 + $0x38] sm:$0xe]
      %v2721 = vld [vmem:[%s2657 + $0x3c] sm:$0x1]
      %v2738 = vrot.slane %v2706, 5
      %v2739 = vrot.slane %v2738, 4
      %v2740 = vrot.slane %v2707, 5
      %v2741 = vsel %vm778, %v2739, %v2740
      %v2742 = vrot.slane %v2708, 5
      %v2743 = vrot.slane %v2742, 4
      %v2744 = vrot.slane %v2709, 5
      %v2745 = vsel %vm778, %v2743, %v2744
      %v2746 = vrot.slane %v2710, 5
      %v2747 = vrot.slane %v2746, 4
      %v2748 = vrot.slane %v2711, 5
      %v2749 = vsel %vm778, %v2747, %v2748
      %v2750 = vrot.slane %v2712, 5
      %v2751 = vrot.slane %v2750, 4
      %v2752 = vrot.slane %v2713, 5
      %v2753 = vsel %vm778, %v2751, %v2752
      %v2754 = vrot.slane %v2714, 5
      %v2755 = vrot.slane %v2754, 4
      %v2756 = vrot.slane %v2715, 5
      %v2757 = vsel %vm778, %v2755, %v2756
      %v2758 = vrot.slane %v2716, 5
      %v2759 = vrot.slane %v2758, 4
      %v2760 = vrot.slane %v2717, 5
      %v2761 = vsel %vm778, %v2759, %v2760
      %v2762 = vrot.slane %v2718, 5
      %v2763 = vrot.slane %v2762, 4
      %v2764 = vrot.slane %v2719, 5
      %v2765 = vsel %vm778, %v2763, %v2764
      %v2766 = vrot.slane %v2720, 5
      %v2767 = vrot.slane %v2766, 4
      %v2768 = vrot.slane %v2721, 5
      %v2769 = vsel %vm778, %v2767, %v2768
      %2770 = vrot.lane.b32.xlu0 %v2741, 48
      %v2771 = vpop.permute.xlu0 %2770
      %2772 = vrot.lane.b32.xlu0 %v2745, 48
      %v2773 = vpop.permute.xlu0 %2772
      %2774 = vrot.lane.b32.xlu0 %v2749, 48
      %v2775 = vpop.permute.xlu0 %2774
      %2776 = vrot.lane.b32.xlu0 %v2753, 48
      %v2777 = vpop.permute.xlu0 %2776
      %2778 = vrot.lane.b32.xlu0 %v2757, 48
      %v2779 = vpop.permute.xlu0 %2778
      %2780 = vrot.lane.b32.xlu0 %v2761, 48
      %v2781 = vpop.permute.xlu0 %2780
      %2782 = vrot.lane.b32.xlu0 %v2765, 48
      %v2783 = vpop.permute.xlu0 %2782
      %2784 = vrot.lane.b32.xlu0 %v2769, 48
      %v2785 = vpop.permute.xlu0 %2784
      %2794 = vst.msk [vmem:[#allocation3] sm:$0xf] %vm1741, %v2771
      %2795 = vst.msk [vmem:[#allocation3 + $0x4] sm:$0xf] %vm1741, %v2773
      %2796 = vst.msk [vmem:[#allocation3 + $0x8] sm:$0xf] %vm1741, %v2775
      %2797 = vst.msk [vmem:[#allocation3 + $0xc] sm:$0xf] %vm1741, %v2777
      %2798 = vst.msk [vmem:[#allocation3 + $0x10] sm:$0xf] %vm1741, %v2779
      %2799 = vst.msk [vmem:[#allocation3 + $0x14] sm:$0xf] %vm1741, %v2781
      %2800 = vst.msk [vmem:[#allocation3 + $0x18] sm:$0xf] %vm1741, %v2783
      %2801 = vst.msk [vmem:[#allocation3 + $0x1c] sm:$0xf] %vm1741, %v2785
      %v2802 = vld [vmem:[%s2657] sm:$0xc]
      %v2803 = vld [vmem:[%s2657 + $0x4] sm:$0x3]
      %v2804 = vld [vmem:[%s2657 + $0x8] sm:$0xc]
      %v2805 = vld [vmem:[%s2657 + $0xc] sm:$0x3]
      %v2806 = vld [vmem:[%s2657 + $0x10] sm:$0xc]
      %v2807 = vld [vmem:[%s2657 + $0x14] sm:$0x3]
      %v2808 = vld [vmem:[%s2657 + $0x18] sm:$0xc]
      %v2809 = vld [vmem:[%s2657 + $0x1c] sm:$0x3]
      %v2810 = vld [vmem:[%s2657 + $0x20] sm:$0xc]
      %v2811 = vld [vmem:[%s2657 + $0x24] sm:$0x3]
      %v2812 = vld [vmem:[%s2657 + $0x28] sm:$0xc]
      %v2813 = vld [vmem:[%s2657 + $0x2c] sm:$0x3]
      %v2814 = vld [vmem:[%s2657 + $0x30] sm:$0xc]
      %v2815 = vld [vmem:[%s2657 + $0x34] sm:$0x3]
      %v2816 = vld [vmem:[%s2657 + $0x38] sm:$0xc]
      %v2817 = vld [vmem:[%s2657 + $0x3c] sm:$0x3]
      %v2834 = vrot.slane %v2802, 6
      %v2835 = vrot.slane %v2834, 4
      %v2836 = vrot.slane %v2803, 6
      %v2837 = vsel %vm2352, %v2835, %v2836
      %v2838 = vrot.slane %v2804, 6
      %v2839 = vrot.slane %v2838, 4
      %v2840 = vrot.slane %v2805, 6
      %v2841 = vsel %vm2352, %v2839, %v2840
      %v2842 = vrot.slane %v2806, 6
      %v2843 = vrot.slane %v2842, 4
      %v2844 = vrot.slane %v2807, 6
      %v2845 = vsel %vm2352, %v2843, %v2844
      %v2846 = vrot.slane %v2808, 6
      %v2847 = vrot.slane %v2846, 4
      %v2848 = vrot.slane %v2809, 6
      %v2849 = vsel %vm2352, %v2847, %v2848
      %v2850 = vrot.slane %v2810, 6
      %v2851 = vrot.slane %v2850, 4
      %v2852 = vrot.slane %v2811, 6
      %v2853 = vsel %vm2352, %v2851, %v2852
      %v2854 = vrot.slane %v2812, 6
      %v2855 = vrot.slane %v2854, 4
      %v2856 = vrot.slane %v2813, 6
      %v2857 = vsel %vm2352, %v2855, %v2856
      %v2858 = vrot.slane %v2814, 6
      %v2859 = vrot.slane %v2858, 4
      %v2860 = vrot.slane %v2815, 6
      %v2861 = vsel %vm2352, %v2859, %v2860
      %v2862 = vrot.slane %v2816, 6
      %v2863 = vrot.slane %v2862, 4
      %v2864 = vrot.slane %v2817, 6
      %v2865 = vsel %vm2352, %v2863, %v2864
      %2866 = vrot.lane.b32.xlu0 %v2837, 56
      %v2867 = vpop.permute.xlu0 %2866
      %2868 = vrot.lane.b32.xlu0 %v2841, 56
      %v2869 = vpop.permute.xlu0 %2868
      %2870 = vrot.lane.b32.xlu0 %v2845, 56
      %v2871 = vpop.permute.xlu0 %2870
      %2872 = vrot.lane.b32.xlu0 %v2849, 56
      %v2873 = vpop.permute.xlu0 %2872
      %2874 = vrot.lane.b32.xlu0 %v2853, 56
      %v2875 = vpop.permute.xlu0 %2874
      %2876 = vrot.lane.b32.xlu0 %v2857, 56
      %v2877 = vpop.permute.xlu0 %2876
      %2878 = vrot.lane.b32.xlu0 %v2861, 56
      %v2879 = vpop.permute.xlu0 %2878
      %2880 = vrot.lane.b32.xlu0 %v2865, 56
      %v2881 = vpop.permute.xlu0 %2880
      %2890 = vst.msk [vmem:[#allocation3] sm:$0xf] %vm1934, %v2867
      %2891 = vst.msk [vmem:[#allocation3 + $0x4] sm:$0xf] %vm1934, %v2869
      %2892 = vst.msk [vmem:[#allocation3 + $0x8] sm:$0xf] %vm1934, %v2871
      %2893 = vst.msk [vmem:[#allocation3 + $0xc] sm:$0xf] %vm1934, %v2873
      %2894 = vst.msk [vmem:[#allocation3 + $0x10] sm:$0xf] %vm1934, %v2875
      %2895 = vst.msk [vmem:[#allocation3 + $0x14] sm:$0xf] %vm1934, %v2877
      %2896 = vst.msk [vmem:[#allocation3 + $0x18] sm:$0xf] %vm1934, %v2879
      %2897 = vst.msk [vmem:[#allocation3 + $0x1c] sm:$0xf] %vm1934, %v2881
      %v2898 = vld [vmem:[#allocation3] sm:$0xf]
      %v2899 = vld [vmem:[#allocation3 + $0x4] sm:$0xf]
      %v2900 = vld [vmem:[#allocation3 + $0x8] sm:$0xf]
      %v2901 = vld [vmem:[#allocation3 + $0xc] sm:$0xf]
      %v2902 = vld [vmem:[#allocation3 + $0x10] sm:$0xf]
      %v2903 = vld [vmem:[#allocation3 + $0x14] sm:$0xf]
      %v2904 = vld [vmem:[#allocation3 + $0x18] sm:$0xf]
      %v2905 = vld [vmem:[#allocation3 + $0x1c] sm:$0xf]
      %s2906 = scalar_lea.vmem %s4, 36
      %v2907 = vld [vmem:[%s2906] sm:$0xf]
      %v2908 = vld [vmem:[%s2906 + $0x4] sm:$0xf]
      %v2909 = vld [vmem:[%s2906 + $0x8] sm:$0xf]
      %v2910 = vld [vmem:[%s2906 + $0xc] sm:$0xf]
      %v2911 = vld [vmem:[%s2906 + $0x10] sm:$0xf]
      %v2912 = vld [vmem:[%s2906 + $0x14] sm:$0xf]
      %v2913 = vld [vmem:[%s2906 + $0x18] sm:$0xf]
      %v2914 = vld [vmem:[%s2906 + $0x1c] sm:$0xf]
      %v2915 = vld [vmem:[%s2906 + $0x20] sm:$0xf]
      %v2924 = vunpack.c.l.b16 %v2898
      %v2925 = vunpack.c.l.b16 %v2899
      %v2926 = vunpack.c.l.b16 %v2900
      %v2927 = vunpack.c.l.b16 %v2901
      %v2928 = vunpack.c.l.b16 %v2902
      %v2929 = vunpack.c.l.b16 %v2903
      %v2930 = vunpack.c.l.b16 %v2904
      %v2931 = vunpack.c.l.b16 %v2905
      %v2932 = vpack.c.b16 %v2925, %v2924
      %v2933 = vpack.c.b16 %v2927, %v2926
      %v2934 = vpack.c.b16 %v2929, %v2928
      %v2935 = vpack.c.b16 %v2931, %v2930
      %v2945 = vunpack.c.l.b16 %v2907
      %v2946 = vunpack.c.l.b16 %v2908
      %v2947 = vunpack.c.l.b16 %v2909
      %v2948 = vunpack.c.l.b16 %v2910
      %v2949 = vunpack.c.l.b16 %v2911
      %v2950 = vunpack.c.l.b16 %v2912
      %v2951 = vunpack.c.l.b16 %v2913
      %v2952 = vunpack.c.l.b16 %v2914
      %v2953 = vunpack.c.l.b16 %v2915
      %v2954 = vpack.c.b16 %v2946, %v2945
      %v2955 = vpack.c.b16 %v2948, %v2947
      %v2956 = vpack.c.b16 %v2950, %v2949
      %v2957 = vpack.c.b16 %v2952, %v2951
      %v2958 = vpack.c.b16 %v2953, %v2953
      %v2964 = vsel %vm2007, %v2932, 0
      %v2967 = vsel %vm2007, %v2933, 0
      %v2970 = vsel %vm2007, %v2934, 0
      %v2973 = vsel %vm2007, %v2935, 0
      %v2976 = vsel %vm2020, %v2958, 0
      %2978 = vmatprep.subr.bf16.mxu0 0
      %2979 = vmatpush1.bf16.msra.mxu0 0
      %2980 = vmatprep.subr.bf16.mxu0 0
      %2981 = vmatpush1.bf16.msra.mxu0 0
      %2982 = vmatprep.subr.bf16.mxu0 0
      %2983 = vmatpush1.bf16.msra.mxu0 0
      %2984 = vmatprep.subr.bf16.mxu0 0
      %2985 = vmatpush1.bf16.msra.mxu0 %v2976
      %2986 = vmatprep.subr.bf16.mxu0 0
      %2987 = vmatpush1.bf16.msra.mxu0 %v2957
      %2988 = vmatprep.subr.bf16.mxu0 0
      %2989 = vmatpush1.bf16.msra.mxu0 %v2956
      %2990 = vmatprep.subr.bf16.mxu0 0
      %2991 = vmatpush1.bf16.msra.mxu0 %v2955
      %2992 = vmatprep.subr.bf16.mxu0 0
      %2993 = vmatpush1.bf16.msra.mxu0 %v2954
      %2994 = vmatprep.subr.bf16.mxu0 0
      %2995 = vmatpush2.bf16.msra.mxu0 0
      %2996 = vmatprep.subr.bf16.mxu0 0
      %2997 = vmatpush2.bf16.msra.mxu0 0
      %2998 = vmatprep.subr.bf16.mxu0 0
      %2999 = vmatpush2.bf16.msra.mxu0 0
      %3000 = vmatprep.subr.bf16.mxu0 0
      %3001 = vmatpush2.bf16.msra.mxu0 0
      %3002 = vmatprep.subr.bf16.mxu0 0
      %3003 = vmatpush2.bf16.msra.mxu0 0
      %3004 = vmatprep.subr.bf16.mxu0 0
      %3005 = vmatpush2.bf16.msra.mxu0 0
      %3006 = vmatprep.subr.bf16.mxu0 0
      %3007 = vmatpush2.bf16.msra.mxu0 0
      %3008 = vmatprep.subr.bf16.mxu0 0
      %3009 = vmatpush2.bf16.msra.mxu0 0
      %3010 = vmatprep.mubr.bf16.mxu0 0
      %3011 = vmatmul.mubr.bf16.gmra.mxu0 %v2964
      %v3012 = vpop.f32.mrf.mxu0
      %v3013 = vadd.f32 0.0, %v3012
      %v3014 = vpop.f32.mrf.mxu0
      %v3015 = vpop.f32.mrf.mxu0
      %v3016 = vadd.f32 0.0, %v3015
      %v3017 = vpop.f32.mrf.mxu0
      %3018 = vmatprep.mubr.bf16.mxu0 0
      %3019 = vmatmul.mubr.bf16.gmra.mxu0 %v2967
      %v3020 = vpop.f32.mrf.mxu0
      %v3021 = vadd.f32 0.0, %v3020
      %v3022 = vpop.f32.mrf.mxu0
      %v3023 = vpop.f32.mrf.mxu0
      %v3024 = vadd.f32 0.0, %v3023
      %v3025 = vpop.f32.mrf.mxu0
      %3026 = vmatprep.mubr.bf16.mxu0 0
      %3027 = vmatmul.mubr.bf16.gmra.mxu0 %v2970
      %v3028 = vpop.f32.mrf.mxu0
      %v3029 = vadd.f32 0.0, %v3028
      %v3030 = vpop.f32.mrf.mxu0
      %v3031 = vpop.f32.mrf.mxu0
      %v3032 = vadd.f32 0.0, %v3031
      %v3033 = vpop.f32.mrf.mxu0
      %3034 = vmatprep.mubr.bf16.mxu0 0
      %3035 = vmatmul.mubr.bf16.gmra.mxu0 %v2973
      %v3036 = vpop.f32.mrf.mxu0
      %v3037 = vadd.f32 0.0, %v3036
      %v3038 = vpop.f32.mrf.mxu0
      %v3039 = vpop.f32.mrf.mxu0
      %v3040 = vadd.f32 0.0, %v3039
      %v3041 = vpop.f32.mrf.mxu0
      %3042 = vdwg.mxu0
      %s3043 = scalar_lea.vmem %s5, 1
      %v3044 = vld [vmem:[%s3043] sm:$0x1]
      %v3046 = vlaneseq
      %v3047 = vshrl.u32 %v3046, 7
      %v3048 = vsub.s32 0, %v3047
      %v3049 = vrot.slane %v3044, %v3048
      %v3051 = vmul.f32 %v3013, %v3049
      %v3052 = vmul.f32 %v3016, %v3049
      %v3053 = vmul.f32 %v3021, %v3049
      %v3054 = vmul.f32 %v3024, %v3049
      %v3055 = vmul.f32 %v3029, %v3049
      %v3056 = vmul.f32 %v3032, %v3049
      %v3057 = vmul.f32 %v3037, %v3049
      %v3058 = vmul.f32 %v3040, %v3049
      %s3059 = scalar_lea.vmem %s6, 1
      %v3060 = vld [vmem:[%s3059] sm:$0x1]
      %v3062 = vlaneseq
      %v3063 = vshrl.u32 %v3062, 7
      %v3064 = vsub.s32 0, %v3063
      %v3065 = vrot.slane %v3060, %v3064
      %v3067 = vadd.f32 %v3051, %v3065
      %v3068 = vadd.f32 %v3052, %v3065
      %v3069 = vadd.f32 %v3053, %v3065
      %v3070 = vadd.f32 %v3054, %v3065
      %v3071 = vadd.f32 %v3055, %v3065
      %v3072 = vadd.f32 %v3056, %v3065
      %v3073 = vadd.f32 %v3057, %v3065
      %v3074 = vadd.f32 %v3058, %v3065
      %v3075 = vmax.f32 %v3067, 0.0
      %v3076 = vmax.f32 %v3068, 0.0
      %v3077 = vmax.f32 %v3069, 0.0
      %v3078 = vmax.f32 %v3070, 0.0
      %v3079 = vmax.f32 %v3071, 0.0
      %v3080 = vmax.f32 %v3072, 0.0
      %v3081 = vmax.f32 %v3073, 0.0
      %v3082 = vmax.f32 %v3074, 0.0
      %v3083 = vpack.c.bf16 %v3076, %v3075
      %v3084 = vpack.c.bf16 %v3078, %v3077
      %v3085 = vpack.c.bf16 %v3080, %v3079
      %v3086 = vpack.c.bf16 %v3082, %v3081
      %v3091 = vunpack.c.l.b16 %v3083
      %v3092 = vunpack.c.h.b16 %v3083
      %v3093 = vunpack.c.l.b16 %v3084
      %v3094 = vunpack.c.h.b16 %v3084
      %v3095 = vunpack.c.l.b16 %v3085
      %v3096 = vunpack.c.h.b16 %v3085
      %v3097 = vunpack.c.l.b16 %v3086
      %v3098 = vunpack.c.h.b16 %v3086
      %v3099 = vpack.c.b16 %v3091, %v3091
      %v3100 = vpack.c.b16 %v3092, %v3092
      %v3101 = vpack.c.b16 %v3093, %v3093
      %v3102 = vpack.c.b16 %v3094, %v3094
      %v3103 = vpack.c.b16 %v3095, %v3095
      %v3104 = vpack.c.b16 %v3096, %v3096
      %v3105 = vpack.c.b16 %v3097, %v3097
      %v3106 = vpack.c.b16 %v3098, %v3098
      %3107 = vrot.lane.b32.xlu0 %v3099, 16
      %v3108 = vpop.permute.xlu0 %3107
      %3109 = vrot.lane.b32.xlu0 %v3100, 16
      %v3110 = vpop.permute.xlu0 %3109
      %3111 = vrot.lane.b32.xlu0 %v3101, 16
      %v3112 = vpop.permute.xlu0 %3111
      %3113 = vrot.lane.b32.xlu0 %v3102, 16
      %v3114 = vpop.permute.xlu0 %3113
      %3115 = vrot.lane.b32.xlu0 %v3103, 16
      %v3116 = vpop.permute.xlu0 %3115
      %3117 = vrot.lane.b32.xlu0 %v3104, 16
      %v3118 = vpop.permute.xlu0 %3117
      %3119 = vrot.lane.b32.xlu0 %v3105, 16
      %v3120 = vpop.permute.xlu0 %3119
      %3121 = vrot.lane.b32.xlu0 %v3106, 16
      %v3122 = vpop.permute.xlu0 %3121
      %vm3131 = vcmask 257152
      %3132 = vst.msk [vmem:[%s311] sm:$0xf] %vm3131, %v3108
      %3133 = vst.msk [vmem:[%s311 + $0x4] sm:$0xf] %vm3131, %v3110
      %3134 = vst.msk [vmem:[%s311 + $0x8] sm:$0xf] %vm3131, %v3112
      %3135 = vst.msk [vmem:[%s311 + $0xc] sm:$0xf] %vm3131, %v3114
      %3136 = vst.msk [vmem:[%s311 + $0x10] sm:$0xf] %vm3131, %v3116
      %3137 = vst.msk [vmem:[%s311 + $0x14] sm:$0xf] %vm3131, %v3118
      %3138 = vst.msk [vmem:[%s311 + $0x18] sm:$0xf] %vm3131, %v3120
      %3139 = vst.msk [vmem:[%s311 + $0x1c] sm:$0xf] %vm3131, %v3122
      %v3140 = vsel %vm2167, %v3075, 0.0
      %v3141 = vsel %vm2167, %v3076, 0.0
      %v3142 = vadd.f32 %v3140, %v3141
      %v3143 = vsel %vm2167, %v3077, 0.0
      %v3144 = vadd.f32 %v3142, %v3143
      %v3145 = vsel %vm2167, %v3078, 0.0
      %v3146 = vadd.f32 %v3144, %v3145
      %v3147 = vsel %vm2167, %v3079, 0.0
      %v3148 = vadd.f32 %v3146, %v3147
      %v3149 = vsel %vm2167, %v3080, 0.0
      %v3150 = vadd.f32 %v3148, %v3149
      %v3151 = vsel %vm2167, %v3081, 0.0
      %v3152 = vadd.f32 %v3150, %v3151
      %v3153 = vsel %vm2167, %v3082, 0.0
      %v3154 = vadd.f32 %v3152, %v3153
      %v3155 = vrot.slane %v3154, 4
      %v3156 = vadd.f32 %v3154, %v3155
      %v3157 = vrot.slane %v3156, 2
      %v3158 = vadd.f32 %v3156, %v3157
      %v3159 = vrot.slane %v3158, 1
      %v3160 = vadd.f32 %v3158, %v3159
      %v3161 = vadd.f32 %v2189, %v3160
      %v3162 = vmul.f32 %v3161, 0.015625
      %3163 = vst.msk [vmem:[%s314] sm:$0x1] %vm508, %v3162
      %p3164 = scmp.lt.s32.totalorder %s20, 1
      %s3165 = scalar_select %p3164, %s20, 1
      %s3166 = smul.addr %s3165, 8
      %s3167 = smul.addr %s3166, 4
      %s3168 = scalar_lea.vmem %s7, %s3167
      %p3169 = scmp.lt.s32.totalorder %s20, 1
      %s3170 = scalar_select %p3169, %s20, 1
      %s3171 = scalar_lea.vmem %s8, %s3170
      // Predicated region
      $region49: #{_lambda_.3} parent=47 // pred_check
        %p3172 = pneg %p190
      $region50: #{_lambda_.3} parent=47 // pred_check_branch
        %3174 = sbr.rel (%p3172) target = $region52
      $region51: #{_lambda_.3} parent=47 // pred_region
        _
      $region52: #{_lambda_.3} parent=47 // pred_fallthru
        _
      // Predicated region
      $region53: #{_lambda_.3} parent=47 // pred_check
        %p3175 = pneg %p216
      $region54: #{_lambda_.3} parent=47 // pred_check_branch
        %3177 = sbr.rel (%p3175) target = $region56
      $region55: #{_lambda_.3} parent=47 // pred_region
        _
      $region56: #{_lambda_.3} parent=47 // pred_fallthru
        _
    $region48: #{_lambda_.3} parent=5 // pred_fallthru
      _
    %p3178 = scmp.le.s32.totalorder 2, %s15
    // Predicated region
    $region57: #{_lambda_.3} parent=5 // pred_check
      %p3179 = pneg %p3178
    $region58: #{_lambda_.3} parent=5 // pred_check_branch
      %3181 = sbr.rel (%p3179) target = $region60
    $region59: #{_lambda_.3} parent=5 // pred_region
      %s3182 = ssub.s32 %s15, 2
      // Predicated region
      $region61: #{_lambda_.3} parent=59 // pred_check
        %p3183 = pneg %p196
      $region62: #{_lambda_.3} parent=59 // pred_check_branch
        %3185 = sbr.rel (%p3183) target = $region64
      $region63: #{_lambda_.3} parent=59 // pred_region
        %p3186 = scmp.lt.s32.totalorder %s21, 1
        %s3187 = scalar_select %p3186, %s21, 1
        %s3188 = smul.addr %s3187, 8
        %s3189 = smul.addr %s3188, 4
        %s3190 = scalar_lea.vmem %s7, %s3189
      $region64: #{_lambda_.3} parent=59 // pred_fallthru
        _
      // Predicated region
      $region65: #{_lambda_.3} parent=59 // pred_check
        %p3191 = pneg %p222
      $region66: #{_lambda_.3} parent=59 // pred_check_branch
        %3193 = sbr.rel (%p3191) target = $region68
      $region67: #{_lambda_.3} parent=59 // pred_region
        %p3194 = scmp.lt.s32.totalorder %s21, 1
        %s3195 = scalar_select %p3194, %s21, 1
        %s3196 = scalar_lea.vmem %s8, %s3195
      $region68: #{_lambda_.3} parent=59 // pred_fallthru
        _
    $region60: #{_lambda_.3} parent=5 // pred_fallthru
      _
  $region6: #{_lambda_.3} parent=0 // loop_footer
    %s19 = sadd.s32 1, %s15
  $region7: #{_lambda_.3} parent=0 // loop_footer_branch
    %14 = sbr.rel target = $region3
  $region8: #{_lambda_.3} parent=0 // loop_exit
    _

</llo_original>
